<compile_context>
chip_gen: v7x
topology: tpu7x:2x2x1
jax: 0.10.0
libtpu: 0.0.40
codegen_flags: <defaults>
</compile_context>

<pallas_src>
import jax
import jax.numpy as jnp
from jax.experimental import pallas as pl
from jax.experimental.pallas import tpu as pltpu

# Problem sizes (features must be divisible by G for the grouped conv).
B, C, H, W = 2, 128, 8, 8
M, G, R, L = 2, 32, 16, 32
D = max(C // R, L)          # = 32
N = B * H * W               # 128 rows -> fills the MXU M dimension
EPS = 1e-5


# ---------------------------------------------------------------------------
# Pallas kernel: whole batch in one grid step.
#   x0/x1   : [N, 9C]  bf16  im2col slabs (dilation 1 / 2, padding folded in)
#   w0/w1   : [9C, C]  bf16  block-diagonal grouped conv weights * BN scale
#   fc1w    : [C, C]   f32   fc1 weight * BN1d scale, D padded to C lanes
#   fc2w0/1 : [C, C]   f32   fc2 weight halves (branch 0 / 1), padded rows=0
#   vec     : [5, C]   f32   rows: bn0 bias, bn1 bias, fc1 bias, fc2 bias 0/1
# ---------------------------------------------------------------------------
def skconv_kernel(x0_ref, x1_ref, w0_ref, w1_ref,
                  fc1w_ref, fc2w0_ref, fc2w1_ref, vec_ref, out_ref):
    n, c = out_ref.shape
    hw = n // B

    b0 = vec_ref[0:1, :]
    b1 = vec_ref[1:2, :]
    fc1b = vec_ref[2:3, :]
    fc2b0 = vec_ref[3:4, :]
    fc2b1 = vec_ref[4:5, :]

    # branch conv + folded BN + ReLU: one K=9C matmul each, f32 accumulation
    f0 = jnp.maximum(
        jnp.dot(x0_ref[...], w0_ref[...],
                preferred_element_type=jnp.float32) + b0, 0.0)
    f1 = jnp.maximum(
        jnp.dot(x1_ref[...], w1_ref[...],
                preferred_element_type=jnp.float32) + b1, 0.0)

    # global average pool per batch element -> [B, C]
    u = (f0 + f1).reshape(B, hw, c)
    s = jnp.mean(u, axis=1)

    # fc head: (Conv1d C->D, BN1d, ReLU) folded, then Conv1d D->2C split in 2
    z = jnp.maximum(
        jnp.dot(s, fc1w_ref[...], preferred_element_type=jnp.float32) + fc1b,
        0.0)                                                     # [B, Dp=C]
    a0 = jnp.dot(z, fc2w0_ref[...], preferred_element_type=jnp.float32) + fc2b0
    a1 = jnp.dot(z, fc2w1_ref[...], preferred_element_type=jnp.float32) + fc2b1

    # softmax over the M=2 branch axis, per (batch, channel)
    mx = jnp.maximum(a0, a1)
    e0 = jnp.exp(a0 - mx)
    e1 = jnp.exp(a1 - mx)
    inv = pl.reciprocal(e0 + e1, approx=True)
    att0 = (e0 * inv)[:, None, :]                                # [B, 1, C]
    att1 = (e1 * inv)[:, None, :]

    out = f0.reshape(B, hw, c) * att0 + f1.reshape(B, hw, c) * att1
    out_ref[...] = out.reshape(n, c).astype(out_ref.dtype)


# ---------------------------------------------------------------------------
# Parameter / input plumbing (plain JAX glue, fused by XLA)
# ---------------------------------------------------------------------------
def grouped_weight_to_dense(wt):
    """Torch grouped conv weight [C, C//G, 3, 3] -> [9, C, C] block-diagonal
    matrices such that out[., co] = sum_ci x_shift[., ci] * dense[tap, ci, co]."""
    opg = ipg = C // G
    wr = wt.reshape(G, opg, ipg, 3, 3)
    blocks = jnp.transpose(wr, (3, 4, 0, 2, 1)).reshape(9, G, ipg, opg)
    eye = jnp.eye(G, dtype=wt.dtype)
    return jnp.einsum("kgio,gh->kgiho", blocks, eye).reshape(9, C, C)


def bn_fold(gamma, beta, mean, var):
    s = gamma / jnp.sqrt(var + EPS)
    return s, beta - mean * s


def im2col(x_nhwc, dil):
    """Padding-folded im2col of a 3x3 conv with dilation `dil` -> [N, 9*C]."""
    xp = jnp.pad(x_nhwc, ((0, 0), (dil, dil), (dil, dil), (0, 0)))
    taps = [xp[:, kh * dil:kh * dil + H, kw * dil:kw * dil + W, :]
            for kh in range(3) for kw in range(3)]
    return jnp.concatenate(taps, axis=-1).reshape(N, 9 * C)


def skconv_pallas(x_nchw, p):
    f32 = jnp.float32
    x = jnp.transpose(x_nchw, (0, 2, 3, 1))                      # NHWC

    # im2col slabs: bf16 MXU operands (f32 accumulation inside the kernel)
    x0 = im2col(x, 1).astype(jnp.bfloat16)
    x1 = im2col(x, 2).astype(jnp.bfloat16)

    # conv weights: dense block-diagonal, BN scale folded, K-major [9C, C]
    bn0s, bn0b = bn_fold(p["bn0_g"], p["bn0_b"], p["bn0_m"], p["bn0_v"])
    bn1s, bn1b = bn_fold(p["bn1_g"], p["bn1_b"], p["bn1_m"], p["bn1_v"])
    w0 = (grouped_weight_to_dense(p["conv0_w"]) * bn0s[None, None, :]
          ).reshape(9 * C, C).astype(jnp.bfloat16)
    w1 = (grouped_weight_to_dense(p["conv1_w"]) * bn1s[None, None, :]
          ).reshape(9 * C, C).astype(jnp.bfloat16)

    # fc head: fold BN1d into fc1; pad D -> C lanes so everything is 128-wide
    bnzs, bnzb = bn_fold(p["bnz_g"], p["bnz_b"], p["bnz_m"], p["bnz_v"])
    fc1w = jnp.zeros((C, C), f32).at[:, :D].set(p["fc1_w"].T * bnzs[None, :])
    fc1b = jnp.zeros((C,), f32).at[:D].set(p["fc1_b"] * bnzs + bnzb)
    fc2w = jnp.zeros((C, 2 * C), f32).at[:D, :].set(p["fc2_w"].T)
    fc2w0, fc2w1 = fc2w[:, :C], fc2w[:, C:]

    # all small bias vectors packed into a single lane-dense [5, C] operand
    vec = jnp.stack([bn0b, bn1b, fc1b,
                     p["fc2_b"][:C], p["fc2_b"][C:]]).astype(f32)

    args = (x0, x1, w0, w1, fc1w, fc2w0, fc2w1, vec)

    def full(shape):
        return pl.BlockSpec(shape, lambda i, _n=len(shape): (0,) * _n)

    y = pl.pallas_call(
        skconv_kernel,
        out_shape=jax.ShapeDtypeStruct((N, C), x_nchw.dtype),
        grid_spec=pltpu.PrefetchScalarGridSpec(
            num_scalar_prefetch=0,
            grid=(1,),
            in_specs=[full(a.shape) for a in args],
            out_specs=full((N, C)),
        ),
        compiler_params=pltpu.CompilerParams(
            dimension_semantics=("arbitrary",)),
    )(*args)

    return jnp.transpose(y.reshape(B, H, W, C), (0, 3, 1, 2))    # back to NCHW


# ---------------------------------------------------------------------------
# Pure-JAX reference (same inference-mode BN semantics) for validation
# ---------------------------------------------------------------------------
def skconv_ref(x, p):
    hi = jax.lax.Precision.HIGHEST
    feats = []
    for i, dil in enumerate((1, 2)):
        y = jax.lax.conv_general_dilated(
            x, p[f"conv{i}_w"], window_strides=(1, 1),
            padding=((dil, dil), (dil, dil)), rhs_dilation=(dil, dil),
            feature_group_count=G,
            dimension_numbers=("NCHW", "OIHW", "NCHW"), precision=hi)
        s, b = bn_fold(p[f"bn{i}_g"], p[f"bn{i}_b"], p[f"bn{i}_m"], p[f"bn{i}_v"])
        y = jnp.maximum(y * s[None, :, None, None] + b[None, :, None, None], 0.0)
        feats.append(y)
    f0, f1 = feats
    u = f0 + f1
    s_gap = jnp.mean(u, axis=(2, 3))                             # [B, C]
    z = jnp.dot(s_gap, p["fc1_w"].T, precision=hi) + p["fc1_b"]
    zs, zb = bn_fold(p["bnz_g"], p["bnz_b"], p["bnz_m"], p["bnz_v"])
    z = jnp.maximum(z * zs + zb, 0.0)
    a = jnp.dot(z, p["fc2_w"].T, precision=hi) + p["fc2_b"]      # [B, 2C]
    att = jax.nn.softmax(a.reshape(B, M, C), axis=1)
    return (f0 * att[:, 0][:, :, None, None]
            + f1 * att[:, 1][:, :, None, None])


# ---------------------------------------------------------------------------
if __name__ == "__main__":
    key = jax.random.PRNGKey(0)
    ks = jax.random.split(key, 20)
    p = {
        "conv0_w": 0.1 * jax.random.normal(ks[0], (C, C // G, 3, 3), jnp.float32),
        "conv1_w": 0.1 * jax.random.normal(ks[1], (C, C // G, 3, 3), jnp.float32),
        "bn0_g": 1.0 + 0.1 * jax.random.normal(ks[2], (C,), jnp.float32),
        "bn0_b": 0.1 * jax.random.normal(ks[3], (C,), jnp.float32),
        "bn0_m": 0.1 * jax.random.normal(ks[4], (C,), jnp.float32),
        "bn0_v": 0.5 + jax.random.uniform(ks[5], (C,), jnp.float32),
        "bn1_g": 1.0 + 0.1 * jax.random.normal(ks[6], (C,), jnp.float32),
        "bn1_b": 0.1 * jax.random.normal(ks[7], (C,), jnp.float32),
        "bn1_m": 0.1 * jax.random.normal(ks[8], (C,), jnp.float32),
        "bn1_v": 0.5 + jax.random.uniform(ks[9], (C,), jnp.float32),
        "fc1_w": 0.1 * jax.random.normal(ks[10], (D, C), jnp.float32),
        "fc1_b": 0.1 * jax.random.normal(ks[11], (D,), jnp.float32),
        "bnz_g": 1.0 + 0.1 * jax.random.normal(ks[12], (D,), jnp.float32),
        "bnz_b": 0.1 * jax.random.normal(ks[13], (D,), jnp.float32),
        "bnz_m": 0.1 * jax.random.normal(ks[14], (D,), jnp.float32),
        "bnz_v": 0.5 + jax.random.uniform(ks[15], (D,), jnp.float32),
        "fc2_w": 0.1 * jax.random.normal(ks[16], (2 * C, D), jnp.float32),
        "fc2_b": 0.1 * jax.random.normal(ks[17], (2 * C,), jnp.float32),
    }
    x = jax.random.normal(ks[18], (B, C, H, W), jnp.float32)

    y = jax.block_until_ready(skconv_pallas(x, p))
    y_ref = jax.block_until_ready(skconv_ref(x, p))

    assert y.shape == (B, C, H, W), y.shape
    # tolerance accounts for bf16 MXU operands (f32 accumulation) in the conv path
    err = float(jnp.max(jnp.abs(y - y_ref)))
    assert err < 2.5e-2, f"max abs err {err}"
    print("KERNEL_OK")
</pallas_src>

<mosaic_0001>
module attributes {stable_mosaic.version = 11 : i64} {
  func.func @skconv_kernel(%arg0: i32, %arg1: memref<128x1152xbf16, #tpu.memory_space<vmem>>, %arg2: memref<128x1152xbf16, #tpu.memory_space<vmem>>, %arg3: memref<1152x128xbf16, #tpu.memory_space<vmem>>, %arg4: memref<1152x128xbf16, #tpu.memory_space<vmem>>, %arg5: memref<128x128xf32, #tpu.memory_space<vmem>>, %arg6: memref<128x128xf32, #tpu.memory_space<vmem>>, %arg7: memref<128x128xf32, #tpu.memory_space<vmem>>, %arg8: memref<5x128xf32, #tpu.memory_space<vmem>>, %arg9: memref<128x128xf32, #tpu.memory_space<vmem>>) attributes {dimension_semantics = [#tpu.dimension_semantics<arbitrary>], iteration_bounds = array<i64: 1>, scalar_prefetch = 0 : i64, scratch_operands = 0 : i64, tpu.core_type = #tpu.core_type<tc>, window_params = [{pipeline_mode = #tpu.pipeline_mode<synchronous>, transform_indices = @transform_0, window_bounds = array<i64: 128, 1152>}, {pipeline_mode = #tpu.pipeline_mode<synchronous>, transform_indices = @transform_1, window_bounds = array<i64: 128, 1152>}, {pipeline_mode = #tpu.pipeline_mode<synchronous>, transform_indices = @transform_2, window_bounds = array<i64: 1152, 128>}, {pipeline_mode = #tpu.pipeline_mode<synchronous>, transform_indices = @transform_3, window_bounds = array<i64: 1152, 128>}, {pipeline_mode = #tpu.pipeline_mode<synchronous>, transform_indices = @transform_4, window_bounds = array<i64: 128, 128>}, {pipeline_mode = #tpu.pipeline_mode<synchronous>, transform_indices = @transform_5, window_bounds = array<i64: 128, 128>}, {pipeline_mode = #tpu.pipeline_mode<synchronous>, transform_indices = @transform_6, window_bounds = array<i64: 128, 128>}, {pipeline_mode = #tpu.pipeline_mode<synchronous>, transform_indices = @transform_7, window_bounds = array<i64: 5, 128>}, {pipeline_mode = #tpu.pipeline_mode<synchronous>, transform_indices = @transform_8, window_bounds = array<i64: 128, 128>}]} {
    %c0 = arith.constant 0 : index
    %c0_0 = arith.constant 0 : index
    %0 = vector.load %arg8[%c0, %c0_0] : memref<5x128xf32, #tpu.memory_space<vmem>>, vector<1x128xf32>
    %c1 = arith.constant 1 : index
    %c0_1 = arith.constant 0 : index
    %1 = vector.load %arg8[%c1, %c0_1] : memref<5x128xf32, #tpu.memory_space<vmem>>, vector<1x128xf32>
    %c2 = arith.constant 2 : index
    %c0_2 = arith.constant 0 : index
    %2 = vector.load %arg8[%c2, %c0_2] : memref<5x128xf32, #tpu.memory_space<vmem>>, vector<1x128xf32>
    %c3 = arith.constant 3 : index
    %c0_3 = arith.constant 0 : index
    %3 = vector.load %arg8[%c3, %c0_3] : memref<5x128xf32, #tpu.memory_space<vmem>>, vector<1x128xf32>
    %c4 = arith.constant 4 : index
    %c0_4 = arith.constant 0 : index
    %4 = vector.load %arg8[%c4, %c0_4] : memref<5x128xf32, #tpu.memory_space<vmem>>, vector<1x128xf32>
    %c0_5 = arith.constant 0 : index
    %c0_6 = arith.constant 0 : index
    %5 = vector.load %arg1[%c0_5, %c0_6] : memref<128x1152xbf16, #tpu.memory_space<vmem>>, vector<128x1152xbf16>
    %c0_7 = arith.constant 0 : index
    %c0_8 = arith.constant 0 : index
    %6 = vector.load %arg3[%c0_7, %c0_8] : memref<1152x128xbf16, #tpu.memory_space<vmem>>, vector<1152x128xbf16>
    %cst = arith.constant dense<0.000000e+00> : vector<128x128xf32>
    %7 = tpu.matmul %5, %6, %cst {dimension_numbers = #tpu.dot_dimension_numbers<[1], [0], [0], [1], [0, 0, 1, 1], [], []>} : vector<128x1152xbf16>, vector<1152x128xbf16>, vector<128x128xf32> -> vector<128x128xf32>
    %8 = vector.broadcast %0 : vector<1x128xf32> to vector<128x128xf32>
    %9 = arith.addf %7, %8 : vector<128x128xf32>
    %cst_9 = arith.constant 0.000000e+00 : f32
    %10 = vector.broadcast %cst_9 : f32 to vector<128x128xf32>
    %11 = arith.maximumf %9, %10 : vector<128x128xf32>
    %c0_10 = arith.constant 0 : index
    %c0_11 = arith.constant 0 : index
    %12 = vector.load %arg2[%c0_10, %c0_11] : memref<128x1152xbf16, #tpu.memory_space<vmem>>, vector<128x1152xbf16>
    %c0_12 = arith.constant 0 : index
    %c0_13 = arith.constant 0 : index
    %13 = vector.load %arg4[%c0_12, %c0_13] : memref<1152x128xbf16, #tpu.memory_space<vmem>>, vector<1152x128xbf16>
    %cst_14 = arith.constant dense<0.000000e+00> : vector<128x128xf32>
    %14 = tpu.matmul %12, %13, %cst_14 {dimension_numbers = #tpu.dot_dimension_numbers<[1], [0], [0], [1], [0, 0, 1, 1], [], []>} : vector<128x1152xbf16>, vector<1152x128xbf16>, vector<128x128xf32> -> vector<128x128xf32>
    %15 = vector.broadcast %1 : vector<1x128xf32> to vector<128x128xf32>
    %16 = arith.addf %14, %15 : vector<128x128xf32>
    %cst_15 = arith.constant 0.000000e+00 : f32
    %17 = vector.broadcast %cst_15 : f32 to vector<128x128xf32>
    %18 = arith.maximumf %16, %17 : vector<128x128xf32>
    %19 = arith.addf %11, %18 : vector<128x128xf32>
    %20 = vector.shape_cast %19 : vector<128x128xf32> to vector<2x64x128xf32>
    %cst_16 = arith.constant dense<0.000000e+00> : vector<2x128xf32>
    %21 = vector.multi_reduction <add>, %20, %cst_16 [1] : vector<2x64x128xf32> to vector<2x128xf32>
    %cst_17 = arith.constant 6.400000e+01 : f32
    %22 = vector.broadcast %cst_17 : f32 to vector<2x128xf32>
    %23 = arith.divf %21, %22 : vector<2x128xf32>
    %c0_18 = arith.constant 0 : index
    %c0_19 = arith.constant 0 : index
    %24 = vector.load %arg5[%c0_18, %c0_19] : memref<128x128xf32, #tpu.memory_space<vmem>>, vector<128x128xf32>
    %cst_20 = arith.constant dense<0.000000e+00> : vector<2x128xf32>
    %25 = tpu.matmul %23, %24, %cst_20 {dimension_numbers = #tpu.dot_dimension_numbers<[1], [0], [0], [1], [0, 0, 1, 1], [], []>} : vector<2x128xf32>, vector<128x128xf32>, vector<2x128xf32> -> vector<2x128xf32>
    %26 = vector.broadcast %2 : vector<1x128xf32> to vector<2x128xf32>
    %27 = arith.addf %25, %26 : vector<2x128xf32>
    %cst_21 = arith.constant 0.000000e+00 : f32
    %28 = vector.broadcast %cst_21 : f32 to vector<2x128xf32>
    %29 = arith.maximumf %27, %28 : vector<2x128xf32>
    %c0_22 = arith.constant 0 : index
    %c0_23 = arith.constant 0 : index
    %30 = vector.load %arg6[%c0_22, %c0_23] : memref<128x128xf32, #tpu.memory_space<vmem>>, vector<128x128xf32>
    %cst_24 = arith.constant dense<0.000000e+00> : vector<2x128xf32>
    %31 = tpu.matmul %29, %30, %cst_24 {dimension_numbers = #tpu.dot_dimension_numbers<[1], [0], [0], [1], [0, 0, 1, 1], [], []>} : vector<2x128xf32>, vector<128x128xf32>, vector<2x128xf32> -> vector<2x128xf32>
    %32 = vector.broadcast %3 : vector<1x128xf32> to vector<2x128xf32>
    %33 = arith.addf %31, %32 : vector<2x128xf32>
    %c0_25 = arith.constant 0 : index
    %c0_26 = arith.constant 0 : index
    %34 = vector.load %arg7[%c0_25, %c0_26] : memref<128x128xf32, #tpu.memory_space<vmem>>, vector<128x128xf32>
    %cst_27 = arith.constant dense<0.000000e+00> : vector<2x128xf32>
    %35 = tpu.matmul %29, %34, %cst_27 {dimension_numbers = #tpu.dot_dimension_numbers<[1], [0], [0], [1], [0, 0, 1, 1], [], []>} : vector<2x128xf32>, vector<128x128xf32>, vector<2x128xf32> -> vector<2x128xf32>
    %36 = vector.broadcast %4 : vector<1x128xf32> to vector<2x128xf32>
    %37 = arith.addf %35, %36 : vector<2x128xf32>
    %38 = arith.maximumf %33, %37 : vector<2x128xf32>
    %39 = arith.subf %33, %38 : vector<2x128xf32>
    %40 = math.exp %39 : vector<2x128xf32>
    %41 = arith.subf %37, %38 : vector<2x128xf32>
    %42 = math.exp %41 : vector<2x128xf32>
    %43 = arith.addf %40, %42 : vector<2x128xf32>
    %44 = tpu.reciprocal %43 {approx = true} : vector<2x128xf32> -> vector<2x128xf32>
    %45 = arith.mulf %40, %44 : vector<2x128xf32>
    %46 = vector.shape_cast %45 : vector<2x128xf32> to vector<2x1x128xf32>
    %47 = arith.mulf %42, %44 : vector<2x128xf32>
    %48 = vector.shape_cast %47 : vector<2x128xf32> to vector<2x1x128xf32>
    %49 = vector.shape_cast %11 : vector<128x128xf32> to vector<2x64x128xf32>
    %50 = vector.broadcast %46 : vector<2x1x128xf32> to vector<2x64x128xf32>
    %51 = arith.mulf %49, %50 : vector<2x64x128xf32>
    %52 = vector.shape_cast %18 : vector<128x128xf32> to vector<2x64x128xf32>
    %53 = vector.broadcast %48 : vector<2x1x128xf32> to vector<2x64x128xf32>
    %54 = arith.mulf %52, %53 : vector<2x64x128xf32>
    %55 = arith.addf %51, %54 : vector<2x64x128xf32>
    %56 = vector.shape_cast %55 : vector<2x64x128xf32> to vector<128x128xf32>
    %c0_28 = arith.constant 0 : index
    %c0_29 = arith.constant 0 : index
    %57 = vector.load %arg9[%c0_28, %c0_29] : memref<128x128xf32, #tpu.memory_space<vmem>>, vector<128x128xf32>
    tpu.vector_store %arg9[%c0_28, %c0_29], %56 {strides = array<i32>} : memref<128x128xf32, #tpu.memory_space<vmem>>, vector<128x128xf32>,
    return
  }
  func.func @transform_0(%arg0: i32) -> (i32, i32) {
    %c0_i32 = arith.constant 0 : i32
    %c0_i32_0 = arith.constant 0 : i32
    %c0_i32_1 = arith.constant 0 : i32
    return %c0_i32, %c0_i32_0 : i32, i32
  }
  func.func @transform_1(%arg0: i32) -> (i32, i32) {
    %c0_i32 = arith.constant 0 : i32
    %c0_i32_0 = arith.constant 0 : i32
    %c0_i32_1 = arith.constant 0 : i32
    return %c0_i32, %c0_i32_0 : i32, i32
  }
  func.func @transform_2(%arg0: i32) -> (i32, i32) {
    %c0_i32 = arith.constant 0 : i32
    %c0_i32_0 = arith.constant 0 : i32
    %c0_i32_1 = arith.constant 0 : i32
    return %c0_i32, %c0_i32_0 : i32, i32
  }
  func.func @transform_3(%arg0: i32) -> (i32, i32) {
    %c0_i32 = arith.constant 0 : i32
    %c0_i32_0 = arith.constant 0 : i32
    %c0_i32_1 = arith.constant 0 : i32
    return %c0_i32, %c0_i32_0 : i32, i32
  }
  func.func @transform_4(%arg0: i32) -> (i32, i32) {
    %c0_i32 = arith.constant 0 : i32
    %c0_i32_0 = arith.constant 0 : i32
    %c0_i32_1 = arith.constant 0 : i32
    return %c0_i32, %c0_i32_0 : i32, i32
  }
  func.func @transform_5(%arg0: i32) -> (i32, i32) {
    %c0_i32 = arith.constant 0 : i32
    %c0_i32_0 = arith.constant 0 : i32
    %c0_i32_1 = arith.constant 0 : i32
    return %c0_i32, %c0_i32_0 : i32, i32
  }
  func.func @transform_6(%arg0: i32) -> (i32, i32) {
    %c0_i32 = arith.constant 0 : i32
    %c0_i32_0 = arith.constant 0 : i32
    %c0_i32_1 = arith.constant 0 : i32
    return %c0_i32, %c0_i32_0 : i32, i32
  }
  func.func @transform_7(%arg0: i32) -> (i32, i32) {
    %c0_i32 = arith.constant 0 : i32
    %c0_i32_0 = arith.constant 0 : i32
    %c0_i32_1 = arith.constant 0 : i32
    return %c0_i32, %c0_i32_0 : i32, i32
  }
  func.func @transform_8(%arg0: i32) -> (i32, i32) {
    %c0_i32 = arith.constant 0 : i32
    %c0_i32_0 = arith.constant 0 : i32
    %c0_i32_1 = arith.constant 0 : i32
    return %c0_i32, %c0_i32_0 : i32, i32
  }
}

</mosaic_0001>

<llo_original>
// kernel: tpu_custom_call.1
$region0: #{tpu_custom_call.1}
  #allocation0 [shape = 'u32[]', space=smem, size = 0x4, offset = 0x4, fixed_abs, tag = 'smem constant byte address 0x4 - core index']
  #allocation1 [shape = 'u32[144,128]{1,0:T(1,128)}', space=vmem, size = 0x12000, scoped, tag = 'internal scratch']
  %s0 = inlined_call_operand.hbm [shape: bf16[128,1152], index: 0, kind: input, shape index: {}]
  %s1 = inlined_call_operand.hbm [shape: bf16[128,1152], index: 1, kind: input, shape index: {}]
  %s2 = inlined_call_operand.hbm [shape: bf16[1152,128], index: 2, kind: input, shape index: {}]
  %s3 = inlined_call_operand.hbm [shape: bf16[1152,128], index: 3, kind: input, shape index: {}]
  %s4 = inlined_call_operand.hbm [shape: f32[128,128], index: 4, kind: input, shape index: {}]
  %s5 = inlined_call_operand.hbm [shape: f32[128,128], index: 5, kind: input, shape index: {}]
  %s6 = inlined_call_operand.hbm [shape: f32[128,128], index: 6, kind: input, shape index: {}]
  %s7 = inlined_call_operand.vmem [shape: f32[5,128], index: 7, kind: input, shape index: {}]
  %s8 = inlined_call_operand.hbm [shape: f32[128,128], index: 8, kind: output, shape index: {}]
  %s9 = sld [smem:[#allocation0]]
  $region70: #{tpu_custom_call.1} parent=0
    _
  %s11 = ssub.s32 1, %s9
  %s12 = scalar_select 0, %s11, %s9
  $region1: #{tpu_custom_call.1} parent=0
    #allocation2 [shape = 'u8[294912]{0}', space=vmem, size = 0x48000, scoped, tag = 'input window, operand 0, single buffered']
    #allocation3 [shape = 's32[1]{0}', space=sflag, size = 0x4, scoped, tag = 'scoped memory for tpu_custom_call.1']
    #allocation4 [shape = 's32[1]{0}', space=sflag, size = 0x4, scoped, tag = 'scoped memory for tpu_custom_call.1']
    #allocation5 [shape = 'u8[294912]{0}', space=vmem, size = 0x48000, scoped, tag = 'input window, operand 1, single buffered']
    #allocation6 [shape = 's32[1]{0}', space=sflag, size = 0x4, scoped, tag = 'scoped memory for tpu_custom_call.1']
    #allocation7 [shape = 'u8[294912]{0}', space=vmem, size = 0x48000, scoped, tag = 'input window, operand 2, single buffered']
    #allocation8 [shape = 'u8[294912]{0}', space=vmem, size = 0x48000, scoped, tag = 'input window, operand 3, single buffered']
    #allocation9 [shape = 's32[1]{0}', space=sflag, size = 0x4, scoped, tag = 'scoped memory for tpu_custom_call.1']
    #allocation10 [shape = 'u8[65536]{0}', space=vmem, size = 0x10000, scoped, tag = 'input window, operand 4, single buffered']
    #allocation11 [shape = 'u8[65536]{0}', space=vmem, size = 0x10000, scoped, tag = 'input window, operand 5, single buffered']
    #allocation12 [shape = 's32[1]{0}', space=sflag, size = 0x4, scoped, tag = 'scoped memory for tpu_custom_call.1']
    #allocation13 [shape = 'u8[65536]{0}', space=vmem, size = 0x10000, scoped, tag = 'input window, operand 6, single buffered']
    #allocation14 [shape = 'u8[65536]{0}', space=vmem, size = 0x10000, scoped, tag = 'output window, operand 0, single buffered']
    %13 = vsyncpa [#allocation3], 0
    %14 = vsyncpa [#allocation6], 0
    %15 = vsyncpa [#allocation9], 0
    %16 = vsyncpa [#allocation12], 0
    %17 = vsyncpa [#allocation4], 0
    // Predicated region
    $region2: #{tpu_custom_call.1} parent=1 // pred_check
      _
    $region3: #{tpu_custom_call.1} parent=1 // pred_check_branch
      %19 = sbr.rel (0) target = $region5
    $region4: #{tpu_custom_call.1} parent=1 // pred_region
      %s21 = ssub.s32 9216, 9216
      %22 = vsyncadd [#allocation3], %s21
      %s23 = sshll.u32 [#allocation2], 4
      %s24 = int_to_ptr.vmem [resolvable:$true] %s23
      %29 = dma.hbm_to_vmem [thread:$0]  %s0, 9216, %s24, [#allocation3], 576, 576, 36
    $region5: #{tpu_custom_call.1} parent=1 // pred_fallthru
      _
    // Predicated region
    $region6: #{tpu_custom_call.1} parent=1 // pred_check
      _
    $region7: #{tpu_custom_call.1} parent=1 // pred_check_branch
      %31 = sbr.rel (0) target = $region9
    $region8: #{tpu_custom_call.1} parent=1 // pred_region
      %s33 = ssub.s32 9216, 9216
      %34 = vsyncadd [#allocation6], %s33
      %s35 = sshll.u32 [#allocation5], 4
      %s36 = int_to_ptr.vmem [resolvable:$true] %s35
      %41 = dma.hbm_to_vmem [thread:$0]  %s1, 9216, %s36, [#allocation6], 576, 576, 36
    $region9: #{tpu_custom_call.1} parent=1 // pred_fallthru
      _
    // Predicated region
    $region10: #{tpu_custom_call.1} parent=1 // pred_check
      _
    $region11: #{tpu_custom_call.1} parent=1 // pred_check_branch
      %43 = sbr.rel (0) target = $region13
    $region12: #{tpu_custom_call.1} parent=1 // pred_region
      %s45 = ssub.s32 9216, 9216
      %46 = vsyncadd [#allocation6], %s45
      %s47 = sshll.u32 [#allocation7], 4
      %s48 = int_to_ptr.vmem [resolvable:$true] %s47
      %53 = dma.hbm_to_vmem [thread:$0]  %s2, 9216, %s48, [#allocation6], 64, 64, 4
    $region13: #{tpu_custom_call.1} parent=1 // pred_fallthru
      _
    // Predicated region
    $region14: #{tpu_custom_call.1} parent=1 // pred_check
      _
    $region15: #{tpu_custom_call.1} parent=1 // pred_check_branch
      %55 = sbr.rel (0) target = $region17
    $region16: #{tpu_custom_call.1} parent=1 // pred_region
      %s57 = ssub.s32 9216, 9216
      %58 = vsyncadd [#allocation9], %s57
      %s59 = sshll.u32 [#allocation8], 4
      %s60 = int_to_ptr.vmem [resolvable:$true] %s59
      %65 = dma.hbm_to_vmem [thread:$0]  %s3, 9216, %s60, [#allocation9], 64, 64, 4
    $region17: #{tpu_custom_call.1} parent=1 // pred_fallthru
      _
    // Predicated region
    $region18: #{tpu_custom_call.1} parent=1 // pred_check
      _
    $region19: #{tpu_custom_call.1} parent=1 // pred_check_branch
      %67 = sbr.rel (0) target = $region21
    $region20: #{tpu_custom_call.1} parent=1 // pred_region
      %s69 = ssub.s32 2048, 2048
      %70 = vsyncadd [#allocation9], %s69
      %s71 = sshll.u32 [#allocation10], 4
      %s72 = int_to_ptr.vmem [resolvable:$true] %s71
      %77 = dma.hbm_to_vmem [thread:$0]  %s4, 2048, %s72, [#allocation9], 128, 128, 8
    $region21: #{tpu_custom_call.1} parent=1 // pred_fallthru
      _
    // Predicated region
    $region22: #{tpu_custom_call.1} parent=1 // pred_check
      _
    $region23: #{tpu_custom_call.1} parent=1 // pred_check_branch
      %79 = sbr.rel (0) target = $region25
    $region24: #{tpu_custom_call.1} parent=1 // pred_region
      %s81 = ssub.s32 2048, 2048
      %82 = vsyncadd [#allocation12], %s81
      %s83 = sshll.u32 [#allocation11], 4
      %s84 = int_to_ptr.vmem [resolvable:$true] %s83
      %89 = dma.hbm_to_vmem [thread:$0]  %s5, 2048, %s84, [#allocation12], 128, 128, 8
    $region25: #{tpu_custom_call.1} parent=1 // pred_fallthru
      _
    // Predicated region
    $region26: #{tpu_custom_call.1} parent=1 // pred_check
      _
    $region27: #{tpu_custom_call.1} parent=1 // pred_check_branch
      %91 = sbr.rel (0) target = $region29
    $region28: #{tpu_custom_call.1} parent=1 // pred_region
      %s93 = ssub.s32 2048, 2048
      %94 = vsyncadd [#allocation12], %s93
      %s95 = sshll.u32 [#allocation13], 4
      %s96 = int_to_ptr.vmem [resolvable:$true] %s95
      %101 = dma.hbm_to_vmem [thread:$0]  %s6, 2048, %s96, [#allocation12], 128, 128, 8
    $region29: #{tpu_custom_call.1} parent=1 // pred_fallthru
      _
    // Predicated region
    $region30: #{tpu_custom_call.1} parent=1 // pred_check
      _
    $region31: #{tpu_custom_call.1} parent=1 // pred_check_branch
      %103 = sbr.rel (0) target = $region33
    $region32: #{tpu_custom_call.1} parent=1 // pred_region
      _
    $region33: #{tpu_custom_call.1} parent=1 // pred_fallthru
      _
    // Predicated region
    $region34: #{tpu_custom_call.1} parent=1 // pred_check
      _
    $region35: #{tpu_custom_call.1} parent=1 // pred_check_branch
      %105 = sbr.rel (0) target = $region37
    $region36: #{tpu_custom_call.1} parent=1 // pred_region
      %106 = dma.done [#allocation3], 9216
    $region37: #{tpu_custom_call.1} parent=1 // pred_fallthru
      _
    // Predicated region
    $region38: #{tpu_custom_call.1} parent=1 // pred_check
      _
    $region39: #{tpu_custom_call.1} parent=1 // pred_check_branch
      %108 = sbr.rel (0) target = $region41
    $region40: #{tpu_custom_call.1} parent=1 // pred_region
      %109 = dma.done [#allocation6], 9216
    $region41: #{tpu_custom_call.1} parent=1 // pred_fallthru
      _
    // Predicated region
    $region42: #{tpu_custom_call.1} parent=1 // pred_check
      _
    $region43: #{tpu_custom_call.1} parent=1 // pred_check_branch
      %111 = sbr.rel (0) target = $region45
    $region44: #{tpu_custom_call.1} parent=1 // pred_region
      %112 = dma.done [#allocation6], 9216
    $region45: #{tpu_custom_call.1} parent=1 // pred_fallthru
      _
    // Predicated region
    $region46: #{tpu_custom_call.1} parent=1 // pred_check
      _
    $region47: #{tpu_custom_call.1} parent=1 // pred_check_branch
      %114 = sbr.rel (0) target = $region49
    $region48: #{tpu_custom_call.1} parent=1 // pred_region
      %115 = dma.done [#allocation9], 9216
    $region49: #{tpu_custom_call.1} parent=1 // pred_fallthru
      _
    // Predicated region
    $region50: #{tpu_custom_call.1} parent=1 // pred_check
      _
    $region51: #{tpu_custom_call.1} parent=1 // pred_check_branch
      %117 = sbr.rel (0) target = $region53
    $region52: #{tpu_custom_call.1} parent=1 // pred_region
      %118 = dma.done [#allocation9], 2048
    $region53: #{tpu_custom_call.1} parent=1 // pred_fallthru
      _
    // Predicated region
    $region54: #{tpu_custom_call.1} parent=1 // pred_check
      _
    $region55: #{tpu_custom_call.1} parent=1 // pred_check_branch
      %120 = sbr.rel (0) target = $region57
    $region56: #{tpu_custom_call.1} parent=1 // pred_region
      %121 = dma.done [#allocation12], 2048
    $region57: #{tpu_custom_call.1} parent=1 // pred_fallthru
      _
    // Predicated region
    $region58: #{tpu_custom_call.1} parent=1 // pred_check
      _
    $region59: #{tpu_custom_call.1} parent=1 // pred_check_branch
      %123 = sbr.rel (0) target = $region61
    $region60: #{tpu_custom_call.1} parent=1 // pred_region
      %124 = dma.done [#allocation12], 2048
    $region61: #{tpu_custom_call.1} parent=1 // pred_fallthru
      _
    %v126 = vld [vmem:[%s7] sm:$0x1]
    %v127 = vld [vmem:[%s7 + $0x1] sm:$0x1]
    %v128 = vld [vmem:[%s7 + $0x2] sm:$0x1]
    %v129 = vld [vmem:[%s7 + $0x3] sm:$0x1]
    %v130 = vld [vmem:[%s7 + $0x4] sm:$0x1]
    %v131 = vld [vmem:[#allocation2] sm:$0xff]
    %v132 = vld [vmem:[#allocation2 + $0x8] sm:$0xff]
    %v133 = vld [vmem:[#allocation2 + $0x10] sm:$0xff]
    %v134 = vld [vmem:[#allocation2 + $0x18] sm:$0xff]
    %v135 = vld [vmem:[#allocation2 + $0x20] sm:$0xf]
    %v136 = vld [vmem:[#allocation2 + $0x24] sm:$0xff]
    %v137 = vld [vmem:[#allocation2 + $0x2c] sm:$0xff]
    %v138 = vld [vmem:[#allocation2 + $0x34] sm:$0xff]
    %v139 = vld [vmem:[#allocation2 + $0x3c] sm:$0xff]
    %v140 = vld [vmem:[#allocation2 + $0x44] sm:$0xf]
    %v141 = vld [vmem:[#allocation2 + $0x48] sm:$0xff]
    %v142 = vld [vmem:[#allocation2 + $0x50] sm:$0xff]
    %v143 = vld [vmem:[#allocation2 + $0x58] sm:$0xff]
    %v144 = vld [vmem:[#allocation2 + $0x60] sm:$0xff]
    %v145 = vld [vmem:[#allocation2 + $0x68] sm:$0xf]
    %v146 = vld [vmem:[#allocation2 + $0x6c] sm:$0xff]
    %v147 = vld [vmem:[#allocation2 + $0x74] sm:$0xff]
    %v148 = vld [vmem:[#allocation2 + $0x7c] sm:$0xff]
    %v149 = vld [vmem:[#allocation2 + $0x84] sm:$0xff]
    %v150 = vld [vmem:[#allocation2 + $0x8c] sm:$0xf]
    %v151 = vld [vmem:[#allocation2 + $0x90] sm:$0xff]
    %v152 = vld [vmem:[#allocation2 + $0x98] sm:$0xff]
    %v153 = vld [vmem:[#allocation2 + $0xa0] sm:$0xff]
    %v154 = vld [vmem:[#allocation2 + $0xa8] sm:$0xff]
    %v155 = vld [vmem:[#allocation2 + $0xb0] sm:$0xf]
    %v156 = vld [vmem:[#allocation2 + $0xb4] sm:$0xff]
    %v157 = vld [vmem:[#allocation2 + $0xbc] sm:$0xff]
    %v158 = vld [vmem:[#allocation2 + $0xc4] sm:$0xff]
    %v159 = vld [vmem:[#allocation2 + $0xcc] sm:$0xff]
    %v160 = vld [vmem:[#allocation2 + $0xd4] sm:$0xf]
    %v161 = vld [vmem:[#allocation2 + $0xd8] sm:$0xff]
    %v162 = vld [vmem:[#allocation2 + $0xe0] sm:$0xff]
    %v163 = vld [vmem:[#allocation2 + $0xe8] sm:$0xff]
    %v164 = vld [vmem:[#allocation2 + $0xf0] sm:$0xff]
    %v165 = vld [vmem:[#allocation2 + $0xf8] sm:$0xf]
    %v166 = vld [vmem:[#allocation2 + $0xfc] sm:$0xff]
    %v167 = vld [vmem:[#allocation2 + $0x104] sm:$0xff]
    %v168 = vld [vmem:[#allocation2 + $0x10c] sm:$0xff]
    %v169 = vld [vmem:[#allocation2 + $0x114] sm:$0xff]
    %v170 = vld [vmem:[#allocation2 + $0x11c] sm:$0xf]
    %v171 = vld [vmem:[#allocation2 + $0x120] sm:$0xff]
    %v172 = vld [vmem:[#allocation2 + $0x128] sm:$0xff]
    %v173 = vld [vmem:[#allocation2 + $0x130] sm:$0xff]
    %v174 = vld [vmem:[#allocation2 + $0x138] sm:$0xff]
    %v175 = vld [vmem:[#allocation2 + $0x140] sm:$0xf]
    %v176 = vld [vmem:[#allocation2 + $0x144] sm:$0xff]
    %v177 = vld [vmem:[#allocation2 + $0x14c] sm:$0xff]
    %v178 = vld [vmem:[#allocation2 + $0x154] sm:$0xff]
    %v179 = vld [vmem:[#allocation2 + $0x15c] sm:$0xff]
    %v180 = vld [vmem:[#allocation2 + $0x164] sm:$0xf]
    %v181 = vld [vmem:[#allocation2 + $0x168] sm:$0xff]
    %v182 = vld [vmem:[#allocation2 + $0x170] sm:$0xff]
    %v183 = vld [vmem:[#allocation2 + $0x178] sm:$0xff]
    %v184 = vld [vmem:[#allocation2 + $0x180] sm:$0xff]
    %v185 = vld [vmem:[#allocation2 + $0x188] sm:$0xf]
    %v186 = vld [vmem:[#allocation2 + $0x18c] sm:$0xff]
    %v187 = vld [vmem:[#allocation2 + $0x194] sm:$0xff]
    %v188 = vld [vmem:[#allocation2 + $0x19c] sm:$0xff]
    %v189 = vld [vmem:[#allocation2 + $0x1a4] sm:$0xff]
    %v190 = vld [vmem:[#allocation2 + $0x1ac] sm:$0xf]
    %v191 = vld [vmem:[#allocation2 + $0x1b0] sm:$0xff]
    %v192 = vld [vmem:[#allocation2 + $0x1b8] sm:$0xff]
    %v193 = vld [vmem:[#allocation2 + $0x1c0] sm:$0xff]
    %v194 = vld [vmem:[#allocation2 + $0x1c8] sm:$0xff]
    %v195 = vld [vmem:[#allocation2 + $0x1d0] sm:$0xf]
    %v196 = vld [vmem:[#allocation2 + $0x1d4] sm:$0xff]
    %v197 = vld [vmem:[#allocation2 + $0x1dc] sm:$0xff]
    %v198 = vld [vmem:[#allocation2 + $0x1e4] sm:$0xff]
    %v199 = vld [vmem:[#allocation2 + $0x1ec] sm:$0xff]
    %v200 = vld [vmem:[#allocation2 + $0x1f4] sm:$0xf]
    %v201 = vld [vmem:[#allocation2 + $0x1f8] sm:$0xff]
    %v202 = vld [vmem:[#allocation2 + $0x200] sm:$0xff]
    %v203 = vld [vmem:[#allocation2 + $0x208] sm:$0xff]
    %v204 = vld [vmem:[#allocation2 + $0x210] sm:$0xff]
    %v205 = vld [vmem:[#allocation2 + $0x218] sm:$0xf]
    %v206 = vld [vmem:[#allocation2 + $0x21c] sm:$0xff]
    %v207 = vld [vmem:[#allocation2 + $0x224] sm:$0xff]
    %v208 = vld [vmem:[#allocation2 + $0x22c] sm:$0xff]
    %v209 = vld [vmem:[#allocation2 + $0x234] sm:$0xff]
    %v210 = vld [vmem:[#allocation2 + $0x23c] sm:$0xf]
    %v211 = vld [vmem:[#allocation7] sm:$0xf]
    %v212 = vld [vmem:[#allocation7 + $0x4] sm:$0xf]
    %v213 = vld [vmem:[#allocation7 + $0x8] sm:$0xf]
    %v214 = vld [vmem:[#allocation7 + $0xc] sm:$0xf]
    %v215 = vld [vmem:[#allocation7 + $0x10] sm:$0xf]
    %v216 = vld [vmem:[#allocation7 + $0x14] sm:$0xf]
    %v217 = vld [vmem:[#allocation7 + $0x18] sm:$0xf]
    %v218 = vld [vmem:[#allocation7 + $0x1c] sm:$0xf]
    %v219 = vld [vmem:[#allocation7 + $0x20] sm:$0xf]
    %v220 = vld [vmem:[#allocation7 + $0x24] sm:$0xf]
    %v221 = vld [vmem:[#allocation7 + $0x28] sm:$0xf]
    %v222 = vld [vmem:[#allocation7 + $0x2c] sm:$0xf]
    %v223 = vld [vmem:[#allocation7 + $0x30] sm:$0xf]
    %v224 = vld [vmem:[#allocation7 + $0x34] sm:$0xf]
    %v225 = vld [vmem:[#allocation7 + $0x38] sm:$0xf]
    %v226 = vld [vmem:[#allocation7 + $0x3c] sm:$0xf]
    %v227 = vld [vmem:[#allocation7 + $0x40] sm:$0xf]
    %v228 = vld [vmem:[#allocation7 + $0x44] sm:$0xf]
    %v229 = vld [vmem:[#allocation7 + $0x48] sm:$0xf]
    %v230 = vld [vmem:[#allocation7 + $0x4c] sm:$0xf]
    %v231 = vld [vmem:[#allocation7 + $0x50] sm:$0xf]
    %v232 = vld [vmem:[#allocation7 + $0x54] sm:$0xf]
    %v233 = vld [vmem:[#allocation7 + $0x58] sm:$0xf]
    %v234 = vld [vmem:[#allocation7 + $0x5c] sm:$0xf]
    %v235 = vld [vmem:[#allocation7 + $0x60] sm:$0xf]
    %v236 = vld [vmem:[#allocation7 + $0x64] sm:$0xf]
    %v237 = vld [vmem:[#allocation7 + $0x68] sm:$0xf]
    %v238 = vld [vmem:[#allocation7 + $0x6c] sm:$0xf]
    %v239 = vld [vmem:[#allocation7 + $0x70] sm:$0xf]
    %v240 = vld [vmem:[#allocation7 + $0x74] sm:$0xf]
    %v241 = vld [vmem:[#allocation7 + $0x78] sm:$0xf]
    %v242 = vld [vmem:[#allocation7 + $0x7c] sm:$0xf]
    %v243 = vld [vmem:[#allocation7 + $0x80] sm:$0xf]
    %v244 = vld [vmem:[#allocation7 + $0x84] sm:$0xf]
    %v245 = vld [vmem:[#allocation7 + $0x88] sm:$0xf]
    %v246 = vld [vmem:[#allocation7 + $0x8c] sm:$0xf]
    %v247 = vld [vmem:[#allocation7 + $0x90] sm:$0xf]
    %v248 = vld [vmem:[#allocation7 + $0x94] sm:$0xf]
    %v249 = vld [vmem:[#allocation7 + $0x98] sm:$0xf]
    %v250 = vld [vmem:[#allocation7 + $0x9c] sm:$0xf]
    %v251 = vld [vmem:[#allocation7 + $0xa0] sm:$0xf]
    %v252 = vld [vmem:[#allocation7 + $0xa4] sm:$0xf]
    %v253 = vld [vmem:[#allocation7 + $0xa8] sm:$0xf]
    %v254 = vld [vmem:[#allocation7 + $0xac] sm:$0xf]
    %v255 = vld [vmem:[#allocation7 + $0xb0] sm:$0xf]
    %v256 = vld [vmem:[#allocation7 + $0xb4] sm:$0xf]
    %v257 = vld [vmem:[#allocation7 + $0xb8] sm:$0xf]
    %v258 = vld [vmem:[#allocation7 + $0xbc] sm:$0xf]
    %v259 = vld [vmem:[#allocation7 + $0xc0] sm:$0xf]
    %v260 = vld [vmem:[#allocation7 + $0xc4] sm:$0xf]
    %v261 = vld [vmem:[#allocation7 + $0xc8] sm:$0xf]
    %v262 = vld [vmem:[#allocation7 + $0xcc] sm:$0xf]
    %v263 = vld [vmem:[#allocation7 + $0xd0] sm:$0xf]
    %v264 = vld [vmem:[#allocation7 + $0xd4] sm:$0xf]
    %v265 = vld [vmem:[#allocation7 + $0xd8] sm:$0xf]
    %v266 = vld [vmem:[#allocation7 + $0xdc] sm:$0xf]
    %v267 = vld [vmem:[#allocation7 + $0xe0] sm:$0xf]
    %v268 = vld [vmem:[#allocation7 + $0xe4] sm:$0xf]
    %v269 = vld [vmem:[#allocation7 + $0xe8] sm:$0xf]
    %v270 = vld [vmem:[#allocation7 + $0xec] sm:$0xf]
    %v271 = vld [vmem:[#allocation7 + $0xf0] sm:$0xf]
    %v272 = vld [vmem:[#allocation7 + $0xf4] sm:$0xf]
    %v273 = vld [vmem:[#allocation7 + $0xf8] sm:$0xf]
    %v274 = vld [vmem:[#allocation7 + $0xfc] sm:$0xf]
    %v275 = vld [vmem:[#allocation7 + $0x100] sm:$0xf]
    %v276 = vld [vmem:[#allocation7 + $0x104] sm:$0xf]
    %v277 = vld [vmem:[#allocation7 + $0x108] sm:$0xf]
    %v278 = vld [vmem:[#allocation7 + $0x10c] sm:$0xf]
    %v279 = vld [vmem:[#allocation7 + $0x110] sm:$0xf]
    %v280 = vld [vmem:[#allocation7 + $0x114] sm:$0xf]
    %v281 = vld [vmem:[#allocation7 + $0x118] sm:$0xf]
    %v282 = vld [vmem:[#allocation7 + $0x11c] sm:$0xf]
    %v283 = vld [vmem:[#allocation7 + $0x120] sm:$0xf]
    %v284 = vld [vmem:[#allocation7 + $0x124] sm:$0xf]
    %v285 = vld [vmem:[#allocation7 + $0x128] sm:$0xf]
    %v286 = vld [vmem:[#allocation7 + $0x12c] sm:$0xf]
    %v287 = vld [vmem:[#allocation7 + $0x130] sm:$0xf]
    %v288 = vld [vmem:[#allocation7 + $0x134] sm:$0xf]
    %v289 = vld [vmem:[#allocation7 + $0x138] sm:$0xf]
    %v290 = vld [vmem:[#allocation7 + $0x13c] sm:$0xf]
    %v291 = vld [vmem:[#allocation7 + $0x140] sm:$0xf]
    %v292 = vld [vmem:[#allocation7 + $0x144] sm:$0xf]
    %v293 = vld [vmem:[#allocation7 + $0x148] sm:$0xf]
    %v294 = vld [vmem:[#allocation7 + $0x14c] sm:$0xf]
    %v295 = vld [vmem:[#allocation7 + $0x150] sm:$0xf]
    %v296 = vld [vmem:[#allocation7 + $0x154] sm:$0xf]
    %v297 = vld [vmem:[#allocation7 + $0x158] sm:$0xf]
    %v298 = vld [vmem:[#allocation7 + $0x15c] sm:$0xf]
    %v299 = vld [vmem:[#allocation7 + $0x160] sm:$0xf]
    %v300 = vld [vmem:[#allocation7 + $0x164] sm:$0xf]
    %v301 = vld [vmem:[#allocation7 + $0x168] sm:$0xf]
    %v302 = vld [vmem:[#allocation7 + $0x16c] sm:$0xf]
    %v303 = vld [vmem:[#allocation7 + $0x170] sm:$0xf]
    %v304 = vld [vmem:[#allocation7 + $0x174] sm:$0xf]
    %v305 = vld [vmem:[#allocation7 + $0x178] sm:$0xf]
    %v306 = vld [vmem:[#allocation7 + $0x17c] sm:$0xf]
    %v307 = vld [vmem:[#allocation7 + $0x180] sm:$0xf]
    %v308 = vld [vmem:[#allocation7 + $0x184] sm:$0xf]
    %v309 = vld [vmem:[#allocation7 + $0x188] sm:$0xf]
    %v310 = vld [vmem:[#allocation7 + $0x18c] sm:$0xf]
    %v311 = vld [vmem:[#allocation7 + $0x190] sm:$0xf]
    %v312 = vld [vmem:[#allocation7 + $0x194] sm:$0xf]
    %v313 = vld [vmem:[#allocation7 + $0x198] sm:$0xf]
    %v314 = vld [vmem:[#allocation7 + $0x19c] sm:$0xf]
    %v315 = vld [vmem:[#allocation7 + $0x1a0] sm:$0xf]
    %v316 = vld [vmem:[#allocation7 + $0x1a4] sm:$0xf]
    %v317 = vld [vmem:[#allocation7 + $0x1a8] sm:$0xf]
    %v318 = vld [vmem:[#allocation7 + $0x1ac] sm:$0xf]
    %v319 = vld [vmem:[#allocation7 + $0x1b0] sm:$0xf]
    %v320 = vld [vmem:[#allocation7 + $0x1b4] sm:$0xf]
    %v321 = vld [vmem:[#allocation7 + $0x1b8] sm:$0xf]
    %v322 = vld [vmem:[#allocation7 + $0x1bc] sm:$0xf]
    %v323 = vld [vmem:[#allocation7 + $0x1c0] sm:$0xf]
    %v324 = vld [vmem:[#allocation7 + $0x1c4] sm:$0xf]
    %v325 = vld [vmem:[#allocation7 + $0x1c8] sm:$0xf]
    %v326 = vld [vmem:[#allocation7 + $0x1cc] sm:$0xf]
    %v327 = vld [vmem:[#allocation7 + $0x1d0] sm:$0xf]
    %v328 = vld [vmem:[#allocation7 + $0x1d4] sm:$0xf]
    %v329 = vld [vmem:[#allocation7 + $0x1d8] sm:$0xf]
    %v330 = vld [vmem:[#allocation7 + $0x1dc] sm:$0xf]
    %v331 = vld [vmem:[#allocation7 + $0x1e0] sm:$0xf]
    %v332 = vld [vmem:[#allocation7 + $0x1e4] sm:$0xf]
    %v333 = vld [vmem:[#allocation7 + $0x1e8] sm:$0xf]
    %v334 = vld [vmem:[#allocation7 + $0x1ec] sm:$0xf]
    %v335 = vld [vmem:[#allocation7 + $0x1f0] sm:$0xf]
    %v336 = vld [vmem:[#allocation7 + $0x1f4] sm:$0xf]
    %v337 = vld [vmem:[#allocation7 + $0x1f8] sm:$0xf]
    %v338 = vld [vmem:[#allocation7 + $0x1fc] sm:$0xf]
    %v339 = vld [vmem:[#allocation7 + $0x200] sm:$0xf]
    %v340 = vld [vmem:[#allocation7 + $0x204] sm:$0xf]
    %v341 = vld [vmem:[#allocation7 + $0x208] sm:$0xf]
    %v342 = vld [vmem:[#allocation7 + $0x20c] sm:$0xf]
    %v343 = vld [vmem:[#allocation7 + $0x210] sm:$0xf]
    %v344 = vld [vmem:[#allocation7 + $0x214] sm:$0xf]
    %v345 = vld [vmem:[#allocation7 + $0x218] sm:$0xf]
    %v346 = vld [vmem:[#allocation7 + $0x21c] sm:$0xf]
    %v347 = vld [vmem:[#allocation7 + $0x220] sm:$0xf]
    %v348 = vld [vmem:[#allocation7 + $0x224] sm:$0xf]
    %v349 = vld [vmem:[#allocation7 + $0x228] sm:$0xf]
    %v350 = vld [vmem:[#allocation7 + $0x22c] sm:$0xf]
    %v351 = vld [vmem:[#allocation7 + $0x230] sm:$0xf]
    %v352 = vld [vmem:[#allocation7 + $0x234] sm:$0xf]
    %v353 = vld [vmem:[#allocation7 + $0x238] sm:$0xf]
    %v354 = vld [vmem:[#allocation7 + $0x23c] sm:$0xf]
    %v355 = vlaneseq
    %v356 = vshrl.u32 %v355, 7
    %v357 = vsub.s32 0, %v356
    %v358 = vrot.slane %v126, %v357
    %v439 = vunpack.c.l.b16 %v131
    %v440 = vunpack.c.h.b16 %v131
    %v441 = vunpack.c.l.b16 %v132
    %v442 = vunpack.c.h.b16 %v132
    %v443 = vunpack.c.l.b16 %v133
    %v444 = vunpack.c.h.b16 %v133
    %v445 = vunpack.c.l.b16 %v134
    %v446 = vunpack.c.h.b16 %v134
    %v447 = vunpack.c.l.b16 %v135
    %v448 = vunpack.c.l.b16 %v136
    %v449 = vunpack.c.h.b16 %v136
    %v450 = vunpack.c.l.b16 %v137
    %v451 = vunpack.c.h.b16 %v137
    %v452 = vunpack.c.l.b16 %v138
    %v453 = vunpack.c.h.b16 %v138
    %v454 = vunpack.c.l.b16 %v139
    %v455 = vunpack.c.h.b16 %v139
    %v456 = vunpack.c.l.b16 %v140
    %v457 = vunpack.c.l.b16 %v141
    %v458 = vunpack.c.h.b16 %v141
    %v459 = vunpack.c.l.b16 %v142
    %v460 = vunpack.c.h.b16 %v142
    %v461 = vunpack.c.l.b16 %v143
    %v462 = vunpack.c.h.b16 %v143
    %v463 = vunpack.c.l.b16 %v144
    %v464 = vunpack.c.h.b16 %v144
    %v465 = vunpack.c.l.b16 %v145
    %v466 = vunpack.c.l.b16 %v146
    %v467 = vunpack.c.h.b16 %v146
    %v468 = vunpack.c.l.b16 %v147
    %v469 = vunpack.c.h.b16 %v147
    %v470 = vunpack.c.l.b16 %v148
    %v471 = vunpack.c.h.b16 %v148
    %v472 = vunpack.c.l.b16 %v149
    %v473 = vunpack.c.h.b16 %v149
    %v474 = vunpack.c.l.b16 %v150
    %v475 = vunpack.c.l.b16 %v151
    %v476 = vunpack.c.h.b16 %v151
    %v477 = vunpack.c.l.b16 %v152
    %v478 = vunpack.c.h.b16 %v152
    %v479 = vunpack.c.l.b16 %v153
    %v480 = vunpack.c.h.b16 %v153
    %v481 = vunpack.c.l.b16 %v154
    %v482 = vunpack.c.h.b16 %v154
    %v483 = vunpack.c.l.b16 %v155
    %v484 = vunpack.c.l.b16 %v156
    %v485 = vunpack.c.h.b16 %v156
    %v486 = vunpack.c.l.b16 %v157
    %v487 = vunpack.c.h.b16 %v157
    %v488 = vunpack.c.l.b16 %v158
    %v489 = vunpack.c.h.b16 %v158
    %v490 = vunpack.c.l.b16 %v159
    %v491 = vunpack.c.h.b16 %v159
    %v492 = vunpack.c.l.b16 %v160
    %v493 = vunpack.c.l.b16 %v161
    %v494 = vunpack.c.h.b16 %v161
    %v495 = vunpack.c.l.b16 %v162
    %v496 = vunpack.c.h.b16 %v162
    %v497 = vunpack.c.l.b16 %v163
    %v498 = vunpack.c.h.b16 %v163
    %v499 = vunpack.c.l.b16 %v164
    %v500 = vunpack.c.h.b16 %v164
    %v501 = vunpack.c.l.b16 %v165
    %v502 = vunpack.c.l.b16 %v166
    %v503 = vunpack.c.h.b16 %v166
    %v504 = vunpack.c.l.b16 %v167
    %v505 = vunpack.c.h.b16 %v167
    %v506 = vunpack.c.l.b16 %v168
    %v507 = vunpack.c.h.b16 %v168
    %v508 = vunpack.c.l.b16 %v169
    %v509 = vunpack.c.h.b16 %v169
    %v510 = vunpack.c.l.b16 %v170
    %v511 = vunpack.c.l.b16 %v171
    %v512 = vunpack.c.h.b16 %v171
    %v513 = vunpack.c.l.b16 %v172
    %v514 = vunpack.c.h.b16 %v172
    %v515 = vunpack.c.l.b16 %v173
    %v516 = vunpack.c.h.b16 %v173
    %v517 = vunpack.c.l.b16 %v174
    %v518 = vunpack.c.h.b16 %v174
    %v519 = vunpack.c.l.b16 %v175
    %v520 = vunpack.c.l.b16 %v176
    %v521 = vunpack.c.h.b16 %v176
    %v522 = vunpack.c.l.b16 %v177
    %v523 = vunpack.c.h.b16 %v177
    %v524 = vunpack.c.l.b16 %v178
    %v525 = vunpack.c.h.b16 %v178
    %v526 = vunpack.c.l.b16 %v179
    %v527 = vunpack.c.h.b16 %v179
    %v528 = vunpack.c.l.b16 %v180
    %v529 = vunpack.c.l.b16 %v181
    %v530 = vunpack.c.h.b16 %v181
    %v531 = vunpack.c.l.b16 %v182
    %v532 = vunpack.c.h.b16 %v182
    %v533 = vunpack.c.l.b16 %v183
    %v534 = vunpack.c.h.b16 %v183
    %v535 = vunpack.c.l.b16 %v184
    %v536 = vunpack.c.h.b16 %v184
    %v537 = vunpack.c.l.b16 %v185
    %v538 = vunpack.c.l.b16 %v186
    %v539 = vunpack.c.h.b16 %v186
    %v540 = vunpack.c.l.b16 %v187
    %v541 = vunpack.c.h.b16 %v187
    %v542 = vunpack.c.l.b16 %v188
    %v543 = vunpack.c.h.b16 %v188
    %v544 = vunpack.c.l.b16 %v189
    %v545 = vunpack.c.h.b16 %v189
    %v546 = vunpack.c.l.b16 %v190
    %v547 = vunpack.c.l.b16 %v191
    %v548 = vunpack.c.h.b16 %v191
    %v549 = vunpack.c.l.b16 %v192
    %v550 = vunpack.c.h.b16 %v192
    %v551 = vunpack.c.l.b16 %v193
    %v552 = vunpack.c.h.b16 %v193
    %v553 = vunpack.c.l.b16 %v194
    %v554 = vunpack.c.h.b16 %v194
    %v555 = vunpack.c.l.b16 %v195
    %v556 = vunpack.c.l.b16 %v196
    %v557 = vunpack.c.h.b16 %v196
    %v558 = vunpack.c.l.b16 %v197
    %v559 = vunpack.c.h.b16 %v197
    %v560 = vunpack.c.l.b16 %v198
    %v561 = vunpack.c.h.b16 %v198
    %v562 = vunpack.c.l.b16 %v199
    %v563 = vunpack.c.h.b16 %v199
    %v564 = vunpack.c.l.b16 %v200
    %v565 = vunpack.c.l.b16 %v201
    %v566 = vunpack.c.h.b16 %v201
    %v567 = vunpack.c.l.b16 %v202
    %v568 = vunpack.c.h.b16 %v202
    %v569 = vunpack.c.l.b16 %v203
    %v570 = vunpack.c.h.b16 %v203
    %v571 = vunpack.c.l.b16 %v204
    %v572 = vunpack.c.h.b16 %v204
    %v573 = vunpack.c.l.b16 %v205
    %v574 = vunpack.c.l.b16 %v206
    %v575 = vunpack.c.h.b16 %v206
    %v576 = vunpack.c.l.b16 %v207
    %v577 = vunpack.c.h.b16 %v207
    %v578 = vunpack.c.l.b16 %v208
    %v579 = vunpack.c.h.b16 %v208
    %v580 = vunpack.c.l.b16 %v209
    %v581 = vunpack.c.h.b16 %v209
    %v582 = vunpack.c.l.b16 %v210
    %v583 = vpack.c.b16 %v448, %v439
    %v584 = vpack.c.b16 %v449, %v440
    %v585 = vpack.c.b16 %v450, %v441
    %v586 = vpack.c.b16 %v451, %v442
    %v587 = vpack.c.b16 %v452, %v443
    %v588 = vpack.c.b16 %v453, %v444
    %v589 = vpack.c.b16 %v454, %v445
    %v590 = vpack.c.b16 %v455, %v446
    %v591 = vpack.c.b16 %v456, %v447
    %v592 = vpack.c.b16 %v466, %v457
    %v593 = vpack.c.b16 %v467, %v458
    %v594 = vpack.c.b16 %v468, %v459
    %v595 = vpack.c.b16 %v469, %v460
    %v596 = vpack.c.b16 %v470, %v461
    %v597 = vpack.c.b16 %v471, %v462
    %v598 = vpack.c.b16 %v472, %v463
    %v599 = vpack.c.b16 %v473, %v464
    %v600 = vpack.c.b16 %v474, %v465
    %v601 = vpack.c.b16 %v484, %v475
    %v602 = vpack.c.b16 %v485, %v476
    %v603 = vpack.c.b16 %v486, %v477
    %v604 = vpack.c.b16 %v487, %v478
    %v605 = vpack.c.b16 %v488, %v479
    %v606 = vpack.c.b16 %v489, %v480
    %v607 = vpack.c.b16 %v490, %v481
    %v608 = vpack.c.b16 %v491, %v482
    %v609 = vpack.c.b16 %v492, %v483
    %v610 = vpack.c.b16 %v502, %v493
    %v611 = vpack.c.b16 %v503, %v494
    %v612 = vpack.c.b16 %v504, %v495
    %v613 = vpack.c.b16 %v505, %v496
    %v614 = vpack.c.b16 %v506, %v497
    %v615 = vpack.c.b16 %v507, %v498
    %v616 = vpack.c.b16 %v508, %v499
    %v617 = vpack.c.b16 %v509, %v500
    %v618 = vpack.c.b16 %v510, %v501
    %v619 = vpack.c.b16 %v520, %v511
    %v620 = vpack.c.b16 %v521, %v512
    %v621 = vpack.c.b16 %v522, %v513
    %v622 = vpack.c.b16 %v523, %v514
    %v623 = vpack.c.b16 %v524, %v515
    %v624 = vpack.c.b16 %v525, %v516
    %v625 = vpack.c.b16 %v526, %v517
    %v626 = vpack.c.b16 %v527, %v518
    %v627 = vpack.c.b16 %v528, %v519
    %v628 = vpack.c.b16 %v538, %v529
    %v629 = vpack.c.b16 %v539, %v530
    %v630 = vpack.c.b16 %v540, %v531
    %v631 = vpack.c.b16 %v541, %v532
    %v632 = vpack.c.b16 %v542, %v533
    %v633 = vpack.c.b16 %v543, %v534
    %v634 = vpack.c.b16 %v544, %v535
    %v635 = vpack.c.b16 %v545, %v536
    %v636 = vpack.c.b16 %v546, %v537
    %v637 = vpack.c.b16 %v556, %v547
    %v638 = vpack.c.b16 %v557, %v548
    %v639 = vpack.c.b16 %v558, %v549
    %v640 = vpack.c.b16 %v559, %v550
    %v641 = vpack.c.b16 %v560, %v551
    %v642 = vpack.c.b16 %v561, %v552
    %v643 = vpack.c.b16 %v562, %v553
    %v644 = vpack.c.b16 %v563, %v554
    %v645 = vpack.c.b16 %v564, %v555
    %v646 = vpack.c.b16 %v574, %v565
    %v647 = vpack.c.b16 %v575, %v566
    %v648 = vpack.c.b16 %v576, %v567
    %v649 = vpack.c.b16 %v577, %v568
    %v650 = vpack.c.b16 %v578, %v569
    %v651 = vpack.c.b16 %v579, %v570
    %v652 = vpack.c.b16 %v580, %v571
    %v653 = vpack.c.b16 %v581, %v572
    %v654 = vpack.c.b16 %v582, %v573
    %v871 = vunpack.c.l.b16 %v211
    %v872 = vunpack.c.l.b16 %v212
    %v873 = vunpack.c.l.b16 %v213
    %v874 = vunpack.c.l.b16 %v214
    %v875 = vunpack.c.l.b16 %v215
    %v876 = vunpack.c.l.b16 %v216
    %v877 = vunpack.c.l.b16 %v217
    %v878 = vunpack.c.l.b16 %v218
    %v879 = vunpack.c.l.b16 %v219
    %v880 = vunpack.c.l.b16 %v220
    %v881 = vunpack.c.l.b16 %v221
    %v882 = vunpack.c.l.b16 %v222
    %v883 = vunpack.c.l.b16 %v223
    %v884 = vunpack.c.l.b16 %v224
    %v885 = vunpack.c.l.b16 %v225
    %v886 = vunpack.c.l.b16 %v226
    %v887 = vunpack.c.l.b16 %v227
    %v888 = vunpack.c.l.b16 %v228
    %v889 = vunpack.c.l.b16 %v229
    %v890 = vunpack.c.l.b16 %v230
    %v891 = vunpack.c.l.b16 %v231
    %v892 = vunpack.c.l.b16 %v232
    %v893 = vunpack.c.l.b16 %v233
    %v894 = vunpack.c.l.b16 %v234
    %v895 = vunpack.c.l.b16 %v235
    %v896 = vunpack.c.l.b16 %v236
    %v897 = vunpack.c.l.b16 %v237
    %v898 = vunpack.c.l.b16 %v238
    %v899 = vunpack.c.l.b16 %v239
    %v900 = vunpack.c.l.b16 %v240
    %v901 = vunpack.c.l.b16 %v241
    %v902 = vunpack.c.l.b16 %v242
    %v903 = vunpack.c.l.b16 %v243
    %v904 = vunpack.c.l.b16 %v244
    %v905 = vunpack.c.l.b16 %v245
    %v906 = vunpack.c.l.b16 %v246
    %v907 = vunpack.c.l.b16 %v247
    %v908 = vunpack.c.l.b16 %v248
    %v909 = vunpack.c.l.b16 %v249
    %v910 = vunpack.c.l.b16 %v250
    %v911 = vunpack.c.l.b16 %v251
    %v912 = vunpack.c.l.b16 %v252
    %v913 = vunpack.c.l.b16 %v253
    %v914 = vunpack.c.l.b16 %v254
    %v915 = vunpack.c.l.b16 %v255
    %v916 = vunpack.c.l.b16 %v256
    %v917 = vunpack.c.l.b16 %v257
    %v918 = vunpack.c.l.b16 %v258
    %v919 = vunpack.c.l.b16 %v259
    %v920 = vunpack.c.l.b16 %v260
    %v921 = vunpack.c.l.b16 %v261
    %v922 = vunpack.c.l.b16 %v262
    %v923 = vunpack.c.l.b16 %v263
    %v924 = vunpack.c.l.b16 %v264
    %v925 = vunpack.c.l.b16 %v265
    %v926 = vunpack.c.l.b16 %v266
    %v927 = vunpack.c.l.b16 %v267
    %v928 = vunpack.c.l.b16 %v268
    %v929 = vunpack.c.l.b16 %v269
    %v930 = vunpack.c.l.b16 %v270
    %v931 = vunpack.c.l.b16 %v271
    %v932 = vunpack.c.l.b16 %v272
    %v933 = vunpack.c.l.b16 %v273
    %v934 = vunpack.c.l.b16 %v274
    %v935 = vunpack.c.l.b16 %v275
    %v936 = vunpack.c.l.b16 %v276
    %v937 = vunpack.c.l.b16 %v277
    %v938 = vunpack.c.l.b16 %v278
    %v939 = vunpack.c.l.b16 %v279
    %v940 = vunpack.c.l.b16 %v280
    %v941 = vunpack.c.l.b16 %v281
    %v942 = vunpack.c.l.b16 %v282
    %v943 = vunpack.c.l.b16 %v283
    %v944 = vunpack.c.l.b16 %v284
    %v945 = vunpack.c.l.b16 %v285
    %v946 = vunpack.c.l.b16 %v286
    %v947 = vunpack.c.l.b16 %v287
    %v948 = vunpack.c.l.b16 %v288
    %v949 = vunpack.c.l.b16 %v289
    %v950 = vunpack.c.l.b16 %v290
    %v951 = vunpack.c.l.b16 %v291
    %v952 = vunpack.c.l.b16 %v292
    %v953 = vunpack.c.l.b16 %v293
    %v954 = vunpack.c.l.b16 %v294
    %v955 = vunpack.c.l.b16 %v295
    %v956 = vunpack.c.l.b16 %v296
    %v957 = vunpack.c.l.b16 %v297
    %v958 = vunpack.c.l.b16 %v298
    %v959 = vunpack.c.l.b16 %v299
    %v960 = vunpack.c.l.b16 %v300
    %v961 = vunpack.c.l.b16 %v301
    %v962 = vunpack.c.l.b16 %v302
    %v963 = vunpack.c.l.b16 %v303
    %v964 = vunpack.c.l.b16 %v304
    %v965 = vunpack.c.l.b16 %v305
    %v966 = vunpack.c.l.b16 %v306
    %v967 = vunpack.c.l.b16 %v307
    %v968 = vunpack.c.l.b16 %v308
    %v969 = vunpack.c.l.b16 %v309
    %v970 = vunpack.c.l.b16 %v310
    %v971 = vunpack.c.l.b16 %v311
    %v972 = vunpack.c.l.b16 %v312
    %v973 = vunpack.c.l.b16 %v313
    %v974 = vunpack.c.l.b16 %v314
    %v975 = vunpack.c.l.b16 %v315
    %v976 = vunpack.c.l.b16 %v316
    %v977 = vunpack.c.l.b16 %v317
    %v978 = vunpack.c.l.b16 %v318
    %v979 = vunpack.c.l.b16 %v319
    %v980 = vunpack.c.l.b16 %v320
    %v981 = vunpack.c.l.b16 %v321
    %v982 = vunpack.c.l.b16 %v322
    %v983 = vunpack.c.l.b16 %v323
    %v984 = vunpack.c.l.b16 %v324
    %v985 = vunpack.c.l.b16 %v325
    %v986 = vunpack.c.l.b16 %v326
    %v987 = vunpack.c.l.b16 %v327
    %v988 = vunpack.c.l.b16 %v328
    %v989 = vunpack.c.l.b16 %v329
    %v990 = vunpack.c.l.b16 %v330
    %v991 = vunpack.c.l.b16 %v331
    %v992 = vunpack.c.l.b16 %v332
    %v993 = vunpack.c.l.b16 %v333
    %v994 = vunpack.c.l.b16 %v334
    %v995 = vunpack.c.l.b16 %v335
    %v996 = vunpack.c.l.b16 %v336
    %v997 = vunpack.c.l.b16 %v337
    %v998 = vunpack.c.l.b16 %v338
    %v999 = vunpack.c.l.b16 %v339
    %v1000 = vunpack.c.l.b16 %v340
    %v1001 = vunpack.c.l.b16 %v341
    %v1002 = vunpack.c.l.b16 %v342
    %v1003 = vunpack.c.l.b16 %v343
    %v1004 = vunpack.c.l.b16 %v344
    %v1005 = vunpack.c.l.b16 %v345
    %v1006 = vunpack.c.l.b16 %v346
    %v1007 = vunpack.c.l.b16 %v347
    %v1008 = vunpack.c.l.b16 %v348
    %v1009 = vunpack.c.l.b16 %v349
    %v1010 = vunpack.c.l.b16 %v350
    %v1011 = vunpack.c.l.b16 %v351
    %v1012 = vunpack.c.l.b16 %v352
    %v1013 = vunpack.c.l.b16 %v353
    %v1014 = vunpack.c.l.b16 %v354
    %v1015 = vpack.c.b16 %v872, %v871
    %v1016 = vpack.c.b16 %v874, %v873
    %v1017 = vpack.c.b16 %v876, %v875
    %v1018 = vpack.c.b16 %v878, %v877
    %v1019 = vpack.c.b16 %v880, %v879
    %v1020 = vpack.c.b16 %v882, %v881
    %v1021 = vpack.c.b16 %v884, %v883
    %v1022 = vpack.c.b16 %v886, %v885
    %v1023 = vpack.c.b16 %v888, %v887
    %v1024 = vpack.c.b16 %v890, %v889
    %v1025 = vpack.c.b16 %v892, %v891
    %v1026 = vpack.c.b16 %v894, %v893
    %v1027 = vpack.c.b16 %v896, %v895
    %v1028 = vpack.c.b16 %v898, %v897
    %v1029 = vpack.c.b16 %v900, %v899
    %v1030 = vpack.c.b16 %v902, %v901
    %v1031 = vpack.c.b16 %v904, %v903
    %v1032 = vpack.c.b16 %v906, %v905
    %v1033 = vpack.c.b16 %v908, %v907
    %v1034 = vpack.c.b16 %v910, %v909
    %v1035 = vpack.c.b16 %v912, %v911
    %v1036 = vpack.c.b16 %v914, %v913
    %v1037 = vpack.c.b16 %v916, %v915
    %v1038 = vpack.c.b16 %v918, %v917
    %v1039 = vpack.c.b16 %v920, %v919
    %v1040 = vpack.c.b16 %v922, %v921
    %v1041 = vpack.c.b16 %v924, %v923
    %v1042 = vpack.c.b16 %v926, %v925
    %v1043 = vpack.c.b16 %v928, %v927
    %v1044 = vpack.c.b16 %v930, %v929
    %v1045 = vpack.c.b16 %v932, %v931
    %v1046 = vpack.c.b16 %v934, %v933
    %v1047 = vpack.c.b16 %v936, %v935
    %v1048 = vpack.c.b16 %v938, %v937
    %v1049 = vpack.c.b16 %v940, %v939
    %v1050 = vpack.c.b16 %v942, %v941
    %v1051 = vpack.c.b16 %v944, %v943
    %v1052 = vpack.c.b16 %v946, %v945
    %v1053 = vpack.c.b16 %v948, %v947
    %v1054 = vpack.c.b16 %v950, %v949
    %v1055 = vpack.c.b16 %v952, %v951
    %v1056 = vpack.c.b16 %v954, %v953
    %v1057 = vpack.c.b16 %v956, %v955
    %v1058 = vpack.c.b16 %v958, %v957
    %v1059 = vpack.c.b16 %v960, %v959
    %v1060 = vpack.c.b16 %v962, %v961
    %v1061 = vpack.c.b16 %v964, %v963
    %v1062 = vpack.c.b16 %v966, %v965
    %v1063 = vpack.c.b16 %v968, %v967
    %v1064 = vpack.c.b16 %v970, %v969
    %v1065 = vpack.c.b16 %v972, %v971
    %v1066 = vpack.c.b16 %v974, %v973
    %v1067 = vpack.c.b16 %v976, %v975
    %v1068 = vpack.c.b16 %v978, %v977
    %v1069 = vpack.c.b16 %v980, %v979
    %v1070 = vpack.c.b16 %v982, %v981
    %v1071 = vpack.c.b16 %v984, %v983
    %v1072 = vpack.c.b16 %v986, %v985
    %v1073 = vpack.c.b16 %v988, %v987
    %v1074 = vpack.c.b16 %v990, %v989
    %v1075 = vpack.c.b16 %v992, %v991
    %v1076 = vpack.c.b16 %v994, %v993
    %v1077 = vpack.c.b16 %v996, %v995
    %v1078 = vpack.c.b16 %v998, %v997
    %v1079 = vpack.c.b16 %v1000, %v999
    %v1080 = vpack.c.b16 %v1002, %v1001
    %v1081 = vpack.c.b16 %v1004, %v1003
    %v1082 = vpack.c.b16 %v1006, %v1005
    %v1083 = vpack.c.b16 %v1008, %v1007
    %v1084 = vpack.c.b16 %v1010, %v1009
    %v1085 = vpack.c.b16 %v1012, %v1011
    %v1086 = vpack.c.b16 %v1014, %v1013
    %1159 = vmatprep.subr.bf16.mxu0 0
    %1160 = vmatpush1.bf16.msra.mxu0 %v1015
    %1161 = vmatprep.subr.bf16.mxu0 0
    %1162 = vmatpush1.bf16.msra.mxu0 %v1016
    %1163 = vmatprep.subr.bf16.mxu0 0
    %1164 = vmatpush1.bf16.msra.mxu0 %v1017
    %1165 = vmatprep.subr.bf16.mxu0 0
    %1166 = vmatpush1.bf16.msra.mxu0 %v1018
    %1167 = vmatprep.subr.bf16.mxu0 0
    %1168 = vmatpush1.bf16.msra.mxu0 %v1019
    %1169 = vmatprep.subr.bf16.mxu0 0
    %1170 = vmatpush1.bf16.msra.mxu0 %v1020
    %1171 = vmatprep.subr.bf16.mxu0 0
    %1172 = vmatpush1.bf16.msra.mxu0 %v1021
    %1173 = vmatprep.subr.bf16.mxu0 0
    %1174 = vmatpush1.bf16.msra.mxu0 %v1022
    %1175 = vmatprep.subr.bf16.mxu0 0
    %1176 = vmatpush1.bf16.msra.mxu0 %v1023
    %1177 = vmatprep.subr.bf16.mxu0 0
    %1178 = vmatpush1.bf16.msra.mxu0 %v1024
    %1179 = vmatprep.subr.bf16.mxu0 0
    %1180 = vmatpush1.bf16.msra.mxu0 %v1025
    %1181 = vmatprep.subr.bf16.mxu0 0
    %1182 = vmatpush1.bf16.msra.mxu0 %v1026
    %1183 = vmatprep.subr.bf16.mxu0 0
    %1184 = vmatpush1.bf16.msra.mxu0 %v1027
    %1185 = vmatprep.subr.bf16.mxu0 0
    %1186 = vmatpush1.bf16.msra.mxu0 %v1028
    %1187 = vmatprep.subr.bf16.mxu0 0
    %1188 = vmatpush1.bf16.msra.mxu0 %v1029
    %1189 = vmatprep.subr.bf16.mxu0 0
    %1190 = vmatpush1.bf16.msra.mxu0 %v1030
    %1191 = vmatprep.mubr.bf16.mxu0 %v584
    %1192 = vmatmul.mubr.bf16.gmra.mrb[0].mxu0 %v583
    %v1193 = vpop.f32.mrb[0].mxu0
    %v1194 = vadd.f32 %v358, %v1193
    %v1195 = vpop.f32.mrb[0].mxu0
    %v1196 = vpop.f32.mrb[0].mxu0
    %v1197 = vadd.f32 %v358, %v1196
    %v1198 = vpop.f32.mrb[0].mxu0
    %1199 = vmatprep.mubr.bf16.mxu0 %v593
    %1200 = vmatmul.mubr.bf16.gmra.mrb[0].mxu0 %v592
    %v1201 = vpop.f32.mrb[0].mxu0
    %v1202 = vadd.f32 %v358, %v1201
    %v1203 = vpop.f32.mrb[0].mxu0
    %v1204 = vpop.f32.mrb[0].mxu0
    %v1205 = vadd.f32 %v358, %v1204
    %v1206 = vpop.f32.mrb[0].mxu0
    %1207 = vmatprep.mubr.bf16.mxu0 %v602
    %1208 = vmatmul.mubr.bf16.gmra.mrb[0].mxu0 %v601
    %v1209 = vpop.f32.mrb[0].mxu0
    %v1210 = vadd.f32 %v358, %v1209
    %v1211 = vpop.f32.mrb[0].mxu0
    %v1212 = vpop.f32.mrb[0].mxu0
    %v1213 = vadd.f32 %v358, %v1212
    %v1214 = vpop.f32.mrb[0].mxu0
    %1215 = vmatprep.mubr.bf16.mxu0 %v611
    %1216 = vmatmul.mubr.bf16.gmra.mrb[0].mxu0 %v610
    %v1217 = vpop.f32.mrb[0].mxu0
    %v1218 = vadd.f32 %v358, %v1217
    %v1219 = vpop.f32.mrb[0].mxu0
    %v1220 = vpop.f32.mrb[0].mxu0
    %v1221 = vadd.f32 %v358, %v1220
    %v1222 = vpop.f32.mrb[0].mxu0
    %1223 = vmatprep.mubr.bf16.mxu0 %v620
    %1224 = vmatmul.mubr.bf16.gmra.mrb[0].mxu0 %v619
    %v1225 = vpop.f32.mrb[0].mxu0
    %v1226 = vadd.f32 %v358, %v1225
    %v1227 = vpop.f32.mrb[0].mxu0
    %v1228 = vpop.f32.mrb[0].mxu0
    %v1229 = vadd.f32 %v358, %v1228
    %v1230 = vpop.f32.mrb[0].mxu0
    %1231 = vmatprep.mubr.bf16.mxu0 %v629
    %1232 = vmatmul.mubr.bf16.gmra.mrb[0].mxu0 %v628
    %v1233 = vpop.f32.mrb[0].mxu0
    %v1234 = vadd.f32 %v358, %v1233
    %v1235 = vpop.f32.mrb[0].mxu0
    %v1236 = vpop.f32.mrb[0].mxu0
    %v1237 = vadd.f32 %v358, %v1236
    %v1238 = vpop.f32.mrb[0].mxu0
    %1239 = vmatprep.mubr.bf16.mxu0 %v638
    %1240 = vmatmul.mubr.bf16.gmra.mrb[0].mxu0 %v637
    %v1241 = vpop.f32.mrb[0].mxu0
    %v1242 = vadd.f32 %v358, %v1241
    %v1243 = vpop.f32.mrb[0].mxu0
    %v1244 = vpop.f32.mrb[0].mxu0
    %v1245 = vadd.f32 %v358, %v1244
    %v1246 = vpop.f32.mrb[0].mxu0
    %1247 = vmatprep.mubr.bf16.mxu0 %v647
    %1248 = vmatmul.mubr.bf16.gmra.mrb[0].mxu0 %v646
    %v1249 = vpop.f32.mrb[0].mxu0
    %v1250 = vadd.f32 %v358, %v1249
    %v1251 = vpop.f32.mrb[0].mxu0
    %v1252 = vpop.f32.mrb[0].mxu0
    %v1253 = vadd.f32 %v358, %v1252
    %v1254 = vpop.f32.mrb[0].mxu0
    %1255 = vdwg.mxu0
    %1256 = vmatprep.subr.bf16.mxu0 0
    %1257 = vmatpush1.bf16.msra.mxu0 %v1031
    %1258 = vmatprep.subr.bf16.mxu0 0
    %1259 = vmatpush1.bf16.msra.mxu0 %v1032
    %1260 = vmatprep.subr.bf16.mxu0 0
    %1261 = vmatpush1.bf16.msra.mxu0 %v1033
    %1262 = vmatprep.subr.bf16.mxu0 0
    %1263 = vmatpush1.bf16.msra.mxu0 %v1034
    %1264 = vmatprep.subr.bf16.mxu0 0
    %1265 = vmatpush1.bf16.msra.mxu0 %v1035
    %1266 = vmatprep.subr.bf16.mxu0 0
    %1267 = vmatpush1.bf16.msra.mxu0 %v1036
    %1268 = vmatprep.subr.bf16.mxu0 0
    %1269 = vmatpush1.bf16.msra.mxu0 %v1037
    %1270 = vmatprep.subr.bf16.mxu0 0
    %1271 = vmatpush1.bf16.msra.mxu0 %v1038
    %1272 = vmatprep.subr.bf16.mxu0 0
    %1273 = vmatpush1.bf16.msra.mxu0 %v1039
    %1274 = vmatprep.subr.bf16.mxu0 0
    %1275 = vmatpush1.bf16.msra.mxu0 %v1040
    %1276 = vmatprep.subr.bf16.mxu0 0
    %1277 = vmatpush1.bf16.msra.mxu0 %v1041
    %1278 = vmatprep.subr.bf16.mxu0 0
    %1279 = vmatpush1.bf16.msra.mxu0 %v1042
    %1280 = vmatprep.subr.bf16.mxu0 0
    %1281 = vmatpush1.bf16.msra.mxu0 %v1043
    %1282 = vmatprep.subr.bf16.mxu0 0
    %1283 = vmatpush1.bf16.msra.mxu0 %v1044
    %1284 = vmatprep.subr.bf16.mxu0 0
    %1285 = vmatpush1.bf16.msra.mxu0 %v1045
    %1286 = vmatprep.subr.bf16.mxu0 0
    %1287 = vmatpush1.bf16.msra.mxu0 %v1046
    %1288 = vmatprep.mubr.bf16.mxu0 %v586
    %1289 = vmatmul.mubr.bf16.gmra.mrb[0].mxu0 %v585
    %v1290 = vpop.f32.mrb[0].mxu0
    %v1291 = vadd.f32 %v1194, %v1290
    %v1292 = vpop.f32.mrb[0].mxu0
    %v1293 = vpop.f32.mrb[0].mxu0
    %v1294 = vadd.f32 %v1197, %v1293
    %v1295 = vpop.f32.mrb[0].mxu0
    %1296 = vmatprep.mubr.bf16.mxu0 %v595
    %1297 = vmatmul.mubr.bf16.gmra.mrb[0].mxu0 %v594
    %v1298 = vpop.f32.mrb[0].mxu0
    %v1299 = vadd.f32 %v1202, %v1298
    %v1300 = vpop.f32.mrb[0].mxu0
    %v1301 = vpop.f32.mrb[0].mxu0
    %v1302 = vadd.f32 %v1205, %v1301
    %v1303 = vpop.f32.mrb[0].mxu0
    %1304 = vmatprep.mubr.bf16.mxu0 %v604
    %1305 = vmatmul.mubr.bf16.gmra.mrb[0].mxu0 %v603
    %v1306 = vpop.f32.mrb[0].mxu0
    %v1307 = vadd.f32 %v1210, %v1306
    %v1308 = vpop.f32.mrb[0].mxu0
    %v1309 = vpop.f32.mrb[0].mxu0
    %v1310 = vadd.f32 %v1213, %v1309
    %v1311 = vpop.f32.mrb[0].mxu0
    %1312 = vmatprep.mubr.bf16.mxu0 %v613
    %1313 = vmatmul.mubr.bf16.gmra.mrb[0].mxu0 %v612
    %v1314 = vpop.f32.mrb[0].mxu0
    %v1315 = vadd.f32 %v1218, %v1314
    %v1316 = vpop.f32.mrb[0].mxu0
    %v1317 = vpop.f32.mrb[0].mxu0
    %v1318 = vadd.f32 %v1221, %v1317
    %v1319 = vpop.f32.mrb[0].mxu0
    %1320 = vmatprep.mubr.bf16.mxu0 %v622
    %1321 = vmatmul.mubr.bf16.gmra.mrb[0].mxu0 %v621
    %v1322 = vpop.f32.mrb[0].mxu0
    %v1323 = vadd.f32 %v1226, %v1322
    %v1324 = vpop.f32.mrb[0].mxu0
    %v1325 = vpop.f32.mrb[0].mxu0
    %v1326 = vadd.f32 %v1229, %v1325
    %v1327 = vpop.f32.mrb[0].mxu0
    %1328 = vmatprep.mubr.bf16.mxu0 %v631
    %1329 = vmatmul.mubr.bf16.gmra.mrb[0].mxu0 %v630
    %v1330 = vpop.f32.mrb[0].mxu0
    %v1331 = vadd.f32 %v1234, %v1330
    %v1332 = vpop.f32.mrb[0].mxu0
    %v1333 = vpop.f32.mrb[0].mxu0
    %v1334 = vadd.f32 %v1237, %v1333
    %v1335 = vpop.f32.mrb[0].mxu0
    %1336 = vmatprep.mubr.bf16.mxu0 %v640
    %1337 = vmatmul.mubr.bf16.gmra.mrb[0].mxu0 %v639
    %v1338 = vpop.f32.mrb[0].mxu0
    %v1339 = vadd.f32 %v1242, %v1338
    %v1340 = vpop.f32.mrb[0].mxu0
    %v1341 = vpop.f32.mrb[0].mxu0
    %v1342 = vadd.f32 %v1245, %v1341
    %v1343 = vpop.f32.mrb[0].mxu0
    %1344 = vmatprep.mubr.bf16.mxu0 %v649
    %1345 = vmatmul.mubr.bf16.gmra.mrb[0].mxu0 %v648
    %v1346 = vpop.f32.mrb[0].mxu0
    %v1347 = vadd.f32 %v1250, %v1346
    %v1348 = vpop.f32.mrb[0].mxu0
    %v1349 = vpop.f32.mrb[0].mxu0
    %v1350 = vadd.f32 %v1253, %v1349
    %v1351 = vpop.f32.mrb[0].mxu0
    %1352 = vdwg.mxu0
    %1353 = vmatprep.subr.bf16.mxu0 0
    %1354 = vmatpush1.bf16.msra.mxu0 %v1047
    %1355 = vmatprep.subr.bf16.mxu0 0
    %1356 = vmatpush1.bf16.msra.mxu0 %v1048
    %1357 = vmatprep.subr.bf16.mxu0 0
    %1358 = vmatpush1.bf16.msra.mxu0 %v1049
    %1359 = vmatprep.subr.bf16.mxu0 0
    %1360 = vmatpush1.bf16.msra.mxu0 %v1050
    %1361 = vmatprep.subr.bf16.mxu0 0
    %1362 = vmatpush1.bf16.msra.mxu0 %v1051
    %1363 = vmatprep.subr.bf16.mxu0 0
    %1364 = vmatpush1.bf16.msra.mxu0 %v1052
    %1365 = vmatprep.subr.bf16.mxu0 0
    %1366 = vmatpush1.bf16.msra.mxu0 %v1053
    %1367 = vmatprep.subr.bf16.mxu0 0
    %1368 = vmatpush1.bf16.msra.mxu0 %v1054
    %1369 = vmatprep.subr.bf16.mxu0 0
    %1370 = vmatpush1.bf16.msra.mxu0 %v1055
    %1371 = vmatprep.subr.bf16.mxu0 0
    %1372 = vmatpush1.bf16.msra.mxu0 %v1056
    %1373 = vmatprep.subr.bf16.mxu0 0
    %1374 = vmatpush1.bf16.msra.mxu0 %v1057
    %1375 = vmatprep.subr.bf16.mxu0 0
    %1376 = vmatpush1.bf16.msra.mxu0 %v1058
    %1377 = vmatprep.subr.bf16.mxu0 0
    %1378 = vmatpush1.bf16.msra.mxu0 %v1059
    %1379 = vmatprep.subr.bf16.mxu0 0
    %1380 = vmatpush1.bf16.msra.mxu0 %v1060
    %1381 = vmatprep.subr.bf16.mxu0 0
    %1382 = vmatpush1.bf16.msra.mxu0 %v1061
    %1383 = vmatprep.subr.bf16.mxu0 0
    %1384 = vmatpush1.bf16.msra.mxu0 %v1062
    %1385 = vmatprep.mubr.bf16.mxu0 %v588
    %1386 = vmatmul.mubr.bf16.gmra.mrb[0].mxu0 %v587
    %v1387 = vpop.f32.mrb[0].mxu0
    %v1388 = vadd.f32 %v1291, %v1387
    %v1389 = vpop.f32.mrb[0].mxu0
    %v1390 = vpop.f32.mrb[0].mxu0
    %v1391 = vadd.f32 %v1294, %v1390
    %v1392 = vpop.f32.mrb[0].mxu0
    %1393 = vmatprep.mubr.bf16.mxu0 %v597
    %1394 = vmatmul.mubr.bf16.gmra.mrb[0].mxu0 %v596
    %v1395 = vpop.f32.mrb[0].mxu0
    %v1396 = vadd.f32 %v1299, %v1395
    %v1397 = vpop.f32.mrb[0].mxu0
    %v1398 = vpop.f32.mrb[0].mxu0
    %v1399 = vadd.f32 %v1302, %v1398
    %v1400 = vpop.f32.mrb[0].mxu0
    %1401 = vmatprep.mubr.bf16.mxu0 %v606
    %1402 = vmatmul.mubr.bf16.gmra.mrb[0].mxu0 %v605
    %v1403 = vpop.f32.mrb[0].mxu0
    %v1404 = vadd.f32 %v1307, %v1403
    %v1405 = vpop.f32.mrb[0].mxu0
    %v1406 = vpop.f32.mrb[0].mxu0
    %v1407 = vadd.f32 %v1310, %v1406
    %v1408 = vpop.f32.mrb[0].mxu0
    %1409 = vmatprep.mubr.bf16.mxu0 %v615
    %1410 = vmatmul.mubr.bf16.gmra.mrb[0].mxu0 %v614
    %v1411 = vpop.f32.mrb[0].mxu0
    %v1412 = vadd.f32 %v1315, %v1411
    %v1413 = vpop.f32.mrb[0].mxu0
    %v1414 = vpop.f32.mrb[0].mxu0
    %v1415 = vadd.f32 %v1318, %v1414
    %v1416 = vpop.f32.mrb[0].mxu0
    %1417 = vmatprep.mubr.bf16.mxu0 %v624
    %1418 = vmatmul.mubr.bf16.gmra.mrb[0].mxu0 %v623
    %v1419 = vpop.f32.mrb[0].mxu0
    %v1420 = vadd.f32 %v1323, %v1419
    %v1421 = vpop.f32.mrb[0].mxu0
    %v1422 = vpop.f32.mrb[0].mxu0
    %v1423 = vadd.f32 %v1326, %v1422
    %v1424 = vpop.f32.mrb[0].mxu0
    %1425 = vmatprep.mubr.bf16.mxu0 %v633
    %1426 = vmatmul.mubr.bf16.gmra.mrb[0].mxu0 %v632
    %v1427 = vpop.f32.mrb[0].mxu0
    %v1428 = vadd.f32 %v1331, %v1427
    %v1429 = vpop.f32.mrb[0].mxu0
    %v1430 = vpop.f32.mrb[0].mxu0
    %v1431 = vadd.f32 %v1334, %v1430
    %v1432 = vpop.f32.mrb[0].mxu0
    %1433 = vmatprep.mubr.bf16.mxu0 %v642
    %1434 = vmatmul.mubr.bf16.gmra.mrb[0].mxu0 %v641
    %v1435 = vpop.f32.mrb[0].mxu0
    %v1436 = vadd.f32 %v1339, %v1435
    %v1437 = vpop.f32.mrb[0].mxu0
    %v1438 = vpop.f32.mrb[0].mxu0
    %v1439 = vadd.f32 %v1342, %v1438
    %v1440 = vpop.f32.mrb[0].mxu0
    %1441 = vmatprep.mubr.bf16.mxu0 %v651
    %1442 = vmatmul.mubr.bf16.gmra.mrb[0].mxu0 %v650
    %v1443 = vpop.f32.mrb[0].mxu0
    %v1444 = vadd.f32 %v1347, %v1443
    %v1445 = vpop.f32.mrb[0].mxu0
    %v1446 = vpop.f32.mrb[0].mxu0
    %v1447 = vadd.f32 %v1350, %v1446
    %v1448 = vpop.f32.mrb[0].mxu0
    %1449 = vdwg.mxu0
    %1450 = vmatprep.subr.bf16.mxu0 0
    %1451 = vmatpush1.bf16.msra.mxu0 %v1063
    %1452 = vmatprep.subr.bf16.mxu0 0
    %1453 = vmatpush1.bf16.msra.mxu0 %v1064
    %1454 = vmatprep.subr.bf16.mxu0 0
    %1455 = vmatpush1.bf16.msra.mxu0 %v1065
    %1456 = vmatprep.subr.bf16.mxu0 0
    %1457 = vmatpush1.bf16.msra.mxu0 %v1066
    %1458 = vmatprep.subr.bf16.mxu0 0
    %1459 = vmatpush1.bf16.msra.mxu0 %v1067
    %1460 = vmatprep.subr.bf16.mxu0 0
    %1461 = vmatpush1.bf16.msra.mxu0 %v1068
    %1462 = vmatprep.subr.bf16.mxu0 0
    %1463 = vmatpush1.bf16.msra.mxu0 %v1069
    %1464 = vmatprep.subr.bf16.mxu0 0
    %1465 = vmatpush1.bf16.msra.mxu0 %v1070
    %1466 = vmatprep.subr.bf16.mxu0 0
    %1467 = vmatpush1.bf16.msra.mxu0 %v1071
    %1468 = vmatprep.subr.bf16.mxu0 0
    %1469 = vmatpush1.bf16.msra.mxu0 %v1072
    %1470 = vmatprep.subr.bf16.mxu0 0
    %1471 = vmatpush1.bf16.msra.mxu0 %v1073
    %1472 = vmatprep.subr.bf16.mxu0 0
    %1473 = vmatpush1.bf16.msra.mxu0 %v1074
    %1474 = vmatprep.subr.bf16.mxu0 0
    %1475 = vmatpush1.bf16.msra.mxu0 %v1075
    %1476 = vmatprep.subr.bf16.mxu0 0
    %1477 = vmatpush1.bf16.msra.mxu0 %v1076
    %1478 = vmatprep.subr.bf16.mxu0 0
    %1479 = vmatpush1.bf16.msra.mxu0 %v1077
    %1480 = vmatprep.subr.bf16.mxu0 0
    %1481 = vmatpush1.bf16.msra.mxu0 %v1078
    %1482 = vmatprep.mubr.bf16.mxu0 %v590
    %1483 = vmatmul.mubr.bf16.gmra.mrb[0].mxu0 %v589
    %v1484 = vpop.f32.mrb[0].mxu0
    %v1485 = vadd.f32 %v1388, %v1484
    %v1486 = vpop.f32.mrb[0].mxu0
    %v1487 = vpop.f32.mrb[0].mxu0
    %v1488 = vadd.f32 %v1391, %v1487
    %v1489 = vpop.f32.mrb[0].mxu0
    %1490 = vmatprep.mubr.bf16.mxu0 %v599
    %1491 = vmatmul.mubr.bf16.gmra.mrb[0].mxu0 %v598
    %v1492 = vpop.f32.mrb[0].mxu0
    %v1493 = vadd.f32 %v1396, %v1492
    %v1494 = vpop.f32.mrb[0].mxu0
    %v1495 = vpop.f32.mrb[0].mxu0
    %v1496 = vadd.f32 %v1399, %v1495
    %v1497 = vpop.f32.mrb[0].mxu0
    %1498 = vmatprep.mubr.bf16.mxu0 %v608
    %1499 = vmatmul.mubr.bf16.gmra.mrb[0].mxu0 %v607
    %v1500 = vpop.f32.mrb[0].mxu0
    %v1501 = vadd.f32 %v1404, %v1500
    %v1502 = vpop.f32.mrb[0].mxu0
    %v1503 = vpop.f32.mrb[0].mxu0
    %v1504 = vadd.f32 %v1407, %v1503
    %v1505 = vpop.f32.mrb[0].mxu0
    %1506 = vmatprep.mubr.bf16.mxu0 %v617
    %1507 = vmatmul.mubr.bf16.gmra.mrb[0].mxu0 %v616
    %v1508 = vpop.f32.mrb[0].mxu0
    %v1509 = vadd.f32 %v1412, %v1508
    %v1510 = vpop.f32.mrb[0].mxu0
    %v1511 = vpop.f32.mrb[0].mxu0
    %v1512 = vadd.f32 %v1415, %v1511
    %v1513 = vpop.f32.mrb[0].mxu0
    %1514 = vmatprep.mubr.bf16.mxu0 %v626
    %1515 = vmatmul.mubr.bf16.gmra.mrb[0].mxu0 %v625
    %v1516 = vpop.f32.mrb[0].mxu0
    %v1517 = vadd.f32 %v1420, %v1516
    %v1518 = vpop.f32.mrb[0].mxu0
    %v1519 = vpop.f32.mrb[0].mxu0
    %v1520 = vadd.f32 %v1423, %v1519
    %v1521 = vpop.f32.mrb[0].mxu0
    %1522 = vmatprep.mubr.bf16.mxu0 %v635
    %1523 = vmatmul.mubr.bf16.gmra.mrb[0].mxu0 %v634
    %v1524 = vpop.f32.mrb[0].mxu0
    %v1525 = vadd.f32 %v1428, %v1524
    %v1526 = vpop.f32.mrb[0].mxu0
    %v1527 = vpop.f32.mrb[0].mxu0
    %v1528 = vadd.f32 %v1431, %v1527
    %v1529 = vpop.f32.mrb[0].mxu0
    %1530 = vmatprep.mubr.bf16.mxu0 %v644
    %1531 = vmatmul.mubr.bf16.gmra.mrb[0].mxu0 %v643
    %v1532 = vpop.f32.mrb[0].mxu0
    %v1533 = vadd.f32 %v1436, %v1532
    %v1534 = vpop.f32.mrb[0].mxu0
    %v1535 = vpop.f32.mrb[0].mxu0
    %v1536 = vadd.f32 %v1439, %v1535
    %v1537 = vpop.f32.mrb[0].mxu0
    %1538 = vmatprep.mubr.bf16.mxu0 %v653
    %1539 = vmatmul.mubr.bf16.gmra.mrb[0].mxu0 %v652
    %v1540 = vpop.f32.mrb[0].mxu0
    %v1541 = vadd.f32 %v1444, %v1540
    %v1542 = vpop.f32.mrb[0].mxu0
    %v1543 = vpop.f32.mrb[0].mxu0
    %v1544 = vadd.f32 %v1447, %v1543
    %v1545 = vpop.f32.mrb[0].mxu0
    %1546 = vdwg.mxu0
    %1547 = vmatprep.subr.bf16.mxu0 0
    %1548 = vmatpush1.bf16.msra.mxu0 %v1079
    %1549 = vmatprep.subr.bf16.mxu0 0
    %1550 = vmatpush1.bf16.msra.mxu0 %v1080
    %1551 = vmatprep.subr.bf16.mxu0 0
    %1552 = vmatpush1.bf16.msra.mxu0 %v1081
    %1553 = vmatprep.subr.bf16.mxu0 0
    %1554 = vmatpush1.bf16.msra.mxu0 %v1082
    %1555 = vmatprep.subr.bf16.mxu0 0
    %1556 = vmatpush1.bf16.msra.mxu0 %v1083
    %1557 = vmatprep.subr.bf16.mxu0 0
    %1558 = vmatpush1.bf16.msra.mxu0 %v1084
    %1559 = vmatprep.subr.bf16.mxu0 0
    %1560 = vmatpush1.bf16.msra.mxu0 %v1085
    %1561 = vmatprep.subr.bf16.mxu0 0
    %1562 = vmatpush1.bf16.msra.mxu0 %v1086
    %1563 = vmatprep.subr.bf16.mxu0 0
    %1564 = vmatpush1.bf16.msra.mxu0 0
    %1565 = vmatprep.subr.bf16.mxu0 0
    %1566 = vmatpush1.bf16.msra.mxu0 0
    %1567 = vmatprep.subr.bf16.mxu0 0
    %1568 = vmatpush1.bf16.msra.mxu0 0
    %1569 = vmatprep.subr.bf16.mxu0 0
    %1570 = vmatpush1.bf16.msra.mxu0 0
    %1571 = vmatprep.subr.bf16.mxu0 0
    %1572 = vmatpush1.bf16.msra.mxu0 0
    %1573 = vmatprep.subr.bf16.mxu0 0
    %1574 = vmatpush1.bf16.msra.mxu0 0
    %1575 = vmatprep.subr.bf16.mxu0 0
    %1576 = vmatpush1.bf16.msra.mxu0 0
    %1577 = vmatprep.subr.bf16.mxu0 0
    %1578 = vmatpush1.bf16.msra.mxu0 0
    %1579 = vmatprep.mubr.bf16.mxu0 0
    %1580 = vmatmul.mubr.bf16.gmra.mrb[0].mxu0 %v591
    %v1581 = vpop.f32.mrb[0].mxu0
    %v1582 = vadd.f32 %v1485, %v1581
    %v1583 = vpop.f32.mrb[0].mxu0
    %v1584 = vpop.f32.mrb[0].mxu0
    %v1585 = vadd.f32 %v1488, %v1584
    %v1586 = vpop.f32.mrb[0].mxu0
    %1587 = vmatprep.mubr.bf16.mxu0 0
    %1588 = vmatmul.mubr.bf16.gmra.mrb[0].mxu0 %v600
    %v1589 = vpop.f32.mrb[0].mxu0
    %v1590 = vadd.f32 %v1493, %v1589
    %v1591 = vpop.f32.mrb[0].mxu0
    %v1592 = vpop.f32.mrb[0].mxu0
    %v1593 = vadd.f32 %v1496, %v1592
    %v1594 = vpop.f32.mrb[0].mxu0
    %1595 = vmatprep.mubr.bf16.mxu0 0
    %1596 = vmatmul.mubr.bf16.gmra.mrb[0].mxu0 %v609
    %v1597 = vpop.f32.mrb[0].mxu0
    %v1598 = vadd.f32 %v1501, %v1597
    %v1599 = vpop.f32.mrb[0].mxu0
    %v1600 = vpop.f32.mrb[0].mxu0
    %v1601 = vadd.f32 %v1504, %v1600
    %v1602 = vpop.f32.mrb[0].mxu0
    %1603 = vmatprep.mubr.bf16.mxu0 0
    %1604 = vmatmul.mubr.bf16.gmra.mrb[0].mxu0 %v618
    %v1605 = vpop.f32.mrb[0].mxu0
    %v1606 = vadd.f32 %v1509, %v1605
    %v1607 = vpop.f32.mrb[0].mxu0
    %v1608 = vpop.f32.mrb[0].mxu0
    %v1609 = vadd.f32 %v1512, %v1608
    %v1610 = vpop.f32.mrb[0].mxu0
    %1611 = vmatprep.mubr.bf16.mxu0 0
    %1612 = vmatmul.mubr.bf16.gmra.mrb[0].mxu0 %v627
    %v1613 = vpop.f32.mrb[0].mxu0
    %v1614 = vadd.f32 %v1517, %v1613
    %v1615 = vpop.f32.mrb[0].mxu0
    %v1616 = vpop.f32.mrb[0].mxu0
    %v1617 = vadd.f32 %v1520, %v1616
    %v1618 = vpop.f32.mrb[0].mxu0
    %1619 = vmatprep.mubr.bf16.mxu0 0
    %1620 = vmatmul.mubr.bf16.gmra.mrb[0].mxu0 %v636
    %v1621 = vpop.f32.mrb[0].mxu0
    %v1622 = vadd.f32 %v1525, %v1621
    %v1623 = vpop.f32.mrb[0].mxu0
    %v1624 = vpop.f32.mrb[0].mxu0
    %v1625 = vadd.f32 %v1528, %v1624
    %v1626 = vpop.f32.mrb[0].mxu0
    %1627 = vmatprep.mubr.bf16.mxu0 0
    %1628 = vmatmul.mubr.bf16.gmra.mrb[0].mxu0 %v645
    %v1629 = vpop.f32.mrb[0].mxu0
    %v1630 = vadd.f32 %v1533, %v1629
    %v1631 = vpop.f32.mrb[0].mxu0
    %v1632 = vpop.f32.mrb[0].mxu0
    %v1633 = vadd.f32 %v1536, %v1632
    %v1634 = vpop.f32.mrb[0].mxu0
    %1635 = vmatprep.mubr.bf16.mxu0 0
    %1636 = vmatmul.mubr.bf16.gmra.mrb[0].mxu0 %v654
    %v1637 = vpop.f32.mrb[0].mxu0
    %v1638 = vadd.f32 %v1541, %v1637
    %v1639 = vpop.f32.mrb[0].mxu0
    %v1640 = vpop.f32.mrb[0].mxu0
    %v1641 = vadd.f32 %v1544, %v1640
    %v1642 = vpop.f32.mrb[0].mxu0
    %1643 = vdwg.mxu0
    %v1644 = vmax.f32 %v1582, 0.0
    %v1645 = vmax.f32 %v1585, 0.0
    %v1646 = vmax.f32 %v1590, 0.0
    %v1647 = vmax.f32 %v1593, 0.0
    %v1648 = vmax.f32 %v1598, 0.0
    %v1649 = vmax.f32 %v1601, 0.0
    %v1650 = vmax.f32 %v1606, 0.0
    %v1651 = vmax.f32 %v1609, 0.0
    %v1652 = vmax.f32 %v1614, 0.0
    %v1653 = vmax.f32 %v1617, 0.0
    %v1654 = vmax.f32 %v1622, 0.0
    %v1655 = vmax.f32 %v1625, 0.0
    %v1656 = vmax.f32 %v1630, 0.0
    %v1657 = vmax.f32 %v1633, 0.0
    %v1658 = vmax.f32 %v1638, 0.0
    %v1659 = vmax.f32 %v1641, 0.0
    %v1660 = vld [vmem:[#allocation5] sm:$0xff]
    %v1661 = vld [vmem:[#allocation5 + $0x8] sm:$0xff]
    %v1662 = vld [vmem:[#allocation5 + $0x10] sm:$0xff]
    %v1663 = vld [vmem:[#allocation5 + $0x18] sm:$0xff]
    %v1664 = vld [vmem:[#allocation5 + $0x20] sm:$0xf]
    %v1665 = vld [vmem:[#allocation5 + $0x24] sm:$0xff]
    %v1666 = vld [vmem:[#allocation5 + $0x2c] sm:$0xff]
    %v1667 = vld [vmem:[#allocation5 + $0x34] sm:$0xff]
    %v1668 = vld [vmem:[#allocation5 + $0x3c] sm:$0xff]
    %v1669 = vld [vmem:[#allocation5 + $0x44] sm:$0xf]
    %v1670 = vld [vmem:[#allocation5 + $0x48] sm:$0xff]
    %v1671 = vld [vmem:[#allocation5 + $0x50] sm:$0xff]
    %v1672 = vld [vmem:[#allocation5 + $0x58] sm:$0xff]
    %v1673 = vld [vmem:[#allocation5 + $0x60] sm:$0xff]
    %v1674 = vld [vmem:[#allocation5 + $0x68] sm:$0xf]
    %v1675 = vld [vmem:[#allocation5 + $0x6c] sm:$0xff]
    %v1676 = vld [vmem:[#allocation5 + $0x74] sm:$0xff]
    %v1677 = vld [vmem:[#allocation5 + $0x7c] sm:$0xff]
    %v1678 = vld [vmem:[#allocation5 + $0x84] sm:$0xff]
    %v1679 = vld [vmem:[#allocation5 + $0x8c] sm:$0xf]
    %v1680 = vld [vmem:[#allocation5 + $0x90] sm:$0xff]
    %v1681 = vld [vmem:[#allocation5 + $0x98] sm:$0xff]
    %v1682 = vld [vmem:[#allocation5 + $0xa0] sm:$0xff]
    %v1683 = vld [vmem:[#allocation5 + $0xa8] sm:$0xff]
    %v1684 = vld [vmem:[#allocation5 + $0xb0] sm:$0xf]
    %v1685 = vld [vmem:[#allocation5 + $0xb4] sm:$0xff]
    %v1686 = vld [vmem:[#allocation5 + $0xbc] sm:$0xff]
    %v1687 = vld [vmem:[#allocation5 + $0xc4] sm:$0xff]
    %v1688 = vld [vmem:[#allocation5 + $0xcc] sm:$0xff]
    %v1689 = vld [vmem:[#allocation5 + $0xd4] sm:$0xf]
    %v1690 = vld [vmem:[#allocation5 + $0xd8] sm:$0xff]
    %v1691 = vld [vmem:[#allocation5 + $0xe0] sm:$0xff]
    %v1692 = vld [vmem:[#allocation5 + $0xe8] sm:$0xff]
    %v1693 = vld [vmem:[#allocation5 + $0xf0] sm:$0xff]
    %v1694 = vld [vmem:[#allocation5 + $0xf8] sm:$0xf]
    %v1695 = vld [vmem:[#allocation5 + $0xfc] sm:$0xff]
    %v1696 = vld [vmem:[#allocation5 + $0x104] sm:$0xff]
    %v1697 = vld [vmem:[#allocation5 + $0x10c] sm:$0xff]
    %v1698 = vld [vmem:[#allocation5 + $0x114] sm:$0xff]
    %v1699 = vld [vmem:[#allocation5 + $0x11c] sm:$0xf]
    %v1700 = vld [vmem:[#allocation5 + $0x120] sm:$0xff]
    %v1701 = vld [vmem:[#allocation5 + $0x128] sm:$0xff]
    %v1702 = vld [vmem:[#allocation5 + $0x130] sm:$0xff]
    %v1703 = vld [vmem:[#allocation5 + $0x138] sm:$0xff]
    %v1704 = vld [vmem:[#allocation5 + $0x140] sm:$0xf]
    %v1705 = vld [vmem:[#allocation5 + $0x144] sm:$0xff]
    %v1706 = vld [vmem:[#allocation5 + $0x14c] sm:$0xff]
    %v1707 = vld [vmem:[#allocation5 + $0x154] sm:$0xff]
    %v1708 = vld [vmem:[#allocation5 + $0x15c] sm:$0xff]
    %v1709 = vld [vmem:[#allocation5 + $0x164] sm:$0xf]
    %v1710 = vld [vmem:[#allocation5 + $0x168] sm:$0xff]
    %v1711 = vld [vmem:[#allocation5 + $0x170] sm:$0xff]
    %v1712 = vld [vmem:[#allocation5 + $0x178] sm:$0xff]
    %v1713 = vld [vmem:[#allocation5 + $0x180] sm:$0xff]
    %v1714 = vld [vmem:[#allocation5 + $0x188] sm:$0xf]
    %v1715 = vld [vmem:[#allocation5 + $0x18c] sm:$0xff]
    %v1716 = vld [vmem:[#allocation5 + $0x194] sm:$0xff]
    %v1717 = vld [vmem:[#allocation5 + $0x19c] sm:$0xff]
    %v1718 = vld [vmem:[#allocation5 + $0x1a4] sm:$0xff]
    %v1719 = vld [vmem:[#allocation5 + $0x1ac] sm:$0xf]
    %v1720 = vld [vmem:[#allocation5 + $0x1b0] sm:$0xff]
    %v1721 = vld [vmem:[#allocation5 + $0x1b8] sm:$0xff]
    %v1722 = vld [vmem:[#allocation5 + $0x1c0] sm:$0xff]
    %v1723 = vld [vmem:[#allocation5 + $0x1c8] sm:$0xff]
    %v1724 = vld [vmem:[#allocation5 + $0x1d0] sm:$0xf]
    %v1725 = vld [vmem:[#allocation5 + $0x1d4] sm:$0xff]
    %v1726 = vld [vmem:[#allocation5 + $0x1dc] sm:$0xff]
    %v1727 = vld [vmem:[#allocation5 + $0x1e4] sm:$0xff]
    %v1728 = vld [vmem:[#allocation5 + $0x1ec] sm:$0xff]
    %v1729 = vld [vmem:[#allocation5 + $0x1f4] sm:$0xf]
    %v1730 = vld [vmem:[#allocation5 + $0x1f8] sm:$0xff]
    %v1731 = vld [vmem:[#allocation5 + $0x200] sm:$0xff]
    %v1732 = vld [vmem:[#allocation5 + $0x208] sm:$0xff]
    %v1733 = vld [vmem:[#allocation5 + $0x210] sm:$0xff]
    %v1734 = vld [vmem:[#allocation5 + $0x218] sm:$0xf]
    %v1735 = vld [vmem:[#allocation5 + $0x21c] sm:$0xff]
    %v1736 = vld [vmem:[#allocation5 + $0x224] sm:$0xff]
    %v1737 = vld [vmem:[#allocation5 + $0x22c] sm:$0xff]
    %v1738 = vld [vmem:[#allocation5 + $0x234] sm:$0xff]
    %v1739 = vld [vmem:[#allocation5 + $0x23c] sm:$0xf]
    %v1740 = vld [vmem:[#allocation8] sm:$0xf]
    %v1741 = vld [vmem:[#allocation8 + $0x4] sm:$0xf]
    %v1742 = vld [vmem:[#allocation8 + $0x8] sm:$0xf]
    %v1743 = vld [vmem:[#allocation8 + $0xc] sm:$0xf]
    %v1744 = vld [vmem:[#allocation8 + $0x10] sm:$0xf]
    %v1745 = vld [vmem:[#allocation8 + $0x14] sm:$0xf]
    %v1746 = vld [vmem:[#allocation8 + $0x18] sm:$0xf]
    %v1747 = vld [vmem:[#allocation8 + $0x1c] sm:$0xf]
    %v1748 = vld [vmem:[#allocation8 + $0x20] sm:$0xf]
    %v1749 = vld [vmem:[#allocation8 + $0x24] sm:$0xf]
    %v1750 = vld [vmem:[#allocation8 + $0x28] sm:$0xf]
    %v1751 = vld [vmem:[#allocation8 + $0x2c] sm:$0xf]
    %v1752 = vld [vmem:[#allocation8 + $0x30] sm:$0xf]
    %v1753 = vld [vmem:[#allocation8 + $0x34] sm:$0xf]
    %v1754 = vld [vmem:[#allocation8 + $0x38] sm:$0xf]
    %v1755 = vld [vmem:[#allocation8 + $0x3c] sm:$0xf]
    %v1756 = vld [vmem:[#allocation8 + $0x40] sm:$0xf]
    %v1757 = vld [vmem:[#allocation8 + $0x44] sm:$0xf]
    %v1758 = vld [vmem:[#allocation8 + $0x48] sm:$0xf]
    %v1759 = vld [vmem:[#allocation8 + $0x4c] sm:$0xf]
    %v1760 = vld [vmem:[#allocation8 + $0x50] sm:$0xf]
    %v1761 = vld [vmem:[#allocation8 + $0x54] sm:$0xf]
    %v1762 = vld [vmem:[#allocation8 + $0x58] sm:$0xf]
    %v1763 = vld [vmem:[#allocation8 + $0x5c] sm:$0xf]
    %v1764 = vld [vmem:[#allocation8 + $0x60] sm:$0xf]
    %v1765 = vld [vmem:[#allocation8 + $0x64] sm:$0xf]
    %v1766 = vld [vmem:[#allocation8 + $0x68] sm:$0xf]
    %v1767 = vld [vmem:[#allocation8 + $0x6c] sm:$0xf]
    %v1768 = vld [vmem:[#allocation8 + $0x70] sm:$0xf]
    %v1769 = vld [vmem:[#allocation8 + $0x74] sm:$0xf]
    %v1770 = vld [vmem:[#allocation8 + $0x78] sm:$0xf]
    %v1771 = vld [vmem:[#allocation8 + $0x7c] sm:$0xf]
    %v1772 = vld [vmem:[#allocation8 + $0x80] sm:$0xf]
    %v1773 = vld [vmem:[#allocation8 + $0x84] sm:$0xf]
    %v1774 = vld [vmem:[#allocation8 + $0x88] sm:$0xf]
    %v1775 = vld [vmem:[#allocation8 + $0x8c] sm:$0xf]
    %v1776 = vld [vmem:[#allocation8 + $0x90] sm:$0xf]
    %v1777 = vld [vmem:[#allocation8 + $0x94] sm:$0xf]
    %v1778 = vld [vmem:[#allocation8 + $0x98] sm:$0xf]
    %v1779 = vld [vmem:[#allocation8 + $0x9c] sm:$0xf]
    %v1780 = vld [vmem:[#allocation8 + $0xa0] sm:$0xf]
    %v1781 = vld [vmem:[#allocation8 + $0xa4] sm:$0xf]
    %v1782 = vld [vmem:[#allocation8 + $0xa8] sm:$0xf]
    %v1783 = vld [vmem:[#allocation8 + $0xac] sm:$0xf]
    %v1784 = vld [vmem:[#allocation8 + $0xb0] sm:$0xf]
    %v1785 = vld [vmem:[#allocation8 + $0xb4] sm:$0xf]
    %v1786 = vld [vmem:[#allocation8 + $0xb8] sm:$0xf]
    %v1787 = vld [vmem:[#allocation8 + $0xbc] sm:$0xf]
    %v1788 = vld [vmem:[#allocation8 + $0xc0] sm:$0xf]
    %v1789 = vld [vmem:[#allocation8 + $0xc4] sm:$0xf]
    %v1790 = vld [vmem:[#allocation8 + $0xc8] sm:$0xf]
    %v1791 = vld [vmem:[#allocation8 + $0xcc] sm:$0xf]
    %v1792 = vld [vmem:[#allocation8 + $0xd0] sm:$0xf]
    %v1793 = vld [vmem:[#allocation8 + $0xd4] sm:$0xf]
    %v1794 = vld [vmem:[#allocation8 + $0xd8] sm:$0xf]
    %v1795 = vld [vmem:[#allocation8 + $0xdc] sm:$0xf]
    %v1796 = vld [vmem:[#allocation8 + $0xe0] sm:$0xf]
    %v1797 = vld [vmem:[#allocation8 + $0xe4] sm:$0xf]
    %v1798 = vld [vmem:[#allocation8 + $0xe8] sm:$0xf]
    %v1799 = vld [vmem:[#allocation8 + $0xec] sm:$0xf]
    %v1800 = vld [vmem:[#allocation8 + $0xf0] sm:$0xf]
    %v1801 = vld [vmem:[#allocation8 + $0xf4] sm:$0xf]
    %v1802 = vld [vmem:[#allocation8 + $0xf8] sm:$0xf]
    %v1803 = vld [vmem:[#allocation8 + $0xfc] sm:$0xf]
    %v1804 = vld [vmem:[#allocation8 + $0x100] sm:$0xf]
    %v1805 = vld [vmem:[#allocation8 + $0x104] sm:$0xf]
    %v1806 = vld [vmem:[#allocation8 + $0x108] sm:$0xf]
    %v1807 = vld [vmem:[#allocation8 + $0x10c] sm:$0xf]
    %v1808 = vld [vmem:[#allocation8 + $0x110] sm:$0xf]
    %v1809 = vld [vmem:[#allocation8 + $0x114] sm:$0xf]
    %v1810 = vld [vmem:[#allocation8 + $0x118] sm:$0xf]
    %v1811 = vld [vmem:[#allocation8 + $0x11c] sm:$0xf]
    %v1812 = vld [vmem:[#allocation8 + $0x120] sm:$0xf]
    %v1813 = vld [vmem:[#allocation8 + $0x124] sm:$0xf]
    %v1814 = vld [vmem:[#allocation8 + $0x128] sm:$0xf]
    %v1815 = vld [vmem:[#allocation8 + $0x12c] sm:$0xf]
    %v1816 = vld [vmem:[#allocation8 + $0x130] sm:$0xf]
    %v1817 = vld [vmem:[#allocation8 + $0x134] sm:$0xf]
    %v1818 = vld [vmem:[#allocation8 + $0x138] sm:$0xf]
    %v1819 = vld [vmem:[#allocation8 + $0x13c] sm:$0xf]
    %v1820 = vld [vmem:[#allocation8 + $0x140] sm:$0xf]
    %v1821 = vld [vmem:[#allocation8 + $0x144] sm:$0xf]
    %v1822 = vld [vmem:[#allocation8 + $0x148] sm:$0xf]
    %v1823 = vld [vmem:[#allocation8 + $0x14c] sm:$0xf]
    %v1824 = vld [vmem:[#allocation8 + $0x150] sm:$0xf]
    %v1825 = vld [vmem:[#allocation8 + $0x154] sm:$0xf]
    %v1826 = vld [vmem:[#allocation8 + $0x158] sm:$0xf]
    %v1827 = vld [vmem:[#allocation8 + $0x15c] sm:$0xf]
    %v1828 = vld [vmem:[#allocation8 + $0x160] sm:$0xf]
    %v1829 = vld [vmem:[#allocation8 + $0x164] sm:$0xf]
    %v1830 = vld [vmem:[#allocation8 + $0x168] sm:$0xf]
    %v1831 = vld [vmem:[#allocation8 + $0x16c] sm:$0xf]
    %v1832 = vld [vmem:[#allocation8 + $0x170] sm:$0xf]
    %v1833 = vld [vmem:[#allocation8 + $0x174] sm:$0xf]
    %v1834 = vld [vmem:[#allocation8 + $0x178] sm:$0xf]
    %v1835 = vld [vmem:[#allocation8 + $0x17c] sm:$0xf]
    %v1836 = vld [vmem:[#allocation8 + $0x180] sm:$0xf]
    %v1837 = vld [vmem:[#allocation8 + $0x184] sm:$0xf]
    %v1838 = vld [vmem:[#allocation8 + $0x188] sm:$0xf]
    %v1839 = vld [vmem:[#allocation8 + $0x18c] sm:$0xf]
    %v1840 = vld [vmem:[#allocation8 + $0x190] sm:$0xf]
    %v1841 = vld [vmem:[#allocation8 + $0x194] sm:$0xf]
    %v1842 = vld [vmem:[#allocation8 + $0x198] sm:$0xf]
    %v1843 = vld [vmem:[#allocation8 + $0x19c] sm:$0xf]
    %v1844 = vld [vmem:[#allocation8 + $0x1a0] sm:$0xf]
    %v1845 = vld [vmem:[#allocation8 + $0x1a4] sm:$0xf]
    %v1846 = vld [vmem:[#allocation8 + $0x1a8] sm:$0xf]
    %v1847 = vld [vmem:[#allocation8 + $0x1ac] sm:$0xf]
    %v1848 = vld [vmem:[#allocation8 + $0x1b0] sm:$0xf]
    %v1849 = vld [vmem:[#allocation8 + $0x1b4] sm:$0xf]
    %v1850 = vld [vmem:[#allocation8 + $0x1b8] sm:$0xf]
    %v1851 = vld [vmem:[#allocation8 + $0x1bc] sm:$0xf]
    %v1852 = vld [vmem:[#allocation8 + $0x1c0] sm:$0xf]
    %v1853 = vld [vmem:[#allocation8 + $0x1c4] sm:$0xf]
    %v1854 = vld [vmem:[#allocation8 + $0x1c8] sm:$0xf]
    %v1855 = vld [vmem:[#allocation8 + $0x1cc] sm:$0xf]
    %v1856 = vld [vmem:[#allocation8 + $0x1d0] sm:$0xf]
    %v1857 = vld [vmem:[#allocation8 + $0x1d4] sm:$0xf]
    %v1858 = vld [vmem:[#allocation8 + $0x1d8] sm:$0xf]
    %v1859 = vld [vmem:[#allocation8 + $0x1dc] sm:$0xf]
    %v1860 = vld [vmem:[#allocation8 + $0x1e0] sm:$0xf]
    %v1861 = vld [vmem:[#allocation8 + $0x1e4] sm:$0xf]
    %v1862 = vld [vmem:[#allocation8 + $0x1e8] sm:$0xf]
    %v1863 = vld [vmem:[#allocation8 + $0x1ec] sm:$0xf]
    %v1864 = vld [vmem:[#allocation8 + $0x1f0] sm:$0xf]
    %v1865 = vld [vmem:[#allocation8 + $0x1f4] sm:$0xf]
    %v1866 = vld [vmem:[#allocation8 + $0x1f8] sm:$0xf]
    %v1867 = vld [vmem:[#allocation8 + $0x1fc] sm:$0xf]
    %v1868 = vld [vmem:[#allocation8 + $0x200] sm:$0xf]
    %v1869 = vld [vmem:[#allocation8 + $0x204] sm:$0xf]
    %v1870 = vld [vmem:[#allocation8 + $0x208] sm:$0xf]
    %v1871 = vld [vmem:[#allocation8 + $0x20c] sm:$0xf]
    %v1872 = vld [vmem:[#allocation8 + $0x210] sm:$0xf]
    %v1873 = vld [vmem:[#allocation8 + $0x214] sm:$0xf]
    %v1874 = vld [vmem:[#allocation8 + $0x218] sm:$0xf]
    %v1875 = vld [vmem:[#allocation8 + $0x21c] sm:$0xf]
    %v1876 = vld [vmem:[#allocation8 + $0x220] sm:$0xf]
    %v1877 = vld [vmem:[#allocation8 + $0x224] sm:$0xf]
    %v1878 = vld [vmem:[#allocation8 + $0x228] sm:$0xf]
    %v1879 = vld [vmem:[#allocation8 + $0x22c] sm:$0xf]
    %v1880 = vld [vmem:[#allocation8 + $0x230] sm:$0xf]
    %v1881 = vld [vmem:[#allocation8 + $0x234] sm:$0xf]
    %v1882 = vld [vmem:[#allocation8 + $0x238] sm:$0xf]
    %v1883 = vld [vmem:[#allocation8 + $0x23c] sm:$0xf]
    %v1884 = vlaneseq
    %v1885 = vshrl.u32 %v1884, 7
    %v1886 = vsub.s32 0, %v1885
    %v1887 = vrot.slane %v127, %v1886
    %v1968 = vunpack.c.l.b16 %v1660
    %v1969 = vunpack.c.h.b16 %v1660
    %v1970 = vunpack.c.l.b16 %v1661
    %v1971 = vunpack.c.h.b16 %v1661
    %v1972 = vunpack.c.l.b16 %v1662
    %v1973 = vunpack.c.h.b16 %v1662
    %v1974 = vunpack.c.l.b16 %v1663
    %v1975 = vunpack.c.h.b16 %v1663
    %v1976 = vunpack.c.l.b16 %v1664
    %v1977 = vunpack.c.l.b16 %v1665
    %v1978 = vunpack.c.h.b16 %v1665
    %v1979 = vunpack.c.l.b16 %v1666
    %v1980 = vunpack.c.h.b16 %v1666
    %v1981 = vunpack.c.l.b16 %v1667
    %v1982 = vunpack.c.h.b16 %v1667
    %v1983 = vunpack.c.l.b16 %v1668
    %v1984 = vunpack.c.h.b16 %v1668
    %v1985 = vunpack.c.l.b16 %v1669
    %v1986 = vunpack.c.l.b16 %v1670
    %v1987 = vunpack.c.h.b16 %v1670
    %v1988 = vunpack.c.l.b16 %v1671
    %v1989 = vunpack.c.h.b16 %v1671
    %v1990 = vunpack.c.l.b16 %v1672
    %v1991 = vunpack.c.h.b16 %v1672
    %v1992 = vunpack.c.l.b16 %v1673
    %v1993 = vunpack.c.h.b16 %v1673
    %v1994 = vunpack.c.l.b16 %v1674
    %v1995 = vunpack.c.l.b16 %v1675
    %v1996 = vunpack.c.h.b16 %v1675
    %v1997 = vunpack.c.l.b16 %v1676
    %v1998 = vunpack.c.h.b16 %v1676
    %v1999 = vunpack.c.l.b16 %v1677
    %v2000 = vunpack.c.h.b16 %v1677
    %v2001 = vunpack.c.l.b16 %v1678
    %v2002 = vunpack.c.h.b16 %v1678
    %v2003 = vunpack.c.l.b16 %v1679
    %v2004 = vunpack.c.l.b16 %v1680
    %v2005 = vunpack.c.h.b16 %v1680
    %v2006 = vunpack.c.l.b16 %v1681
    %v2007 = vunpack.c.h.b16 %v1681
    %v2008 = vunpack.c.l.b16 %v1682
    %v2009 = vunpack.c.h.b16 %v1682
    %v2010 = vunpack.c.l.b16 %v1683
    %v2011 = vunpack.c.h.b16 %v1683
    %v2012 = vunpack.c.l.b16 %v1684
    %v2013 = vunpack.c.l.b16 %v1685
    %v2014 = vunpack.c.h.b16 %v1685
    %v2015 = vunpack.c.l.b16 %v1686
    %v2016 = vunpack.c.h.b16 %v1686
    %v2017 = vunpack.c.l.b16 %v1687
    %v2018 = vunpack.c.h.b16 %v1687
    %v2019 = vunpack.c.l.b16 %v1688
    %v2020 = vunpack.c.h.b16 %v1688
    %v2021 = vunpack.c.l.b16 %v1689
    %v2022 = vunpack.c.l.b16 %v1690
    %v2023 = vunpack.c.h.b16 %v1690
    %v2024 = vunpack.c.l.b16 %v1691
    %v2025 = vunpack.c.h.b16 %v1691
    %v2026 = vunpack.c.l.b16 %v1692
    %v2027 = vunpack.c.h.b16 %v1692
    %v2028 = vunpack.c.l.b16 %v1693
    %v2029 = vunpack.c.h.b16 %v1693
    %v2030 = vunpack.c.l.b16 %v1694
    %v2031 = vunpack.c.l.b16 %v1695
    %v2032 = vunpack.c.h.b16 %v1695
    %v2033 = vunpack.c.l.b16 %v1696
    %v2034 = vunpack.c.h.b16 %v1696
    %v2035 = vunpack.c.l.b16 %v1697
    %v2036 = vunpack.c.h.b16 %v1697
    %v2037 = vunpack.c.l.b16 %v1698
    %v2038 = vunpack.c.h.b16 %v1698
    %v2039 = vunpack.c.l.b16 %v1699
    %v2040 = vunpack.c.l.b16 %v1700
    %v2041 = vunpack.c.h.b16 %v1700
    %v2042 = vunpack.c.l.b16 %v1701
    %v2043 = vunpack.c.h.b16 %v1701
    %v2044 = vunpack.c.l.b16 %v1702
    %v2045 = vunpack.c.h.b16 %v1702
    %v2046 = vunpack.c.l.b16 %v1703
    %v2047 = vunpack.c.h.b16 %v1703
    %v2048 = vunpack.c.l.b16 %v1704
    %v2049 = vunpack.c.l.b16 %v1705
    %v2050 = vunpack.c.h.b16 %v1705
    %v2051 = vunpack.c.l.b16 %v1706
    %v2052 = vunpack.c.h.b16 %v1706
    %v2053 = vunpack.c.l.b16 %v1707
    %v2054 = vunpack.c.h.b16 %v1707
    %v2055 = vunpack.c.l.b16 %v1708
    %v2056 = vunpack.c.h.b16 %v1708
    %v2057 = vunpack.c.l.b16 %v1709
    %v2058 = vunpack.c.l.b16 %v1710
    %v2059 = vunpack.c.h.b16 %v1710
    %v2060 = vunpack.c.l.b16 %v1711
    %v2061 = vunpack.c.h.b16 %v1711
    %v2062 = vunpack.c.l.b16 %v1712
    %v2063 = vunpack.c.h.b16 %v1712
    %v2064 = vunpack.c.l.b16 %v1713
    %v2065 = vunpack.c.h.b16 %v1713
    %v2066 = vunpack.c.l.b16 %v1714
    %v2067 = vunpack.c.l.b16 %v1715
    %v2068 = vunpack.c.h.b16 %v1715
    %v2069 = vunpack.c.l.b16 %v1716
    %v2070 = vunpack.c.h.b16 %v1716
    %v2071 = vunpack.c.l.b16 %v1717
    %v2072 = vunpack.c.h.b16 %v1717
    %v2073 = vunpack.c.l.b16 %v1718
    %v2074 = vunpack.c.h.b16 %v1718
    %v2075 = vunpack.c.l.b16 %v1719
    %v2076 = vunpack.c.l.b16 %v1720
    %v2077 = vunpack.c.h.b16 %v1720
    %v2078 = vunpack.c.l.b16 %v1721
    %v2079 = vunpack.c.h.b16 %v1721
    %v2080 = vunpack.c.l.b16 %v1722
    %v2081 = vunpack.c.h.b16 %v1722
    %v2082 = vunpack.c.l.b16 %v1723
    %v2083 = vunpack.c.h.b16 %v1723
    %v2084 = vunpack.c.l.b16 %v1724
    %v2085 = vunpack.c.l.b16 %v1725
    %v2086 = vunpack.c.h.b16 %v1725
    %v2087 = vunpack.c.l.b16 %v1726
    %v2088 = vunpack.c.h.b16 %v1726
    %v2089 = vunpack.c.l.b16 %v1727
    %v2090 = vunpack.c.h.b16 %v1727
    %v2091 = vunpack.c.l.b16 %v1728
    %v2092 = vunpack.c.h.b16 %v1728
    %v2093 = vunpack.c.l.b16 %v1729
    %v2094 = vunpack.c.l.b16 %v1730
    %v2095 = vunpack.c.h.b16 %v1730
    %v2096 = vunpack.c.l.b16 %v1731
    %v2097 = vunpack.c.h.b16 %v1731
    %v2098 = vunpack.c.l.b16 %v1732
    %v2099 = vunpack.c.h.b16 %v1732
    %v2100 = vunpack.c.l.b16 %v1733
    %v2101 = vunpack.c.h.b16 %v1733
    %v2102 = vunpack.c.l.b16 %v1734
    %v2103 = vunpack.c.l.b16 %v1735
    %v2104 = vunpack.c.h.b16 %v1735
    %v2105 = vunpack.c.l.b16 %v1736
    %v2106 = vunpack.c.h.b16 %v1736
    %v2107 = vunpack.c.l.b16 %v1737
    %v2108 = vunpack.c.h.b16 %v1737
    %v2109 = vunpack.c.l.b16 %v1738
    %v2110 = vunpack.c.h.b16 %v1738
    %v2111 = vunpack.c.l.b16 %v1739
    %v2112 = vpack.c.b16 %v1977, %v1968
    %v2113 = vpack.c.b16 %v1978, %v1969
    %v2114 = vpack.c.b16 %v1979, %v1970
    %v2115 = vpack.c.b16 %v1980, %v1971
    %v2116 = vpack.c.b16 %v1981, %v1972
    %v2117 = vpack.c.b16 %v1982, %v1973
    %v2118 = vpack.c.b16 %v1983, %v1974
    %v2119 = vpack.c.b16 %v1984, %v1975
    %v2120 = vpack.c.b16 %v1985, %v1976
    %v2121 = vpack.c.b16 %v1995, %v1986
    %v2122 = vpack.c.b16 %v1996, %v1987
    %v2123 = vpack.c.b16 %v1997, %v1988
    %v2124 = vpack.c.b16 %v1998, %v1989
    %v2125 = vpack.c.b16 %v1999, %v1990
    %v2126 = vpack.c.b16 %v2000, %v1991
    %v2127 = vpack.c.b16 %v2001, %v1992
    %v2128 = vpack.c.b16 %v2002, %v1993
    %v2129 = vpack.c.b16 %v2003, %v1994
    %v2130 = vpack.c.b16 %v2013, %v2004
    %v2131 = vpack.c.b16 %v2014, %v2005
    %v2132 = vpack.c.b16 %v2015, %v2006
    %v2133 = vpack.c.b16 %v2016, %v2007
    %v2134 = vpack.c.b16 %v2017, %v2008
    %v2135 = vpack.c.b16 %v2018, %v2009
    %v2136 = vpack.c.b16 %v2019, %v2010
    %v2137 = vpack.c.b16 %v2020, %v2011
    %v2138 = vpack.c.b16 %v2021, %v2012
    %v2139 = vpack.c.b16 %v2031, %v2022
    %v2140 = vpack.c.b16 %v2032, %v2023
    %v2141 = vpack.c.b16 %v2033, %v2024
    %v2142 = vpack.c.b16 %v2034, %v2025
    %v2143 = vpack.c.b16 %v2035, %v2026
    %v2144 = vpack.c.b16 %v2036, %v2027
    %v2145 = vpack.c.b16 %v2037, %v2028
    %v2146 = vpack.c.b16 %v2038, %v2029
    %v2147 = vpack.c.b16 %v2039, %v2030
    %v2148 = vpack.c.b16 %v2049, %v2040
    %v2149 = vpack.c.b16 %v2050, %v2041
    %v2150 = vpack.c.b16 %v2051, %v2042
    %v2151 = vpack.c.b16 %v2052, %v2043
    %v2152 = vpack.c.b16 %v2053, %v2044
    %v2153 = vpack.c.b16 %v2054, %v2045
    %v2154 = vpack.c.b16 %v2055, %v2046
    %v2155 = vpack.c.b16 %v2056, %v2047
    %v2156 = vpack.c.b16 %v2057, %v2048
    %v2157 = vpack.c.b16 %v2067, %v2058
    %v2158 = vpack.c.b16 %v2068, %v2059
    %v2159 = vpack.c.b16 %v2069, %v2060
    %v2160 = vpack.c.b16 %v2070, %v2061
    %v2161 = vpack.c.b16 %v2071, %v2062
    %v2162 = vpack.c.b16 %v2072, %v2063
    %v2163 = vpack.c.b16 %v2073, %v2064
    %v2164 = vpack.c.b16 %v2074, %v2065
    %v2165 = vpack.c.b16 %v2075, %v2066
    %v2166 = vpack.c.b16 %v2085, %v2076
    %v2167 = vpack.c.b16 %v2086, %v2077
    %v2168 = vpack.c.b16 %v2087, %v2078
    %v2169 = vpack.c.b16 %v2088, %v2079
    %v2170 = vpack.c.b16 %v2089, %v2080
    %v2171 = vpack.c.b16 %v2090, %v2081
    %v2172 = vpack.c.b16 %v2091, %v2082
    %v2173 = vpack.c.b16 %v2092, %v2083
    %v2174 = vpack.c.b16 %v2093, %v2084
    %v2175 = vpack.c.b16 %v2103, %v2094
    %v2176 = vpack.c.b16 %v2104, %v2095
    %v2177 = vpack.c.b16 %v2105, %v2096
    %v2178 = vpack.c.b16 %v2106, %v2097
    %v2179 = vpack.c.b16 %v2107, %v2098
    %v2180 = vpack.c.b16 %v2108, %v2099
    %v2181 = vpack.c.b16 %v2109, %v2100
    %v2182 = vpack.c.b16 %v2110, %v2101
    %v2183 = vpack.c.b16 %v2111, %v2102
    %v2400 = vunpack.c.l.b16 %v1740
    %v2401 = vunpack.c.l.b16 %v1741
    %v2402 = vunpack.c.l.b16 %v1742
    %v2403 = vunpack.c.l.b16 %v1743
    %v2404 = vunpack.c.l.b16 %v1744
    %v2405 = vunpack.c.l.b16 %v1745
    %v2406 = vunpack.c.l.b16 %v1746
    %v2407 = vunpack.c.l.b16 %v1747
    %v2408 = vunpack.c.l.b16 %v1748
    %v2409 = vunpack.c.l.b16 %v1749
    %v2410 = vunpack.c.l.b16 %v1750
    %v2411 = vunpack.c.l.b16 %v1751
    %v2412 = vunpack.c.l.b16 %v1752
    %v2413 = vunpack.c.l.b16 %v1753
    %v2414 = vunpack.c.l.b16 %v1754
    %v2415 = vunpack.c.l.b16 %v1755
    %v2416 = vunpack.c.l.b16 %v1756
    %v2417 = vunpack.c.l.b16 %v1757
    %v2418 = vunpack.c.l.b16 %v1758
    %v2419 = vunpack.c.l.b16 %v1759
    %v2420 = vunpack.c.l.b16 %v1760
    %v2421 = vunpack.c.l.b16 %v1761
    %v2422 = vunpack.c.l.b16 %v1762
    %v2423 = vunpack.c.l.b16 %v1763
    %v2424 = vunpack.c.l.b16 %v1764
    %v2425 = vunpack.c.l.b16 %v1765
    %v2426 = vunpack.c.l.b16 %v1766
    %v2427 = vunpack.c.l.b16 %v1767
    %v2428 = vunpack.c.l.b16 %v1768
    %v2429 = vunpack.c.l.b16 %v1769
    %v2430 = vunpack.c.l.b16 %v1770
    %v2431 = vunpack.c.l.b16 %v1771
    %v2432 = vunpack.c.l.b16 %v1772
    %v2433 = vunpack.c.l.b16 %v1773
    %v2434 = vunpack.c.l.b16 %v1774
    %v2435 = vunpack.c.l.b16 %v1775
    %v2436 = vunpack.c.l.b16 %v1776
    %v2437 = vunpack.c.l.b16 %v1777
    %v2438 = vunpack.c.l.b16 %v1778
    %v2439 = vunpack.c.l.b16 %v1779
    %v2440 = vunpack.c.l.b16 %v1780
    %v2441 = vunpack.c.l.b16 %v1781
    %v2442 = vunpack.c.l.b16 %v1782
    %v2443 = vunpack.c.l.b16 %v1783
    %v2444 = vunpack.c.l.b16 %v1784
    %v2445 = vunpack.c.l.b16 %v1785
    %v2446 = vunpack.c.l.b16 %v1786
    %v2447 = vunpack.c.l.b16 %v1787
    %v2448 = vunpack.c.l.b16 %v1788
    %v2449 = vunpack.c.l.b16 %v1789
    %v2450 = vunpack.c.l.b16 %v1790
    %v2451 = vunpack.c.l.b16 %v1791
    %v2452 = vunpack.c.l.b16 %v1792
    %v2453 = vunpack.c.l.b16 %v1793
    %v2454 = vunpack.c.l.b16 %v1794
    %v2455 = vunpack.c.l.b16 %v1795
    %v2456 = vunpack.c.l.b16 %v1796
    %v2457 = vunpack.c.l.b16 %v1797
    %v2458 = vunpack.c.l.b16 %v1798
    %v2459 = vunpack.c.l.b16 %v1799
    %v2460 = vunpack.c.l.b16 %v1800
    %v2461 = vunpack.c.l.b16 %v1801
    %v2462 = vunpack.c.l.b16 %v1802
    %v2463 = vunpack.c.l.b16 %v1803
    %v2464 = vunpack.c.l.b16 %v1804
    %v2465 = vunpack.c.l.b16 %v1805
    %v2466 = vunpack.c.l.b16 %v1806
    %v2467 = vunpack.c.l.b16 %v1807
    %v2468 = vunpack.c.l.b16 %v1808
    %v2469 = vunpack.c.l.b16 %v1809
    %v2470 = vunpack.c.l.b16 %v1810
    %v2471 = vunpack.c.l.b16 %v1811
    %v2472 = vunpack.c.l.b16 %v1812
    %v2473 = vunpack.c.l.b16 %v1813
    %v2474 = vunpack.c.l.b16 %v1814
    %v2475 = vunpack.c.l.b16 %v1815
    %v2476 = vunpack.c.l.b16 %v1816
    %v2477 = vunpack.c.l.b16 %v1817
    %v2478 = vunpack.c.l.b16 %v1818
    %v2479 = vunpack.c.l.b16 %v1819
    %v2480 = vunpack.c.l.b16 %v1820
    %v2481 = vunpack.c.l.b16 %v1821
    %v2482 = vunpack.c.l.b16 %v1822
    %v2483 = vunpack.c.l.b16 %v1823
    %v2484 = vunpack.c.l.b16 %v1824
    %v2485 = vunpack.c.l.b16 %v1825
    %v2486 = vunpack.c.l.b16 %v1826
    %v2487 = vunpack.c.l.b16 %v1827
    %v2488 = vunpack.c.l.b16 %v1828
    %v2489 = vunpack.c.l.b16 %v1829
    %v2490 = vunpack.c.l.b16 %v1830
    %v2491 = vunpack.c.l.b16 %v1831
    %v2492 = vunpack.c.l.b16 %v1832
    %v2493 = vunpack.c.l.b16 %v1833
    %v2494 = vunpack.c.l.b16 %v1834
    %v2495 = vunpack.c.l.b16 %v1835
    %v2496 = vunpack.c.l.b16 %v1836
    %v2497 = vunpack.c.l.b16 %v1837
    %v2498 = vunpack.c.l.b16 %v1838
    %v2499 = vunpack.c.l.b16 %v1839
    %v2500 = vunpack.c.l.b16 %v1840
    %v2501 = vunpack.c.l.b16 %v1841
    %v2502 = vunpack.c.l.b16 %v1842
    %v2503 = vunpack.c.l.b16 %v1843
    %v2504 = vunpack.c.l.b16 %v1844
    %v2505 = vunpack.c.l.b16 %v1845
    %v2506 = vunpack.c.l.b16 %v1846
    %v2507 = vunpack.c.l.b16 %v1847
    %v2508 = vunpack.c.l.b16 %v1848
    %v2509 = vunpack.c.l.b16 %v1849
    %v2510 = vunpack.c.l.b16 %v1850
    %v2511 = vunpack.c.l.b16 %v1851
    %v2512 = vunpack.c.l.b16 %v1852
    %v2513 = vunpack.c.l.b16 %v1853
    %v2514 = vunpack.c.l.b16 %v1854
    %v2515 = vunpack.c.l.b16 %v1855
    %v2516 = vunpack.c.l.b16 %v1856
    %v2517 = vunpack.c.l.b16 %v1857
    %v2518 = vunpack.c.l.b16 %v1858
    %v2519 = vunpack.c.l.b16 %v1859
    %v2520 = vunpack.c.l.b16 %v1860
    %v2521 = vunpack.c.l.b16 %v1861
    %v2522 = vunpack.c.l.b16 %v1862
    %v2523 = vunpack.c.l.b16 %v1863
    %v2524 = vunpack.c.l.b16 %v1864
    %v2525 = vunpack.c.l.b16 %v1865
    %v2526 = vunpack.c.l.b16 %v1866
    %v2527 = vunpack.c.l.b16 %v1867
    %v2528 = vunpack.c.l.b16 %v1868
    %v2529 = vunpack.c.l.b16 %v1869
    %v2530 = vunpack.c.l.b16 %v1870
    %v2531 = vunpack.c.l.b16 %v1871
    %v2532 = vunpack.c.l.b16 %v1872
    %v2533 = vunpack.c.l.b16 %v1873
    %v2534 = vunpack.c.l.b16 %v1874
    %v2535 = vunpack.c.l.b16 %v1875
    %v2536 = vunpack.c.l.b16 %v1876
    %v2537 = vunpack.c.l.b16 %v1877
    %v2538 = vunpack.c.l.b16 %v1878
    %v2539 = vunpack.c.l.b16 %v1879
    %v2540 = vunpack.c.l.b16 %v1880
    %v2541 = vunpack.c.l.b16 %v1881
    %v2542 = vunpack.c.l.b16 %v1882
    %v2543 = vunpack.c.l.b16 %v1883
    %v2544 = vpack.c.b16 %v2401, %v2400
    %v2545 = vpack.c.b16 %v2403, %v2402
    %v2546 = vpack.c.b16 %v2405, %v2404
    %v2547 = vpack.c.b16 %v2407, %v2406
    %v2548 = vpack.c.b16 %v2409, %v2408
    %v2549 = vpack.c.b16 %v2411, %v2410
    %v2550 = vpack.c.b16 %v2413, %v2412
    %v2551 = vpack.c.b16 %v2415, %v2414
    %v2552 = vpack.c.b16 %v2417, %v2416
    %v2553 = vpack.c.b16 %v2419, %v2418
    %v2554 = vpack.c.b16 %v2421, %v2420
    %v2555 = vpack.c.b16 %v2423, %v2422
    %v2556 = vpack.c.b16 %v2425, %v2424
    %v2557 = vpack.c.b16 %v2427, %v2426
    %v2558 = vpack.c.b16 %v2429, %v2428
    %v2559 = vpack.c.b16 %v2431, %v2430
    %v2560 = vpack.c.b16 %v2433, %v2432
    %v2561 = vpack.c.b16 %v2435, %v2434
    %v2562 = vpack.c.b16 %v2437, %v2436
    %v2563 = vpack.c.b16 %v2439, %v2438
    %v2564 = vpack.c.b16 %v2441, %v2440
    %v2565 = vpack.c.b16 %v2443, %v2442
    %v2566 = vpack.c.b16 %v2445, %v2444
    %v2567 = vpack.c.b16 %v2447, %v2446
    %v2568 = vpack.c.b16 %v2449, %v2448
    %v2569 = vpack.c.b16 %v2451, %v2450
    %v2570 = vpack.c.b16 %v2453, %v2452
    %v2571 = vpack.c.b16 %v2455, %v2454
    %v2572 = vpack.c.b16 %v2457, %v2456
    %v2573 = vpack.c.b16 %v2459, %v2458
    %v2574 = vpack.c.b16 %v2461, %v2460
    %v2575 = vpack.c.b16 %v2463, %v2462
    %v2576 = vpack.c.b16 %v2465, %v2464
    %v2577 = vpack.c.b16 %v2467, %v2466
    %v2578 = vpack.c.b16 %v2469, %v2468
    %v2579 = vpack.c.b16 %v2471, %v2470
    %v2580 = vpack.c.b16 %v2473, %v2472
    %v2581 = vpack.c.b16 %v2475, %v2474
    %v2582 = vpack.c.b16 %v2477, %v2476
    %v2583 = vpack.c.b16 %v2479, %v2478
    %v2584 = vpack.c.b16 %v2481, %v2480
    %v2585 = vpack.c.b16 %v2483, %v2482
    %v2586 = vpack.c.b16 %v2485, %v2484
    %v2587 = vpack.c.b16 %v2487, %v2486
    %v2588 = vpack.c.b16 %v2489, %v2488
    %v2589 = vpack.c.b16 %v2491, %v2490
    %v2590 = vpack.c.b16 %v2493, %v2492
    %v2591 = vpack.c.b16 %v2495, %v2494
    %v2592 = vpack.c.b16 %v2497, %v2496
    %v2593 = vpack.c.b16 %v2499, %v2498
    %v2594 = vpack.c.b16 %v2501, %v2500
    %v2595 = vpack.c.b16 %v2503, %v2502
    %v2596 = vpack.c.b16 %v2505, %v2504
    %v2597 = vpack.c.b16 %v2507, %v2506
    %v2598 = vpack.c.b16 %v2509, %v2508
    %v2599 = vpack.c.b16 %v2511, %v2510
    %v2600 = vpack.c.b16 %v2513, %v2512
    %v2601 = vpack.c.b16 %v2515, %v2514
    %v2602 = vpack.c.b16 %v2517, %v2516
    %v2603 = vpack.c.b16 %v2519, %v2518
    %v2604 = vpack.c.b16 %v2521, %v2520
    %v2605 = vpack.c.b16 %v2523, %v2522
    %v2606 = vpack.c.b16 %v2525, %v2524
    %v2607 = vpack.c.b16 %v2527, %v2526
    %v2608 = vpack.c.b16 %v2529, %v2528
    %v2609 = vpack.c.b16 %v2531, %v2530
    %v2610 = vpack.c.b16 %v2533, %v2532
    %v2611 = vpack.c.b16 %v2535, %v2534
    %v2612 = vpack.c.b16 %v2537, %v2536
    %v2613 = vpack.c.b16 %v2539, %v2538
    %v2614 = vpack.c.b16 %v2541, %v2540
    %v2615 = vpack.c.b16 %v2543, %v2542
    %2688 = vmatprep.subr.bf16.mxu0 0
    %2689 = vmatpush1.bf16.msra.mxu0 %v2544
    %2690 = vmatprep.subr.bf16.mxu0 0
    %2691 = vmatpush1.bf16.msra.mxu0 %v2545
    %2692 = vmatprep.subr.bf16.mxu0 0
    %2693 = vmatpush1.bf16.msra.mxu0 %v2546
    %2694 = vmatprep.subr.bf16.mxu0 0
    %2695 = vmatpush1.bf16.msra.mxu0 %v2547
    %2696 = vmatprep.subr.bf16.mxu0 0
    %2697 = vmatpush1.bf16.msra.mxu0 %v2548
    %2698 = vmatprep.subr.bf16.mxu0 0
    %2699 = vmatpush1.bf16.msra.mxu0 %v2549
    %2700 = vmatprep.subr.bf16.mxu0 0
    %2701 = vmatpush1.bf16.msra.mxu0 %v2550
    %2702 = vmatprep.subr.bf16.mxu0 0
    %2703 = vmatpush1.bf16.msra.mxu0 %v2551
    %2704 = vmatprep.subr.bf16.mxu0 0
    %2705 = vmatpush1.bf16.msra.mxu0 %v2552
    %2706 = vmatprep.subr.bf16.mxu0 0
    %2707 = vmatpush1.bf16.msra.mxu0 %v2553
    %2708 = vmatprep.subr.bf16.mxu0 0
    %2709 = vmatpush1.bf16.msra.mxu0 %v2554
    %2710 = vmatprep.subr.bf16.mxu0 0
    %2711 = vmatpush1.bf16.msra.mxu0 %v2555
    %2712 = vmatprep.subr.bf16.mxu0 0
    %2713 = vmatpush1.bf16.msra.mxu0 %v2556
    %2714 = vmatprep.subr.bf16.mxu0 0
    %2715 = vmatpush1.bf16.msra.mxu0 %v2557
    %2716 = vmatprep.subr.bf16.mxu0 0
    %2717 = vmatpush1.bf16.msra.mxu0 %v2558
    %2718 = vmatprep.subr.bf16.mxu0 0
    %2719 = vmatpush1.bf16.msra.mxu0 %v2559
    %2720 = vmatprep.mubr.bf16.mxu0 %v2113
    %2721 = vmatmul.mubr.bf16.gmra.mrb[0].mxu0 %v2112
    %v2722 = vpop.f32.mrb[0].mxu0
    %v2723 = vadd.f32 %v1887, %v2722
    %v2724 = vpop.f32.mrb[0].mxu0
    %v2725 = vpop.f32.mrb[0].mxu0
    %v2726 = vadd.f32 %v1887, %v2725
    %v2727 = vpop.f32.mrb[0].mxu0
    %2728 = vmatprep.mubr.bf16.mxu0 %v2122
    %2729 = vmatmul.mubr.bf16.gmra.mrb[0].mxu0 %v2121
    %v2730 = vpop.f32.mrb[0].mxu0
    %v2731 = vadd.f32 %v1887, %v2730
    %v2732 = vpop.f32.mrb[0].mxu0
    %v2733 = vpop.f32.mrb[0].mxu0
    %v2734 = vadd.f32 %v1887, %v2733
    %v2735 = vpop.f32.mrb[0].mxu0
    %2736 = vmatprep.mubr.bf16.mxu0 %v2131
    %2737 = vmatmul.mubr.bf16.gmra.mrb[0].mxu0 %v2130
    %v2738 = vpop.f32.mrb[0].mxu0
    %v2739 = vadd.f32 %v1887, %v2738
    %v2740 = vpop.f32.mrb[0].mxu0
    %v2741 = vpop.f32.mrb[0].mxu0
    %v2742 = vadd.f32 %v1887, %v2741
    %v2743 = vpop.f32.mrb[0].mxu0
    %2744 = vmatprep.mubr.bf16.mxu0 %v2140
    %2745 = vmatmul.mubr.bf16.gmra.mrb[0].mxu0 %v2139
    %v2746 = vpop.f32.mrb[0].mxu0
    %v2747 = vadd.f32 %v1887, %v2746
    %v2748 = vpop.f32.mrb[0].mxu0
    %v2749 = vpop.f32.mrb[0].mxu0
    %v2750 = vadd.f32 %v1887, %v2749
    %v2751 = vpop.f32.mrb[0].mxu0
    %2752 = vmatprep.mubr.bf16.mxu0 %v2149
    %2753 = vmatmul.mubr.bf16.gmra.mrb[0].mxu0 %v2148
    %v2754 = vpop.f32.mrb[0].mxu0
    %v2755 = vadd.f32 %v1887, %v2754
    %v2756 = vpop.f32.mrb[0].mxu0
    %v2757 = vpop.f32.mrb[0].mxu0
    %v2758 = vadd.f32 %v1887, %v2757
    %v2759 = vpop.f32.mrb[0].mxu0
    %2760 = vmatprep.mubr.bf16.mxu0 %v2158
    %2761 = vmatmul.mubr.bf16.gmra.mrb[0].mxu0 %v2157
    %v2762 = vpop.f32.mrb[0].mxu0
    %v2763 = vadd.f32 %v1887, %v2762
    %v2764 = vpop.f32.mrb[0].mxu0
    %v2765 = vpop.f32.mrb[0].mxu0
    %v2766 = vadd.f32 %v1887, %v2765
    %v2767 = vpop.f32.mrb[0].mxu0
    %2768 = vmatprep.mubr.bf16.mxu0 %v2167
    %2769 = vmatmul.mubr.bf16.gmra.mrb[0].mxu0 %v2166
    %v2770 = vpop.f32.mrb[0].mxu0
    %v2771 = vadd.f32 %v1887, %v2770
    %v2772 = vpop.f32.mrb[0].mxu0
    %v2773 = vpop.f32.mrb[0].mxu0
    %v2774 = vadd.f32 %v1887, %v2773
    %v2775 = vpop.f32.mrb[0].mxu0
    %2776 = vmatprep.mubr.bf16.mxu0 %v2176
    %2777 = vmatmul.mubr.bf16.gmra.mrb[0].mxu0 %v2175
    %v2778 = vpop.f32.mrb[0].mxu0
    %v2779 = vadd.f32 %v1887, %v2778
    %v2780 = vpop.f32.mrb[0].mxu0
    %v2781 = vpop.f32.mrb[0].mxu0
    %v2782 = vadd.f32 %v1887, %v2781
    %v2783 = vpop.f32.mrb[0].mxu0
    %2784 = vdwg.mxu0
    %2785 = vmatprep.subr.bf16.mxu0 0
    %2786 = vmatpush1.bf16.msra.mxu0 %v2560
    %2787 = vmatprep.subr.bf16.mxu0 0
    %2788 = vmatpush1.bf16.msra.mxu0 %v2561
    %2789 = vmatprep.subr.bf16.mxu0 0
    %2790 = vmatpush1.bf16.msra.mxu0 %v2562
    %2791 = vmatprep.subr.bf16.mxu0 0
    %2792 = vmatpush1.bf16.msra.mxu0 %v2563
    %2793 = vmatprep.subr.bf16.mxu0 0
    %2794 = vmatpush1.bf16.msra.mxu0 %v2564
    %2795 = vmatprep.subr.bf16.mxu0 0
    %2796 = vmatpush1.bf16.msra.mxu0 %v2565
    %2797 = vmatprep.subr.bf16.mxu0 0
    %2798 = vmatpush1.bf16.msra.mxu0 %v2566
    %2799 = vmatprep.subr.bf16.mxu0 0
    %2800 = vmatpush1.bf16.msra.mxu0 %v2567
    %2801 = vmatprep.subr.bf16.mxu0 0
    %2802 = vmatpush1.bf16.msra.mxu0 %v2568
    %2803 = vmatprep.subr.bf16.mxu0 0
    %2804 = vmatpush1.bf16.msra.mxu0 %v2569
    %2805 = vmatprep.subr.bf16.mxu0 0
    %2806 = vmatpush1.bf16.msra.mxu0 %v2570
    %2807 = vmatprep.subr.bf16.mxu0 0
    %2808 = vmatpush1.bf16.msra.mxu0 %v2571
    %2809 = vmatprep.subr.bf16.mxu0 0
    %2810 = vmatpush1.bf16.msra.mxu0 %v2572
    %2811 = vmatprep.subr.bf16.mxu0 0
    %2812 = vmatpush1.bf16.msra.mxu0 %v2573
    %2813 = vmatprep.subr.bf16.mxu0 0
    %2814 = vmatpush1.bf16.msra.mxu0 %v2574
    %2815 = vmatprep.subr.bf16.mxu0 0
    %2816 = vmatpush1.bf16.msra.mxu0 %v2575
    %2817 = vmatprep.mubr.bf16.mxu0 %v2115
    %2818 = vmatmul.mubr.bf16.gmra.mrb[0].mxu0 %v2114
    %v2819 = vpop.f32.mrb[0].mxu0
    %v2820 = vadd.f32 %v2723, %v2819
    %v2821 = vpop.f32.mrb[0].mxu0
    %v2822 = vpop.f32.mrb[0].mxu0
    %v2823 = vadd.f32 %v2726, %v2822
    %v2824 = vpop.f32.mrb[0].mxu0
    %2825 = vmatprep.mubr.bf16.mxu0 %v2124
    %2826 = vmatmul.mubr.bf16.gmra.mrb[0].mxu0 %v2123
    %v2827 = vpop.f32.mrb[0].mxu0
    %v2828 = vadd.f32 %v2731, %v2827
    %v2829 = vpop.f32.mrb[0].mxu0
    %v2830 = vpop.f32.mrb[0].mxu0
    %v2831 = vadd.f32 %v2734, %v2830
    %v2832 = vpop.f32.mrb[0].mxu0
    %2833 = vmatprep.mubr.bf16.mxu0 %v2133
    %2834 = vmatmul.mubr.bf16.gmra.mrb[0].mxu0 %v2132
    %v2835 = vpop.f32.mrb[0].mxu0
    %v2836 = vadd.f32 %v2739, %v2835
    %v2837 = vpop.f32.mrb[0].mxu0
    %v2838 = vpop.f32.mrb[0].mxu0
    %v2839 = vadd.f32 %v2742, %v2838
    %v2840 = vpop.f32.mrb[0].mxu0
    %2841 = vmatprep.mubr.bf16.mxu0 %v2142
    %2842 = vmatmul.mubr.bf16.gmra.mrb[0].mxu0 %v2141
    %v2843 = vpop.f32.mrb[0].mxu0
    %v2844 = vadd.f32 %v2747, %v2843
    %v2845 = vpop.f32.mrb[0].mxu0
    %v2846 = vpop.f32.mrb[0].mxu0
    %v2847 = vadd.f32 %v2750, %v2846
    %v2848 = vpop.f32.mrb[0].mxu0
    %2849 = vmatprep.mubr.bf16.mxu0 %v2151
    %2850 = vmatmul.mubr.bf16.gmra.mrb[0].mxu0 %v2150
    %v2851 = vpop.f32.mrb[0].mxu0
    %v2852 = vadd.f32 %v2755, %v2851
    %v2853 = vpop.f32.mrb[0].mxu0
    %v2854 = vpop.f32.mrb[0].mxu0
    %v2855 = vadd.f32 %v2758, %v2854
    %v2856 = vpop.f32.mrb[0].mxu0
    %2857 = vmatprep.mubr.bf16.mxu0 %v2160
    %2858 = vmatmul.mubr.bf16.gmra.mrb[0].mxu0 %v2159
    %v2859 = vpop.f32.mrb[0].mxu0
    %v2860 = vadd.f32 %v2763, %v2859
    %v2861 = vpop.f32.mrb[0].mxu0
    %v2862 = vpop.f32.mrb[0].mxu0
    %v2863 = vadd.f32 %v2766, %v2862
    %v2864 = vpop.f32.mrb[0].mxu0
    %2865 = vmatprep.mubr.bf16.mxu0 %v2169
    %2866 = vmatmul.mubr.bf16.gmra.mrb[0].mxu0 %v2168
    %v2867 = vpop.f32.mrb[0].mxu0
    %v2868 = vadd.f32 %v2771, %v2867
    %v2869 = vpop.f32.mrb[0].mxu0
    %v2870 = vpop.f32.mrb[0].mxu0
    %v2871 = vadd.f32 %v2774, %v2870
    %v2872 = vpop.f32.mrb[0].mxu0
    %2873 = vmatprep.mubr.bf16.mxu0 %v2178
    %2874 = vmatmul.mubr.bf16.gmra.mrb[0].mxu0 %v2177
    %v2875 = vpop.f32.mrb[0].mxu0
    %v2876 = vadd.f32 %v2779, %v2875
    %v2877 = vpop.f32.mrb[0].mxu0
    %v2878 = vpop.f32.mrb[0].mxu0
    %v2879 = vadd.f32 %v2782, %v2878
    %v2880 = vpop.f32.mrb[0].mxu0
    %2881 = vdwg.mxu0
    %2882 = vmatprep.subr.bf16.mxu0 0
    %2883 = vmatpush1.bf16.msra.mxu0 %v2576
    %2884 = vmatprep.subr.bf16.mxu0 0
    %2885 = vmatpush1.bf16.msra.mxu0 %v2577
    %2886 = vmatprep.subr.bf16.mxu0 0
    %2887 = vmatpush1.bf16.msra.mxu0 %v2578
    %2888 = vmatprep.subr.bf16.mxu0 0
    %2889 = vmatpush1.bf16.msra.mxu0 %v2579
    %2890 = vmatprep.subr.bf16.mxu0 0
    %2891 = vmatpush1.bf16.msra.mxu0 %v2580
    %2892 = vmatprep.subr.bf16.mxu0 0
    %2893 = vmatpush1.bf16.msra.mxu0 %v2581
    %2894 = vmatprep.subr.bf16.mxu0 0
    %2895 = vmatpush1.bf16.msra.mxu0 %v2582
    %2896 = vmatprep.subr.bf16.mxu0 0
    %2897 = vmatpush1.bf16.msra.mxu0 %v2583
    %2898 = vmatprep.subr.bf16.mxu0 0
    %2899 = vmatpush1.bf16.msra.mxu0 %v2584
    %2900 = vmatprep.subr.bf16.mxu0 0
    %2901 = vmatpush1.bf16.msra.mxu0 %v2585
    %2902 = vmatprep.subr.bf16.mxu0 0
    %2903 = vmatpush1.bf16.msra.mxu0 %v2586
    %2904 = vmatprep.subr.bf16.mxu0 0
    %2905 = vmatpush1.bf16.msra.mxu0 %v2587
    %2906 = vmatprep.subr.bf16.mxu0 0
    %2907 = vmatpush1.bf16.msra.mxu0 %v2588
    %2908 = vmatprep.subr.bf16.mxu0 0
    %2909 = vmatpush1.bf16.msra.mxu0 %v2589
    %2910 = vmatprep.subr.bf16.mxu0 0
    %2911 = vmatpush1.bf16.msra.mxu0 %v2590
    %2912 = vmatprep.subr.bf16.mxu0 0
    %2913 = vmatpush1.bf16.msra.mxu0 %v2591
    %2914 = vmatprep.mubr.bf16.mxu0 %v2117
    %2915 = vmatmul.mubr.bf16.gmra.mrb[0].mxu0 %v2116
    %v2916 = vpop.f32.mrb[0].mxu0
    %v2917 = vadd.f32 %v2820, %v2916
    %v2918 = vpop.f32.mrb[0].mxu0
    %v2919 = vpop.f32.mrb[0].mxu0
    %v2920 = vadd.f32 %v2823, %v2919
    %v2921 = vpop.f32.mrb[0].mxu0
    %2922 = vmatprep.mubr.bf16.mxu0 %v2126
    %2923 = vmatmul.mubr.bf16.gmra.mrb[0].mxu0 %v2125
    %v2924 = vpop.f32.mrb[0].mxu0
    %v2925 = vadd.f32 %v2828, %v2924
    %v2926 = vpop.f32.mrb[0].mxu0
    %v2927 = vpop.f32.mrb[0].mxu0
    %v2928 = vadd.f32 %v2831, %v2927
    %v2929 = vpop.f32.mrb[0].mxu0
    %2930 = vmatprep.mubr.bf16.mxu0 %v2135
    %2931 = vmatmul.mubr.bf16.gmra.mrb[0].mxu0 %v2134
    %v2932 = vpop.f32.mrb[0].mxu0
    %v2933 = vadd.f32 %v2836, %v2932
    %v2934 = vpop.f32.mrb[0].mxu0
    %v2935 = vpop.f32.mrb[0].mxu0
    %v2936 = vadd.f32 %v2839, %v2935
    %v2937 = vpop.f32.mrb[0].mxu0
    %2938 = vmatprep.mubr.bf16.mxu0 %v2144
    %2939 = vmatmul.mubr.bf16.gmra.mrb[0].mxu0 %v2143
    %v2940 = vpop.f32.mrb[0].mxu0
    %v2941 = vadd.f32 %v2844, %v2940
    %v2942 = vpop.f32.mrb[0].mxu0
    %v2943 = vpop.f32.mrb[0].mxu0
    %v2944 = vadd.f32 %v2847, %v2943
    %v2945 = vpop.f32.mrb[0].mxu0
    %2946 = vmatprep.mubr.bf16.mxu0 %v2153
    %2947 = vmatmul.mubr.bf16.gmra.mrb[0].mxu0 %v2152
    %v2948 = vpop.f32.mrb[0].mxu0
    %v2949 = vadd.f32 %v2852, %v2948
    %v2950 = vpop.f32.mrb[0].mxu0
    %v2951 = vpop.f32.mrb[0].mxu0
    %v2952 = vadd.f32 %v2855, %v2951
    %v2953 = vpop.f32.mrb[0].mxu0
    %2954 = vmatprep.mubr.bf16.mxu0 %v2162
    %2955 = vmatmul.mubr.bf16.gmra.mrb[0].mxu0 %v2161
    %v2956 = vpop.f32.mrb[0].mxu0
    %v2957 = vadd.f32 %v2860, %v2956
    %v2958 = vpop.f32.mrb[0].mxu0
    %v2959 = vpop.f32.mrb[0].mxu0
    %v2960 = vadd.f32 %v2863, %v2959
    %v2961 = vpop.f32.mrb[0].mxu0
    %2962 = vmatprep.mubr.bf16.mxu0 %v2171
    %2963 = vmatmul.mubr.bf16.gmra.mrb[0].mxu0 %v2170
    %v2964 = vpop.f32.mrb[0].mxu0
    %v2965 = vadd.f32 %v2868, %v2964
    %v2966 = vpop.f32.mrb[0].mxu0
    %v2967 = vpop.f32.mrb[0].mxu0
    %v2968 = vadd.f32 %v2871, %v2967
    %v2969 = vpop.f32.mrb[0].mxu0
    %2970 = vmatprep.mubr.bf16.mxu0 %v2180
    %2971 = vmatmul.mubr.bf16.gmra.mrb[0].mxu0 %v2179
    %v2972 = vpop.f32.mrb[0].mxu0
    %v2973 = vadd.f32 %v2876, %v2972
    %v2974 = vpop.f32.mrb[0].mxu0
    %v2975 = vpop.f32.mrb[0].mxu0
    %v2976 = vadd.f32 %v2879, %v2975
    %v2977 = vpop.f32.mrb[0].mxu0
    %2978 = vdwg.mxu0
    %2979 = vmatprep.subr.bf16.mxu0 0
    %2980 = vmatpush1.bf16.msra.mxu0 %v2592
    %2981 = vmatprep.subr.bf16.mxu0 0
    %2982 = vmatpush1.bf16.msra.mxu0 %v2593
    %2983 = vmatprep.subr.bf16.mxu0 0
    %2984 = vmatpush1.bf16.msra.mxu0 %v2594
    %2985 = vmatprep.subr.bf16.mxu0 0
    %2986 = vmatpush1.bf16.msra.mxu0 %v2595
    %2987 = vmatprep.subr.bf16.mxu0 0
    %2988 = vmatpush1.bf16.msra.mxu0 %v2596
    %2989 = vmatprep.subr.bf16.mxu0 0
    %2990 = vmatpush1.bf16.msra.mxu0 %v2597
    %2991 = vmatprep.subr.bf16.mxu0 0
    %2992 = vmatpush1.bf16.msra.mxu0 %v2598
    %2993 = vmatprep.subr.bf16.mxu0 0
    %2994 = vmatpush1.bf16.msra.mxu0 %v2599
    %2995 = vmatprep.subr.bf16.mxu0 0
    %2996 = vmatpush1.bf16.msra.mxu0 %v2600
    %2997 = vmatprep.subr.bf16.mxu0 0
    %2998 = vmatpush1.bf16.msra.mxu0 %v2601
    %2999 = vmatprep.subr.bf16.mxu0 0
    %3000 = vmatpush1.bf16.msra.mxu0 %v2602
    %3001 = vmatprep.subr.bf16.mxu0 0
    %3002 = vmatpush1.bf16.msra.mxu0 %v2603
    %3003 = vmatprep.subr.bf16.mxu0 0
    %3004 = vmatpush1.bf16.msra.mxu0 %v2604
    %3005 = vmatprep.subr.bf16.mxu0 0
    %3006 = vmatpush1.bf16.msra.mxu0 %v2605
    %3007 = vmatprep.subr.bf16.mxu0 0
    %3008 = vmatpush1.bf16.msra.mxu0 %v2606
    %3009 = vmatprep.subr.bf16.mxu0 0
    %3010 = vmatpush1.bf16.msra.mxu0 %v2607
    %3011 = vmatprep.mubr.bf16.mxu0 %v2119
    %3012 = vmatmul.mubr.bf16.gmra.mrb[0].mxu0 %v2118
    %v3013 = vpop.f32.mrb[0].mxu0
    %v3014 = vadd.f32 %v2917, %v3013
    %v3015 = vpop.f32.mrb[0].mxu0
    %v3016 = vpop.f32.mrb[0].mxu0
    %v3017 = vadd.f32 %v2920, %v3016
    %v3018 = vpop.f32.mrb[0].mxu0
    %3019 = vmatprep.mubr.bf16.mxu0 %v2128
    %3020 = vmatmul.mubr.bf16.gmra.mrb[0].mxu0 %v2127
    %v3021 = vpop.f32.mrb[0].mxu0
    %v3022 = vadd.f32 %v2925, %v3021
    %v3023 = vpop.f32.mrb[0].mxu0
    %v3024 = vpop.f32.mrb[0].mxu0
    %v3025 = vadd.f32 %v2928, %v3024
    %v3026 = vpop.f32.mrb[0].mxu0
    %3027 = vmatprep.mubr.bf16.mxu0 %v2137
    %3028 = vmatmul.mubr.bf16.gmra.mrb[0].mxu0 %v2136
    %v3029 = vpop.f32.mrb[0].mxu0
    %v3030 = vadd.f32 %v2933, %v3029
    %v3031 = vpop.f32.mrb[0].mxu0
    %v3032 = vpop.f32.mrb[0].mxu0
    %v3033 = vadd.f32 %v2936, %v3032
    %v3034 = vpop.f32.mrb[0].mxu0
    %3035 = vmatprep.mubr.bf16.mxu0 %v2146
    %3036 = vmatmul.mubr.bf16.gmra.mrb[0].mxu0 %v2145
    %v3037 = vpop.f32.mrb[0].mxu0
    %v3038 = vadd.f32 %v2941, %v3037
    %v3039 = vpop.f32.mrb[0].mxu0
    %v3040 = vpop.f32.mrb[0].mxu0
    %v3041 = vadd.f32 %v2944, %v3040
    %v3042 = vpop.f32.mrb[0].mxu0
    %3043 = vmatprep.mubr.bf16.mxu0 %v2155
    %3044 = vmatmul.mubr.bf16.gmra.mrb[0].mxu0 %v2154
    %v3045 = vpop.f32.mrb[0].mxu0
    %v3046 = vadd.f32 %v2949, %v3045
    %v3047 = vpop.f32.mrb[0].mxu0
    %v3048 = vpop.f32.mrb[0].mxu0
    %v3049 = vadd.f32 %v2952, %v3048
    %v3050 = vpop.f32.mrb[0].mxu0
    %3051 = vmatprep.mubr.bf16.mxu0 %v2164
    %3052 = vmatmul.mubr.bf16.gmra.mrb[0].mxu0 %v2163
    %v3053 = vpop.f32.mrb[0].mxu0
    %v3054 = vadd.f32 %v2957, %v3053
    %v3055 = vpop.f32.mrb[0].mxu0
    %v3056 = vpop.f32.mrb[0].mxu0
    %v3057 = vadd.f32 %v2960, %v3056
    %v3058 = vpop.f32.mrb[0].mxu0
    %3059 = vmatprep.mubr.bf16.mxu0 %v2173
    %3060 = vmatmul.mubr.bf16.gmra.mrb[0].mxu0 %v2172
    %v3061 = vpop.f32.mrb[0].mxu0
    %v3062 = vadd.f32 %v2965, %v3061
    %v3063 = vpop.f32.mrb[0].mxu0
    %v3064 = vpop.f32.mrb[0].mxu0
    %v3065 = vadd.f32 %v2968, %v3064
    %v3066 = vpop.f32.mrb[0].mxu0
    %3067 = vmatprep.mubr.bf16.mxu0 %v2182
    %3068 = vmatmul.mubr.bf16.gmra.mrb[0].mxu0 %v2181
    %v3069 = vpop.f32.mrb[0].mxu0
    %v3070 = vadd.f32 %v2973, %v3069
    %v3071 = vpop.f32.mrb[0].mxu0
    %v3072 = vpop.f32.mrb[0].mxu0
    %v3073 = vadd.f32 %v2976, %v3072
    %v3074 = vpop.f32.mrb[0].mxu0
    %3075 = vdwg.mxu0
    %3076 = vmatprep.subr.bf16.mxu0 0
    %3077 = vmatpush1.bf16.msra.mxu0 %v2608
    %3078 = vmatprep.subr.bf16.mxu0 0
    %3079 = vmatpush1.bf16.msra.mxu0 %v2609
    %3080 = vmatprep.subr.bf16.mxu0 0
    %3081 = vmatpush1.bf16.msra.mxu0 %v2610
    %3082 = vmatprep.subr.bf16.mxu0 0
    %3083 = vmatpush1.bf16.msra.mxu0 %v2611
    %3084 = vmatprep.subr.bf16.mxu0 0
    %3085 = vmatpush1.bf16.msra.mxu0 %v2612
    %3086 = vmatprep.subr.bf16.mxu0 0
    %3087 = vmatpush1.bf16.msra.mxu0 %v2613
    %3088 = vmatprep.subr.bf16.mxu0 0
    %3089 = vmatpush1.bf16.msra.mxu0 %v2614
    %3090 = vmatprep.subr.bf16.mxu0 0
    %3091 = vmatpush1.bf16.msra.mxu0 %v2615
    %3092 = vmatprep.subr.bf16.mxu0 0
    %3093 = vmatpush1.bf16.msra.mxu0 0
    %3094 = vmatprep.subr.bf16.mxu0 0
    %3095 = vmatpush1.bf16.msra.mxu0 0
    %3096 = vmatprep.subr.bf16.mxu0 0
    %3097 = vmatpush1.bf16.msra.mxu0 0
    %3098 = vmatprep.subr.bf16.mxu0 0
    %3099 = vmatpush1.bf16.msra.mxu0 0
    %3100 = vmatprep.subr.bf16.mxu0 0
    %3101 = vmatpush1.bf16.msra.mxu0 0
    %3102 = vmatprep.subr.bf16.mxu0 0
    %3103 = vmatpush1.bf16.msra.mxu0 0
    %3104 = vmatprep.subr.bf16.mxu0 0
    %3105 = vmatpush1.bf16.msra.mxu0 0
    %3106 = vmatprep.subr.bf16.mxu0 0
    %3107 = vmatpush1.bf16.msra.mxu0 0
    %3108 = vmatprep.mubr.bf16.mxu0 0
    %3109 = vmatmul.mubr.bf16.gmra.mrb[0].mxu0 %v2120
    %v3110 = vpop.f32.mrb[0].mxu0
    %v3111 = vadd.f32 %v3014, %v3110
    %v3112 = vpop.f32.mrb[0].mxu0
    %v3113 = vpop.f32.mrb[0].mxu0
    %v3114 = vadd.f32 %v3017, %v3113
    %v3115 = vpop.f32.mrb[0].mxu0
    %3116 = vmatprep.mubr.bf16.mxu0 0
    %3117 = vmatmul.mubr.bf16.gmra.mrb[0].mxu0 %v2129
    %v3118 = vpop.f32.mrb[0].mxu0
    %v3119 = vadd.f32 %v3022, %v3118
    %v3120 = vpop.f32.mrb[0].mxu0
    %v3121 = vpop.f32.mrb[0].mxu0
    %v3122 = vadd.f32 %v3025, %v3121
    %v3123 = vpop.f32.mrb[0].mxu0
    %3124 = vmatprep.mubr.bf16.mxu0 0
    %3125 = vmatmul.mubr.bf16.gmra.mrb[0].mxu0 %v2138
    %v3126 = vpop.f32.mrb[0].mxu0
    %v3127 = vadd.f32 %v3030, %v3126
    %v3128 = vpop.f32.mrb[0].mxu0
    %v3129 = vpop.f32.mrb[0].mxu0
    %v3130 = vadd.f32 %v3033, %v3129
    %v3131 = vpop.f32.mrb[0].mxu0
    %3132 = vmatprep.mubr.bf16.mxu0 0
    %3133 = vmatmul.mubr.bf16.gmra.mrb[0].mxu0 %v2147
    %v3134 = vpop.f32.mrb[0].mxu0
    %v3135 = vadd.f32 %v3038, %v3134
    %v3136 = vpop.f32.mrb[0].mxu0
    %v3137 = vpop.f32.mrb[0].mxu0
    %v3138 = vadd.f32 %v3041, %v3137
    %v3139 = vpop.f32.mrb[0].mxu0
    %3140 = vmatprep.mubr.bf16.mxu0 0
    %3141 = vmatmul.mubr.bf16.gmra.mrb[0].mxu0 %v2156
    %v3142 = vpop.f32.mrb[0].mxu0
    %v3143 = vadd.f32 %v3046, %v3142
    %v3144 = vpop.f32.mrb[0].mxu0
    %v3145 = vpop.f32.mrb[0].mxu0
    %v3146 = vadd.f32 %v3049, %v3145
    %v3147 = vpop.f32.mrb[0].mxu0
    %3148 = vmatprep.mubr.bf16.mxu0 0
    %3149 = vmatmul.mubr.bf16.gmra.mrb[0].mxu0 %v2165
    %v3150 = vpop.f32.mrb[0].mxu0
    %v3151 = vadd.f32 %v3054, %v3150
    %v3152 = vpop.f32.mrb[0].mxu0
    %v3153 = vpop.f32.mrb[0].mxu0
    %v3154 = vadd.f32 %v3057, %v3153
    %v3155 = vpop.f32.mrb[0].mxu0
    %3156 = vmatprep.mubr.bf16.mxu0 0
    %3157 = vmatmul.mubr.bf16.gmra.mrb[0].mxu0 %v2174
    %v3158 = vpop.f32.mrb[0].mxu0
    %v3159 = vadd.f32 %v3062, %v3158
    %v3160 = vpop.f32.mrb[0].mxu0
    %v3161 = vpop.f32.mrb[0].mxu0
    %v3162 = vadd.f32 %v3065, %v3161
    %v3163 = vpop.f32.mrb[0].mxu0
    %3164 = vmatprep.mubr.bf16.mxu0 0
    %3165 = vmatmul.mubr.bf16.gmra.mrb[0].mxu0 %v2183
    %v3166 = vpop.f32.mrb[0].mxu0
    %v3167 = vadd.f32 %v3070, %v3166
    %v3168 = vpop.f32.mrb[0].mxu0
    %v3169 = vpop.f32.mrb[0].mxu0
    %v3170 = vadd.f32 %v3073, %v3169
    %v3171 = vpop.f32.mrb[0].mxu0
    %3172 = vdwg.mxu0
    %v3173 = vmax.f32 %v3111, 0.0
    %v3174 = vmax.f32 %v3114, 0.0
    %v3175 = vmax.f32 %v3119, 0.0
    %v3176 = vmax.f32 %v3122, 0.0
    %v3177 = vmax.f32 %v3127, 0.0
    %v3178 = vmax.f32 %v3130, 0.0
    %v3179 = vmax.f32 %v3135, 0.0
    %v3180 = vmax.f32 %v3138, 0.0
    %v3181 = vmax.f32 %v3143, 0.0
    %v3182 = vmax.f32 %v3146, 0.0
    %v3183 = vmax.f32 %v3151, 0.0
    %v3184 = vmax.f32 %v3154, 0.0
    %v3185 = vmax.f32 %v3159, 0.0
    %v3186 = vmax.f32 %v3162, 0.0
    %v3187 = vmax.f32 %v3167, 0.0
    %v3188 = vmax.f32 %v3170, 0.0
    %v3189 = vadd.f32 %v1644, %v3173
    %v3190 = vadd.f32 %v1645, %v3174
    %v3191 = vadd.f32 %v1646, %v3175
    %v3192 = vadd.f32 %v1647, %v3176
    %v3193 = vadd.f32 %v1648, %v3177
    %v3194 = vadd.f32 %v1649, %v3178
    %v3195 = vadd.f32 %v1650, %v3179
    %v3196 = vadd.f32 %v1651, %v3180
    %v3197 = vadd.f32 %v1652, %v3181
    %v3198 = vadd.f32 %v1653, %v3182
    %v3199 = vadd.f32 %v1654, %v3183
    %v3200 = vadd.f32 %v1655, %v3184
    %v3201 = vadd.f32 %v1656, %v3185
    %v3202 = vadd.f32 %v1657, %v3186
    %v3203 = vadd.f32 %v1658, %v3187
    %v3204 = vadd.f32 %v1659, %v3188
    %v3205 = vadd.f32 %v3189, %v3190
    %v3206 = vadd.f32 %v3205, %v3191
    %v3207 = vadd.f32 %v3206, %v3192
    %v3208 = vadd.f32 %v3207, %v3193
    %v3209 = vadd.f32 %v3208, %v3194
    %v3210 = vadd.f32 %v3209, %v3195
    %v3211 = vadd.f32 %v3210, %v3196
    %v3212 = vrot.slane %v3211, 4
    %v3213 = vadd.f32 %v3211, %v3212
    %v3214 = vrot.slane %v3213, 2
    %v3215 = vadd.f32 %v3213, %v3214
    %v3216 = vrot.slane %v3215, 1
    %v3217 = vadd.f32 %v3215, %v3216
    %v3218 = vadd.f32 %v3197, %v3198
    %v3219 = vadd.f32 %v3218, %v3199
    %v3220 = vadd.f32 %v3219, %v3200
    %v3221 = vadd.f32 %v3220, %v3201
    %v3222 = vadd.f32 %v3221, %v3202
    %v3223 = vadd.f32 %v3222, %v3203
    %v3224 = vadd.f32 %v3223, %v3204
    %v3225 = vrot.slane %v3224, 4
    %v3226 = vadd.f32 %v3224, %v3225
    %v3227 = vrot.slane %v3226, 2
    %v3228 = vadd.f32 %v3226, %v3227
    %v3229 = vrot.slane %v3228, 1
    %v3230 = vadd.f32 %v3228, %v3229
    %v3231 = vrcp.pop 64.0
    %v3232 = vmul.f32 %v3217, %v3231
    %v3233 = vmul.f32 %v3230, %v3231
    %v3234 = vld [vmem:[#allocation10] sm:$0xff]
    %v3235 = vld [vmem:[#allocation10 + $0x8] sm:$0xff]
    %v3236 = vld [vmem:[#allocation10 + $0x10] sm:$0xff]
    %v3237 = vld [vmem:[#allocation10 + $0x18] sm:$0xff]
    %v3238 = vld [vmem:[#allocation10 + $0x20] sm:$0xff]
    %v3239 = vld [vmem:[#allocation10 + $0x28] sm:$0xff]
    %v3240 = vld [vmem:[#allocation10 + $0x30] sm:$0xff]
    %v3241 = vld [vmem:[#allocation10 + $0x38] sm:$0xff]
    %v3242 = vld [vmem:[#allocation10 + $0x40] sm:$0xff]
    %v3243 = vld [vmem:[#allocation10 + $0x48] sm:$0xff]
    %v3244 = vld [vmem:[#allocation10 + $0x50] sm:$0xff]
    %v3245 = vld [vmem:[#allocation10 + $0x58] sm:$0xff]
    %v3246 = vld [vmem:[#allocation10 + $0x60] sm:$0xff]
    %v3247 = vld [vmem:[#allocation10 + $0x68] sm:$0xff]
    %v3248 = vld [vmem:[#allocation10 + $0x70] sm:$0xff]
    %v3249 = vld [vmem:[#allocation10 + $0x78] sm:$0xff]
    %v3250 = vlaneseq
    %v3251 = vshrl.u32 %v3250, 7
    %v3252 = vsub.s32 0, %v3251
    %v3253 = vrot.slane %v128, %v3252
    %vm3256 = vcmask 1041409
    %v3257 = vsel %vm3256, %v3233, %v3232
    %3259 = vmatprep.subr.mxu0 0.0
    %3260 = vmatpush1.msra.mxu0 %v3234
    %3261 = vmatprep.subr.mxu0 0.0
    %3262 = vmatpush1.msra.mxu0 %v3235
    %3263 = vmatprep.subr.mxu0 0.0
    %3264 = vmatpush1.msra.mxu0 %v3236
    %3265 = vmatprep.subr.mxu0 0.0
    %3266 = vmatpush1.msra.mxu0 %v3237
    %3267 = vmatprep.subr.mxu0 0.0
    %3268 = vmatpush1.msra.mxu0 %v3238
    %3269 = vmatprep.subr.mxu0 0.0
    %3270 = vmatpush1.msra.mxu0 %v3239
    %3271 = vmatprep.subr.mxu0 0.0
    %3272 = vmatpush1.msra.mxu0 %v3240
    %3273 = vmatprep.subr.mxu0 0.0
    %3274 = vmatpush1.msra.mxu0 %v3241
    %3275 = vmatprep.subr.mxu0 0.0
    %3276 = vmatpush1.msra.mxu0 %v3242
    %3277 = vmatprep.subr.mxu0 0.0
    %3278 = vmatpush1.msra.mxu0 %v3243
    %3279 = vmatprep.subr.mxu0 0.0
    %3280 = vmatpush1.msra.mxu0 %v3244
    %3281 = vmatprep.subr.mxu0 0.0
    %3282 = vmatpush1.msra.mxu0 %v3245
    %3283 = vmatprep.subr.mxu0 0.0
    %3284 = vmatpush1.msra.mxu0 %v3246
    %3285 = vmatprep.subr.mxu0 0.0
    %3286 = vmatpush1.msra.mxu0 %v3247
    %3287 = vmatprep.subr.mxu0 0.0
    %3288 = vmatpush1.msra.mxu0 %v3248
    %3289 = vmatprep.subr.mxu0 0.0
    %3290 = vmatpush1.msra.mxu0 %v3249
    %3291 = vmatprep.subr.mxu0 0.0
    %3292 = vmatpush1.msra.mxu0 0.0
    %3293 = vmatprep.subr.mxu0 0.0
    %3294 = vmatpush1.msra.mxu0 0.0
    %3295 = vmatprep.subr.mxu0 0.0
    %3296 = vmatpush1.msra.mxu0 0.0
    %3297 = vmatprep.subr.mxu0 0.0
    %3298 = vmatpush1.msra.mxu0 0.0
    %3299 = vmatprep.subr.mxu0 0.0
    %3300 = vmatpush1.msra.mxu0 0.0
    %3301 = vmatprep.subr.mxu0 0.0
    %3302 = vmatpush1.msra.mxu0 0.0
    %3303 = vmatprep.subr.mxu0 0.0
    %3304 = vmatpush1.msra.mxu0 0.0
    %3305 = vmatprep.subr.mxu0 0.0
    %3306 = vmatpush1.msra.mxu0 0.0
    %3307 = vmatprep.subr.mxu0 0.0
    %3308 = vmatpush1.msra.mxu0 0.0
    %3309 = vmatprep.subr.mxu0 0.0
    %3310 = vmatpush1.msra.mxu0 0.0
    %3311 = vmatprep.subr.mxu0 0.0
    %3312 = vmatpush1.msra.mxu0 0.0
    %3313 = vmatprep.subr.mxu0 0.0
    %3314 = vmatpush1.msra.mxu0 0.0
    %3315 = vmatprep.subr.mxu0 0.0
    %3316 = vmatpush1.msra.mxu0 0.0
    %3317 = vmatprep.subr.mxu0 0.0
    %3318 = vmatpush1.msra.mxu0 0.0
    %3319 = vmatprep.subr.mxu0 0.0
    %3320 = vmatpush1.msra.mxu0 0.0
    %3321 = vmatprep.subr.mxu0 0.0
    %3322 = vmatpush1.msra.mxu0 0.0
    %3323 = vmatprep.mubr.f32.mxu0 0.0
    %3324 = vmatmul.mubr.f32.gmra.mrb[0].mxu0 %v3257
    %v3325 = vpop.f32.mrb[0].mxu0
    %v3326 = vadd.f32 %v3253, %v3325
    %v3327 = vpop.f32.mrb[0].mxu0
    %3328 = vdwg.mxu0
    %v3329 = vmax.f32 %v3326, 0.0
    %v3330 = vld [vmem:[#allocation11] sm:$0xff]
    %v3331 = vld [vmem:[#allocation11 + $0x8] sm:$0xff]
    %v3332 = vld [vmem:[#allocation11 + $0x10] sm:$0xff]
    %v3333 = vld [vmem:[#allocation11 + $0x18] sm:$0xff]
    %v3334 = vld [vmem:[#allocation11 + $0x20] sm:$0xff]
    %v3335 = vld [vmem:[#allocation11 + $0x28] sm:$0xff]
    %v3336 = vld [vmem:[#allocation11 + $0x30] sm:$0xff]
    %v3337 = vld [vmem:[#allocation11 + $0x38] sm:$0xff]
    %v3338 = vld [vmem:[#allocation11 + $0x40] sm:$0xff]
    %v3339 = vld [vmem:[#allocation11 + $0x48] sm:$0xff]
    %v3340 = vld [vmem:[#allocation11 + $0x50] sm:$0xff]
    %v3341 = vld [vmem:[#allocation11 + $0x58] sm:$0xff]
    %v3342 = vld [vmem:[#allocation11 + $0x60] sm:$0xff]
    %v3343 = vld [vmem:[#allocation11 + $0x68] sm:$0xff]
    %v3344 = vld [vmem:[#allocation11 + $0x70] sm:$0xff]
    %v3345 = vld [vmem:[#allocation11 + $0x78] sm:$0xff]
    %v3346 = vlaneseq
    %v3347 = vshrl.u32 %v3346, 7
    %v3348 = vsub.s32 0, %v3347
    %v3349 = vrot.slane %v129, %v3348
    %3350 = vmatprep.subr.mxu0 0.0
    %3351 = vmatpush1.msra.mxu0 %v3330
    %3352 = vmatprep.subr.mxu0 0.0
    %3353 = vmatpush1.msra.mxu0 %v3331
    %3354 = vmatprep.subr.mxu0 0.0
    %3355 = vmatpush1.msra.mxu0 %v3332
    %3356 = vmatprep.subr.mxu0 0.0
    %3357 = vmatpush1.msra.mxu0 %v3333
    %3358 = vmatprep.subr.mxu0 0.0
    %3359 = vmatpush1.msra.mxu0 %v3334
    %3360 = vmatprep.subr.mxu0 0.0
    %3361 = vmatpush1.msra.mxu0 %v3335
    %3362 = vmatprep.subr.mxu0 0.0
    %3363 = vmatpush1.msra.mxu0 %v3336
    %3364 = vmatprep.subr.mxu0 0.0
    %3365 = vmatpush1.msra.mxu0 %v3337
    %3366 = vmatprep.subr.mxu0 0.0
    %3367 = vmatpush1.msra.mxu0 %v3338
    %3368 = vmatprep.subr.mxu0 0.0
    %3369 = vmatpush1.msra.mxu0 %v3339
    %3370 = vmatprep.subr.mxu0 0.0
    %3371 = vmatpush1.msra.mxu0 %v3340
    %3372 = vmatprep.subr.mxu0 0.0
    %3373 = vmatpush1.msra.mxu0 %v3341
    %3374 = vmatprep.subr.mxu0 0.0
    %3375 = vmatpush1.msra.mxu0 %v3342
    %3376 = vmatprep.subr.mxu0 0.0
    %3377 = vmatpush1.msra.mxu0 %v3343
    %3378 = vmatprep.subr.mxu0 0.0
    %3379 = vmatpush1.msra.mxu0 %v3344
    %3380 = vmatprep.subr.mxu0 0.0
    %3381 = vmatpush1.msra.mxu0 %v3345
    %3382 = vmatprep.subr.mxu0 0.0
    %3383 = vmatpush1.msra.mxu0 0.0
    %3384 = vmatprep.subr.mxu0 0.0
    %3385 = vmatpush1.msra.mxu0 0.0
    %3386 = vmatprep.subr.mxu0 0.0
    %3387 = vmatpush1.msra.mxu0 0.0
    %3388 = vmatprep.subr.mxu0 0.0
    %3389 = vmatpush1.msra.mxu0 0.0
    %3390 = vmatprep.subr.mxu0 0.0
    %3391 = vmatpush1.msra.mxu0 0.0
    %3392 = vmatprep.subr.mxu0 0.0
    %3393 = vmatpush1.msra.mxu0 0.0
    %3394 = vmatprep.subr.mxu0 0.0
    %3395 = vmatpush1.msra.mxu0 0.0
    %3396 = vmatprep.subr.mxu0 0.0
    %3397 = vmatpush1.msra.mxu0 0.0
    %3398 = vmatprep.subr.mxu0 0.0
    %3399 = vmatpush1.msra.mxu0 0.0
    %3400 = vmatprep.subr.mxu0 0.0
    %3401 = vmatpush1.msra.mxu0 0.0
    %3402 = vmatprep.subr.mxu0 0.0
    %3403 = vmatpush1.msra.mxu0 0.0
    %3404 = vmatprep.subr.mxu0 0.0
    %3405 = vmatpush1.msra.mxu0 0.0
    %3406 = vmatprep.subr.mxu0 0.0
    %3407 = vmatpush1.msra.mxu0 0.0
    %3408 = vmatprep.subr.mxu0 0.0
    %3409 = vmatpush1.msra.mxu0 0.0
    %3410 = vmatprep.subr.mxu0 0.0
    %3411 = vmatpush1.msra.mxu0 0.0
    %3412 = vmatprep.subr.mxu0 0.0
    %3413 = vmatpush1.msra.mxu0 0.0
    %3414 = vmatprep.mubr.f32.mxu0 0.0
    %3415 = vmatmul.mubr.f32.gmra.mrb[0].mxu0 %v3329
    %v3416 = vpop.f32.mrb[0].mxu0
    %v3417 = vadd.f32 %v3349, %v3416
    %v3418 = vpop.f32.mrb[0].mxu0
    %3419 = vdwg.mxu0
    %v3420 = vld [vmem:[#allocation13] sm:$0xff]
    %v3421 = vld [vmem:[#allocation13 + $0x8] sm:$0xff]
    %v3422 = vld [vmem:[#allocation13 + $0x10] sm:$0xff]
    %v3423 = vld [vmem:[#allocation13 + $0x18] sm:$0xff]
    %v3424 = vld [vmem:[#allocation13 + $0x20] sm:$0xff]
    %v3425 = vld [vmem:[#allocation13 + $0x28] sm:$0xff]
    %v3426 = vld [vmem:[#allocation13 + $0x30] sm:$0xff]
    %v3427 = vld [vmem:[#allocation13 + $0x38] sm:$0xff]
    %v3428 = vld [vmem:[#allocation13 + $0x40] sm:$0xff]
    %v3429 = vld [vmem:[#allocation13 + $0x48] sm:$0xff]
    %v3430 = vld [vmem:[#allocation13 + $0x50] sm:$0xff]
    %v3431 = vld [vmem:[#allocation13 + $0x58] sm:$0xff]
    %v3432 = vld [vmem:[#allocation13 + $0x60] sm:$0xff]
    %v3433 = vld [vmem:[#allocation13 + $0x68] sm:$0xff]
    %v3434 = vld [vmem:[#allocation13 + $0x70] sm:$0xff]
    %v3435 = vld [vmem:[#allocation13 + $0x78] sm:$0xff]
    %v3436 = vlaneseq
    %v3437 = vshrl.u32 %v3436, 7
    %v3438 = vsub.s32 0, %v3437
    %v3439 = vrot.slane %v130, %v3438
    %3440 = vmatprep.subr.mxu0 0.0
    %3441 = vmatpush1.msra.mxu0 %v3420
    %3442 = vmatprep.subr.mxu0 0.0
    %3443 = vmatpush1.msra.mxu0 %v3421
    %3444 = vmatprep.subr.mxu0 0.0
    %3445 = vmatpush1.msra.mxu0 %v3422
    %3446 = vmatprep.subr.mxu0 0.0
    %3447 = vmatpush1.msra.mxu0 %v3423
    %3448 = vmatprep.subr.mxu0 0.0
    %3449 = vmatpush1.msra.mxu0 %v3424
    %3450 = vmatprep.subr.mxu0 0.0
    %3451 = vmatpush1.msra.mxu0 %v3425
    %3452 = vmatprep.subr.mxu0 0.0
    %3453 = vmatpush1.msra.mxu0 %v3426
    %3454 = vmatprep.subr.mxu0 0.0
    %3455 = vmatpush1.msra.mxu0 %v3427
    %3456 = vmatprep.subr.mxu0 0.0
    %3457 = vmatpush1.msra.mxu0 %v3428
    %3458 = vmatprep.subr.mxu0 0.0
    %3459 = vmatpush1.msra.mxu0 %v3429
    %3460 = vmatprep.subr.mxu0 0.0
    %3461 = vmatpush1.msra.mxu0 %v3430
    %3462 = vmatprep.subr.mxu0 0.0
    %3463 = vmatpush1.msra.mxu0 %v3431
    %3464 = vmatprep.subr.mxu0 0.0
    %3465 = vmatpush1.msra.mxu0 %v3432
    %3466 = vmatprep.subr.mxu0 0.0
    %3467 = vmatpush1.msra.mxu0 %v3433
    %3468 = vmatprep.subr.mxu0 0.0
    %3469 = vmatpush1.msra.mxu0 %v3434
    %3470 = vmatprep.subr.mxu0 0.0
    %3471 = vmatpush1.msra.mxu0 %v3435
    %3472 = vmatprep.subr.mxu0 0.0
    %3473 = vmatpush1.msra.mxu0 0.0
    %3474 = vmatprep.subr.mxu0 0.0
    %3475 = vmatpush1.msra.mxu0 0.0
    %3476 = vmatprep.subr.mxu0 0.0
    %3477 = vmatpush1.msra.mxu0 0.0
    %3478 = vmatprep.subr.mxu0 0.0
    %3479 = vmatpush1.msra.mxu0 0.0
    %3480 = vmatprep.subr.mxu0 0.0
    %3481 = vmatpush1.msra.mxu0 0.0
    %3482 = vmatprep.subr.mxu0 0.0
    %3483 = vmatpush1.msra.mxu0 0.0
    %3484 = vmatprep.subr.mxu0 0.0
    %3485 = vmatpush1.msra.mxu0 0.0
    %3486 = vmatprep.subr.mxu0 0.0
    %3487 = vmatpush1.msra.mxu0 0.0
    %3488 = vmatprep.subr.mxu0 0.0
    %3489 = vmatpush1.msra.mxu0 0.0
    %3490 = vmatprep.subr.mxu0 0.0
    %3491 = vmatpush1.msra.mxu0 0.0
    %3492 = vmatprep.subr.mxu0 0.0
    %3493 = vmatpush1.msra.mxu0 0.0
    %3494 = vmatprep.subr.mxu0 0.0
    %3495 = vmatpush1.msra.mxu0 0.0
    %3496 = vmatprep.subr.mxu0 0.0
    %3497 = vmatpush1.msra.mxu0 0.0
    %3498 = vmatprep.subr.mxu0 0.0
    %3499 = vmatpush1.msra.mxu0 0.0
    %3500 = vmatprep.subr.mxu0 0.0
    %3501 = vmatpush1.msra.mxu0 0.0
    %3502 = vmatprep.subr.mxu0 0.0
    %3503 = vmatpush1.msra.mxu0 0.0
    %3504 = vmatprep.mubr.f32.mxu0 0.0
    %3505 = vmatmul.mubr.f32.gmra.mrb[0].mxu0 %v3329
    %v3506 = vpop.f32.mrb[0].mxu0
    %v3507 = vadd.f32 %v3439, %v3506
    %v3508 = vpop.f32.mrb[0].mxu0
    %3509 = vdwg.mxu0
    %v3510 = vmax.f32 %v3417, %v3507
    %v3511 = vsub.f32 %v3417, %v3510
    %v3512 = vmul.f32 %v3511, 1.442695
    %v3513 = vpow.pop %v3512
    %v3514 = vsub.f32 %v3507, %v3510
    %v3515 = vmul.f32 %v3514, 1.442695
    %v3516 = vpow.pop %v3515
    %v3517 = vadd.f32 %v3513, %v3516
    %v3518 = vrcp.pop %v3517
    %v3519 = vmul.f32 %v3513, %v3518
    %v3522 = vunpack.c.l.s4 1966171168
    %v3523 = vunpack.c.0.s8 %v3522
    %v3524 = vlaneseq
    %v3525 = vshrl.u32 %v3524, 7
    %v3526 = vsub.s32 %v3523, %v3525
    %v3527 = vrot.slane %v3519, %v3526
    %v3528 = vcombine.high %v3527, %v3527
    %v3530 = vunpack.c.l.s4 1966171168
    %v3531 = vunpack.c.0.s8 %v3530
    %v3532 = vlaneseq
    %v3533 = vshrl.u32 %v3532, 7
    %v3534 = vsub.s32 %v3531, %v3533
    %v3535 = vrot.slane %v3527, %v3534
    %v3537 = vunpack.c.l.s4 1966171168
    %v3538 = vunpack.c.0.s8 %v3537
    %v3539 = vlaneseq
    %v3540 = vshrl.u32 %v3539, 7
    %v3541 = vsub.s32 %v3538, %v3540
    %v3542 = vrot.slane %v3528, %v3541
    %v3543 = vmul.f32 %v3516, %v3518
    %v3546 = vunpack.c.l.s4 1966171168
    %v3547 = vunpack.c.0.s8 %v3546
    %v3548 = vlaneseq
    %v3549 = vshrl.u32 %v3548, 7
    %v3550 = vsub.s32 %v3547, %v3549
    %v3551 = vrot.slane %v3543, %v3550
    %v3552 = vcombine.high %v3551, %v3551
    %v3554 = vunpack.c.l.s4 1966171168
    %v3555 = vunpack.c.0.s8 %v3554
    %v3556 = vlaneseq
    %v3557 = vshrl.u32 %v3556, 7
    %v3558 = vsub.s32 %v3555, %v3557
    %v3559 = vrot.slane %v3551, %v3558
    %v3561 = vunpack.c.l.s4 1966171168
    %v3562 = vunpack.c.0.s8 %v3561
    %v3563 = vlaneseq
    %v3564 = vshrl.u32 %v3563, 7
    %v3565 = vsub.s32 %v3562, %v3564
    %v3566 = vrot.slane %v3552, %v3565
    %v3567 = vlaneseq
    %v3568 = vshrl.u32 %v3567, 7
    %v3569 = vsub.s32 0, %v3568
    %v3570 = vrot.slane %v3535, %v3569
    %v3571 = vlaneseq
    %v3572 = vshrl.u32 %v3571, 7
    %v3573 = vsub.s32 0, %v3572
    %v3574 = vrot.slane %v3542, %v3573
    %v3577 = vmul.f32 %v1644, %v3570
    %v3578 = vmul.f32 %v1645, %v3570
    %v3579 = vmul.f32 %v1646, %v3570
    %v3580 = vmul.f32 %v1647, %v3570
    %v3581 = vmul.f32 %v1648, %v3570
    %v3582 = vmul.f32 %v1649, %v3570
    %v3583 = vmul.f32 %v1650, %v3570
    %v3584 = vmul.f32 %v1651, %v3570
    %v3585 = vmul.f32 %v1652, %v3574
    %v3586 = vmul.f32 %v1653, %v3574
    %v3587 = vmul.f32 %v1654, %v3574
    %v3588 = vmul.f32 %v1655, %v3574
    %v3589 = vmul.f32 %v1656, %v3574
    %v3590 = vmul.f32 %v1657, %v3574
    %v3591 = vmul.f32 %v1658, %v3574
    %v3592 = vmul.f32 %v1659, %v3574
    %v3593 = vlaneseq
    %v3594 = vshrl.u32 %v3593, 7
    %v3595 = vsub.s32 0, %v3594
    %v3596 = vrot.slane %v3559, %v3595
    %v3597 = vlaneseq
    %v3598 = vshrl.u32 %v3597, 7
    %v3599 = vsub.s32 0, %v3598
    %v3600 = vrot.slane %v3566, %v3599
    %v3603 = vmul.f32 %v3173, %v3596
    %v3604 = vmul.f32 %v3174, %v3596
    %v3605 = vmul.f32 %v3175, %v3596
    %v3606 = vmul.f32 %v3176, %v3596
    %v3607 = vmul.f32 %v3177, %v3596
    %v3608 = vmul.f32 %v3178, %v3596
    %v3609 = vmul.f32 %v3179, %v3596
    %v3610 = vmul.f32 %v3180, %v3596
    %v3611 = vmul.f32 %v3181, %v3600
    %v3612 = vmul.f32 %v3182, %v3600
    %v3613 = vmul.f32 %v3183, %v3600
    %v3614 = vmul.f32 %v3184, %v3600
    %v3615 = vmul.f32 %v3185, %v3600
    %v3616 = vmul.f32 %v3186, %v3600
    %v3617 = vmul.f32 %v3187, %v3600
    %v3618 = vmul.f32 %v3188, %v3600
    %v3619 = vadd.f32 %v3577, %v3603
    %v3620 = vadd.f32 %v3578, %v3604
    %v3621 = vadd.f32 %v3579, %v3605
    %v3622 = vadd.f32 %v3580, %v3606
    %v3623 = vadd.f32 %v3581, %v3607
    %v3624 = vadd.f32 %v3582, %v3608
    %v3625 = vadd.f32 %v3583, %v3609
    %v3626 = vadd.f32 %v3584, %v3610
    %v3627 = vadd.f32 %v3585, %v3611
    %v3628 = vadd.f32 %v3586, %v3612
    %v3629 = vadd.f32 %v3587, %v3613
    %v3630 = vadd.f32 %v3588, %v3614
    %v3631 = vadd.f32 %v3589, %v3615
    %v3632 = vadd.f32 %v3590, %v3616
    %v3633 = vadd.f32 %v3591, %v3617
    %v3634 = vadd.f32 %v3592, %v3618
    %3635 = vst [vmem:[#allocation14] sm:$0xff] %v3619
    %3636 = vst [vmem:[#allocation14 + $0x8] sm:$0xff] %v3620
    %3637 = vst [vmem:[#allocation14 + $0x10] sm:$0xff] %v3621
    %3638 = vst [vmem:[#allocation14 + $0x18] sm:$0xff] %v3622
    %3639 = vst [vmem:[#allocation14 + $0x20] sm:$0xff] %v3623
    %3640 = vst [vmem:[#allocation14 + $0x28] sm:$0xff] %v3624
    %3641 = vst [vmem:[#allocation14 + $0x30] sm:$0xff] %v3625
    %3642 = vst [vmem:[#allocation14 + $0x38] sm:$0xff] %v3626
    %3643 = vst [vmem:[#allocation14 + $0x40] sm:$0xff] %v3627
    %3644 = vst [vmem:[#allocation14 + $0x48] sm:$0xff] %v3628
    %3645 = vst [vmem:[#allocation14 + $0x50] sm:$0xff] %v3629
    %3646 = vst [vmem:[#allocation14 + $0x58] sm:$0xff] %v3630
    %3647 = vst [vmem:[#allocation14 + $0x60] sm:$0xff] %v3631
    %3648 = vst [vmem:[#allocation14 + $0x68] sm:$0xff] %v3632
    %3649 = vst [vmem:[#allocation14 + $0x70] sm:$0xff] %v3633
    %3650 = vst [vmem:[#allocation14 + $0x78] sm:$0xff] %v3634
    // Predicated region
    $region62: #{tpu_custom_call.1} parent=1 // pred_check
      _
    $region63: #{tpu_custom_call.1} parent=1 // pred_check_branch
      %3652 = sbr.rel (0) target = $region65
    $region64: #{tpu_custom_call.1} parent=1 // pred_region
      %s3654 = ssub.s32 2048, 2048
      %3655 = vsyncadd [#allocation4], %s3654
      %s3656 = sshll.u32 [#allocation14], 4
      %s3657 = int_to_ptr.vmem [resolvable:$true] %s3656
      %3662 = dma.vmem_to_hbm [thread:$0]  %s3657, 2048, %s8, [#allocation4], 128, 128, 8
    $region65: #{tpu_custom_call.1} parent=1 // pred_fallthru
      _
    // Predicated region
    $region66: #{tpu_custom_call.1} parent=1 // pred_check
      _
    $region67: #{tpu_custom_call.1} parent=1 // pred_check_branch
      %3664 = sbr.rel (0) target = $region69
    $region68: #{tpu_custom_call.1} parent=1 // pred_region
      %3665 = dma.done [#allocation4], 2048
    $region69: #{tpu_custom_call.1} parent=1 // pred_fallthru
      _
    %3666 = vsyncpa [#allocation3], 1
    %3667 = vsyncpa [#allocation6], 1
    %3668 = vsyncpa [#allocation9], 1
    %3669 = vsyncpa [#allocation12], 1
    %3670 = vsyncpa [#allocation4], 1

</llo_original>
